<compile_context>
chip_gen: v7x
topology: tpu7x:2x2x1
jax: 0.10.0
libtpu: 0.0.40
codegen_flags: <defaults>
</compile_context>

<pallas_src>
import jax
import jax.numpy as jnp
import numpy as np
from jax.experimental import pallas as pl
from jax.experimental.pallas import tpu as pltpu


def _simplenet_kernel(x_ref, mc_ref, bc_ref, wl_ref, bl_ref, o_ref):
    """One grid step == one TB-row slab of the batch.

    x_ref  : [TB, k*in_h]              flattened input slab (bf16, cast in wrapper)
    mc_ref : [k*in_h, filters*in_h]    circulant conv matrix (bf16, single-buffered)
    bc_ref : [1, filters*in_h]         conv bias, broadcast over width (f32)
    wl_ref : [filters*in_h, in_h]      linear weight, transposed (bf16, single-buffered)
    bl_ref : [1, in_h]                 linear bias (f32)
    o_ref  : [TB, in_h]                output slab (f32)
    """
    # --- circular Conv2d as one MXU matmul (bf16 operands, f32 accumulation) ---
    conv = jnp.dot(x_ref[...], mc_ref[...],
                   preferred_element_type=jnp.float32)        # [TB, filters*in_h]
    a = jnp.tanh(conv + bc_ref[...])                          # f32 VPU/EUP path

    # --- Flatten + Linear as one MXU matmul ---
    z = jnp.dot(a.astype(wl_ref.dtype), wl_ref[...],
                preferred_element_type=jnp.float32)           # [TB, in_h]
    o_ref[...] = jnp.tanh(z + bl_ref[...]).astype(o_ref.dtype)


def pack_simplenet_params(params, *, param_dtype=jnp.bfloat16):
    """One-time weight packing (hoisted out of the per-call forward path).

    Folds the circular Conv2d into a dense circulant matrix so the kernel is
    pure matmul, and pre-transposes / pre-reshapes everything into the layouts
    the kernel consumes directly.
    """
    conv_w = params["conv_w"]                     # [filters, 1, k, k]
    filters, _, k, _ = conv_w.shape
    lin_w = params["lin_w"]                       # [in_h, in_h*filters]
    in_h = lin_w.shape[0]
    pad = k // 2

    Wc = conv_w[:, 0]                             # [filters, k(i), k(j)]

    # wp[j, w] = source column (w + j - pad) mod in_h (circular padding).
    w_idx = jnp.arange(in_h)
    wp = (w_idx[None, :] + jnp.arange(k)[:, None] - pad) % in_h          # [k(j), in_h(w)]
    oh = (wp[:, :, None] == w_idx[None, None, :]).astype(jnp.float32)    # [k(j), in_h(w), in_h(v)]

    # m_conv[i*in_h + v, f*in_h + w] = sum_j W[f,i,j] * [v == (w+j-pad) mod in_h]
    # Column order f*in_h + w matches torch.nn.Flatten of the [B,filters,1,in_h] conv output.
    m_conv = jnp.einsum("fij,jwv->ivfw", Wc, oh).reshape(k * in_h, filters * in_h)

    b_conv = jnp.broadcast_to(params["conv_b"][:, None],
                              (filters, in_h)).reshape(1, filters * in_h)
    w_lin = lin_w.T                                # [filters*in_h, in_h]
    b_lin = params["lin_b"].reshape(1, in_h)

    return dict(
        m_conv=m_conv.astype(param_dtype),         # bf16 MXU operand
        b_conv=b_conv.astype(jnp.float32),
        w_lin=w_lin.astype(param_dtype),           # bf16 MXU operand
        b_lin=b_lin.astype(jnp.float32),
        k=int(k), in_h=int(in_h), filters=int(filters),
    )


def _pick_tb(B):
    """Batch-tile size: fill the 256-wide MXU as B grows, keep >=2 grid steps
    for v7x megacore, and respect the (8,128) sublane constraint."""
    if B <= 128:
        return B                       # single block == full array dim (legal)
    tb = max(128, min(256, B // 2))    # >=2 steps, <=256 rows per step
    return (tb // 8) * 8               # multiple of 8 sublanes


def simplenet_forward(p, x, y, packed):
    """Pallas wrapper. SimpleNet.forward ignores p (pose) and y (past labels)."""
    del p, y  # unused by the PyTorch reference forward
    B, k, in_h = x.shape
    filters = packed["filters"]
    assert k == packed["k"] and in_h == packed["in_h"]
    kf = k * in_h
    nf = filters * in_h

    # Flatten (k, in_h) -> k*in_h and cast to bf16 HERE (halves the input DMA;
    # the kernel's first matmul consumes bf16 directly).
    x_flat = x.reshape(B, kf).astype(jnp.bfloat16)

    # Batch tiling: TB divides the (padded) batch; padded rows compute garbage
    # that is sliced away (each output row depends only on its own input row).
    tb = _pick_tb(B)
    n_tiles = pl.cdiv(B, tb)
    Bp = n_tiles * tb
    if Bp != B:
        x_flat = jnp.pad(x_flat, ((0, Bp - B), (0, 0)))

    # Advisory cost estimate: this kernel is HBM-bound at these shapes.
    bytes_in = (x_flat.size * 2                      # bf16 input slab
                + (kf * nf + nf * in_h) * 2          # bf16 weights
                + (nf + in_h) * 4)                   # f32 biases
    bytes_out = Bp * in_h * 4
    cost = pl.CostEstimate(
        flops=2 * Bp * kf * nf + 2 * Bp * nf * in_h,
        transcendentals=Bp * (nf + in_h),
        bytes_accessed=bytes_in + bytes_out,
    )

    # Grid-invariant weights/biases: fetched once -> single buffer saves VMEM.
    resident = dict(pipeline_mode=pl.Buffered(1))

    out = pl.pallas_call(
        _simplenet_kernel,
        out_shape=jax.ShapeDtypeStruct((Bp, in_h), jnp.float32),
        grid=(n_tiles,),
        in_specs=[
            pl.BlockSpec((tb, kf), lambda b: (b, 0)),
            pl.BlockSpec((kf, nf), lambda b: (0, 0), **resident),
            pl.BlockSpec((1, nf), lambda b: (0, 0), **resident),
            pl.BlockSpec((nf, in_h), lambda b: (0, 0), **resident),
            pl.BlockSpec((1, in_h), lambda b: (0, 0), **resident),
        ],
        out_specs=pl.BlockSpec((tb, in_h), lambda b: (b, 0)),
        compiler_params=pltpu.CompilerParams(
            dimension_semantics=("parallel",)),   # shards batch tiles across v7x TCs
        cost_estimate=cost,
    )(x_flat, packed["m_conv"], packed["b_conv"], packed["w_lin"], packed["b_lin"])

    return out[:B]                                 # [B, in_h]


def simplenet_reference(p, x, y, params):
    """Pure-JAX reference of the PyTorch SimpleNet forward (for validation)."""
    del p, y
    B, k, in_h = x.shape
    W = params["conv_w"][:, 0]                     # [filters, k(i), k(j)]
    pad = k // 2
    idx = (jnp.arange(in_h)[None, :] + jnp.arange(k)[:, None] - pad) % in_h
    g = jnp.take(x, idx, axis=2)                   # [B, k(i), k(j), in_h]
    conv = jnp.einsum("fij,bijw->bfw", W, g) + params["conv_b"][None, :, None]
    a = jnp.tanh(conv)                             # [B, filters, in_h]
    flat = a.reshape(B, -1)                        # torch.nn.Flatten order
    z = flat @ params["lin_w"].T + params["lin_b"][None, :]
    return jnp.tanh(z)


if __name__ == "__main__":
    # Small shapes consistent with the module; B=256 gives a 2-step batch-tiled grid.
    B, k, in_h, filters = 256, 5, 128, 8

    key = jax.random.PRNGKey(0)
    k0, k1, k2, k3, kp, kx, ky = jax.random.split(key, 7)

    a_conv = 1.0 / np.sqrt(1 * k * k)              # PyTorch-style uniform init bounds
    a_lin = 1.0 / np.sqrt(in_h * filters)
    params = dict(
        conv_w=jax.random.uniform(k0, (filters, 1, k, k), jnp.float32, -a_conv, a_conv),
        conv_b=jax.random.uniform(k1, (filters,), jnp.float32, -a_conv, a_conv),
        lin_w=jax.random.uniform(k2, (in_h, in_h * filters), jnp.float32, -a_lin, a_lin),
        lin_b=jax.random.uniform(k3, (in_h,), jnp.float32, -a_lin, a_lin),
    )

    p = jax.random.normal(kp, (B, k, 3), jnp.float32)       # pose   (unused by forward)
    x = jax.random.normal(kx, (B, k, in_h), jnp.float32)    # scan history
    y = jax.random.normal(ky, (B, k, in_h), jnp.float32)    # labels (unused by forward)

    packed = pack_simplenet_params(params)                  # one-time weight packing
    out = simplenet_forward(p, x, y, packed)
    out = jax.block_until_ready(out)

    ref = simplenet_reference(p, x, y, params)
    assert out.shape == (B, in_h)
    np.testing.assert_allclose(np.asarray(out), np.asarray(ref), atol=2e-2, rtol=2e-2)

    print("KERNEL_OK")
</pallas_src>

<mosaic_0001>
module attributes {stable_mosaic.version = 11 : i64} {
  func.func @_simplenet_kernel(%arg0: i32, %arg1: memref<128x640xbf16, #tpu.memory_space<vmem>>, %arg2: memref<640x1024xbf16, #tpu.memory_space<vmem>>, %arg3: memref<1x1024xf32, #tpu.memory_space<vmem>>, %arg4: memref<1024x128xbf16, #tpu.memory_space<vmem>>, %arg5: memref<1x128xf32, #tpu.memory_space<vmem>>, %arg6: memref<128x128xf32, #tpu.memory_space<vmem>>) attributes {dimension_semantics = [#tpu.dimension_semantics<parallel>], iteration_bounds = array<i64: 2>, scalar_prefetch = 0 : i64, scratch_operands = 0 : i64, tpu.core_type = #tpu.core_type<tc>, window_params = [{transform_indices = @transform_0, window_bounds = array<i64: 128, 640>}, {pipeline_mode = #tpu.pipeline_mode<synchronous>, transform_indices = @transform_1, window_bounds = array<i64: 640, 1024>}, {pipeline_mode = #tpu.pipeline_mode<synchronous>, transform_indices = @transform_2, window_bounds = array<i64: 1, 1024>}, {pipeline_mode = #tpu.pipeline_mode<synchronous>, transform_indices = @transform_3, window_bounds = array<i64: 1024, 128>}, {pipeline_mode = #tpu.pipeline_mode<synchronous>, transform_indices = @transform_4, window_bounds = array<i64: 1, 128>}, {transform_indices = @transform_5, window_bounds = array<i64: 128, 128>}]} {
    %c0 = arith.constant 0 : index
    %c0_0 = arith.constant 0 : index
    %0 = vector.load %arg1[%c0, %c0_0] : memref<128x640xbf16, #tpu.memory_space<vmem>>, vector<128x640xbf16>
    %c0_1 = arith.constant 0 : index
    %c0_2 = arith.constant 0 : index
    %1 = vector.load %arg2[%c0_1, %c0_2] : memref<640x1024xbf16, #tpu.memory_space<vmem>>, vector<640x1024xbf16>
    %cst = arith.constant dense<0.000000e+00> : vector<128x1024xf32>
    %2 = tpu.matmul %0, %1, %cst {dimension_numbers = #tpu.dot_dimension_numbers<[1], [0], [0], [1], [0, 0, 1, 1], [], []>} : vector<128x640xbf16>, vector<640x1024xbf16>, vector<128x1024xf32> -> vector<128x1024xf32>
    %c0_3 = arith.constant 0 : index
    %c0_4 = arith.constant 0 : index
    %3 = vector.load %arg3[%c0_3, %c0_4] : memref<1x1024xf32, #tpu.memory_space<vmem>>, vector<1x1024xf32>
    %4 = vector.broadcast %3 : vector<1x1024xf32> to vector<128x1024xf32>
    %5 = arith.addf %2, %4 : vector<128x1024xf32>
    %6 = math.tanh %5 : vector<128x1024xf32>
    %7 = arith.truncf %6 : vector<128x1024xf32> to vector<128x1024xbf16>
    %c0_5 = arith.constant 0 : index
    %c0_6 = arith.constant 0 : index
    %8 = vector.load %arg4[%c0_5, %c0_6] : memref<1024x128xbf16, #tpu.memory_space<vmem>>, vector<1024x128xbf16>
    %cst_7 = arith.constant dense<0.000000e+00> : vector<128x128xf32>
    %9 = tpu.matmul %7, %8, %cst_7 {dimension_numbers = #tpu.dot_dimension_numbers<[1], [0], [0], [1], [0, 0, 1, 1], [], []>} : vector<128x1024xbf16>, vector<1024x128xbf16>, vector<128x128xf32> -> vector<128x128xf32>
    %c0_8 = arith.constant 0 : index
    %c0_9 = arith.constant 0 : index
    %10 = vector.load %arg5[%c0_8, %c0_9] : memref<1x128xf32, #tpu.memory_space<vmem>>, vector<1x128xf32>
    %11 = vector.broadcast %10 : vector<1x128xf32> to vector<128x128xf32>
    %12 = arith.addf %9, %11 : vector<128x128xf32>
    %13 = math.tanh %12 : vector<128x128xf32>
    %c0_10 = arith.constant 0 : index
    %c0_11 = arith.constant 0 : index
    %14 = vector.load %arg6[%c0_10, %c0_11] : memref<128x128xf32, #tpu.memory_space<vmem>>, vector<128x128xf32>
    tpu.vector_store %arg6[%c0_10, %c0_11], %13 {strides = array<i32>} : memref<128x128xf32, #tpu.memory_space<vmem>>, vector<128x128xf32>,
    return
  }
  func.func @transform_0(%arg0: i32) -> (i32, i32) {
    %c0_i32 = arith.constant 0 : i32
    %c0_i32_0 = arith.constant 0 : i32
    return %arg0, %c0_i32 : i32, i32
  }
  func.func @transform_1(%arg0: i32) -> (i32, i32) {
    %c0_i32 = arith.constant 0 : i32
    %c0_i32_0 = arith.constant 0 : i32
    %c0_i32_1 = arith.constant 0 : i32
    return %c0_i32, %c0_i32_0 : i32, i32
  }
  func.func @transform_2(%arg0: i32) -> (i32, i32) {
    %c0_i32 = arith.constant 0 : i32
    %c0_i32_0 = arith.constant 0 : i32
    %c0_i32_1 = arith.constant 0 : i32
    return %c0_i32, %c0_i32_0 : i32, i32
  }
  func.func @transform_3(%arg0: i32) -> (i32, i32) {
    %c0_i32 = arith.constant 0 : i32
    %c0_i32_0 = arith.constant 0 : i32
    %c0_i32_1 = arith.constant 0 : i32
    return %c0_i32, %c0_i32_0 : i32, i32
  }
  func.func @transform_4(%arg0: i32) -> (i32, i32) {
    %c0_i32 = arith.constant 0 : i32
    %c0_i32_0 = arith.constant 0 : i32
    %c0_i32_1 = arith.constant 0 : i32
    return %c0_i32, %c0_i32_0 : i32, i32
  }
  func.func @transform_5(%arg0: i32) -> (i32, i32) {
    %c0_i32 = arith.constant 0 : i32
    %c0_i32_0 = arith.constant 0 : i32
    return %arg0, %c0_i32 : i32, i32
  }
}

</mosaic_0001>

<llo_original>
// kernel: tpu_custom_call.1
$region0: #{tpu_custom_call.1}
  #allocation0 [shape = 'u32[]', space=smem, size = 0x4, offset = 0x4, fixed_abs, tag = 'smem constant byte address 0x4 - core index']
  #allocation1 [shape = 'u32[144,128]{1,0:T(1,128)}', space=vmem, size = 0x12000, scoped, tag = 'internal scratch']
  %s0 = inlined_call_operand.hbm [shape: bf16[256,640], index: 0, kind: input, shape index: {}]
  %s1 = inlined_call_operand.hbm [shape: bf16[640,1024], index: 1, kind: input, shape index: {}]
  %s2 = inlined_call_operand.hbm [shape: f32[1,1024], index: 2, kind: input, shape index: {}]
  %s3 = inlined_call_operand.hbm [shape: bf16[1024,128], index: 3, kind: input, shape index: {}]
  %s4 = inlined_call_operand.hbm [shape: f32[1,128], index: 4, kind: input, shape index: {}]
  %s5 = inlined_call_operand.hbm [shape: f32[256,128], index: 5, kind: output, shape index: {}]
  %s6 = sld [smem:[#allocation0]]
  $region73: #{tpu_custom_call.1} parent=0
    _
  %s8 = ssub.s32 1, %s6
  %s9 = scalar_select 0, %s8, %s6
  $region1: #{tpu_custom_call.1} parent=0
    #allocation2 [shape = 'u8[327680]{0}', space=vmem, size = 0x50000, scoped, tag = 'input window, operand 0']
    #allocation3 [shape = 's32[2]{0}', space=sflag, size = 0x8, scoped, tag = 'scoped memory for tpu_custom_call.1']
    #allocation4 [shape = 's32[2]{0}', space=sflag, size = 0x8, scoped, tag = 'scoped memory for tpu_custom_call.1']
    #allocation5 [shape = 'u8[1310720]{0}', space=vmem, size = 0x140000, scoped, tag = 'input window, operand 1, single buffered']
    #allocation6 [shape = 's32[1]{0}', space=sflag, size = 0x4, scoped, tag = 'scoped memory for tpu_custom_call.1']
    #allocation7 [shape = 'u8[4096]{0}', space=vmem, size = 0x1000, scoped, tag = 'input window, operand 2, single buffered']
    #allocation8 [shape = 'u8[262144]{0}', space=vmem, size = 0x40000, scoped, tag = 'input window, operand 3, single buffered']
    #allocation9 [shape = 's32[1]{0}', space=sflag, size = 0x4, scoped, tag = 'scoped memory for tpu_custom_call.1']
    #allocation10 [shape = 'u8[512]{0}', space=vmem, size = 0x400, scoped, tag = 'input window, operand 4, single buffered']
    #allocation11 [shape = 'u8[131072]{0}', space=vmem, size = 0x20000, scoped, tag = 'output window, operand 0']
    %10 = vsyncpa [#allocation3], 0
    %s11 = scalar_lea.sflag [#allocation3], 1
    %12 = vsyncpa %s11, 0
    %13 = vsyncpa [#allocation6], 0
    %14 = vsyncpa [#allocation9], 0
    %15 = vsyncpa [#allocation4], 0
    %s16 = scalar_lea.sflag [#allocation4], 1
    %17 = vsyncpa %s16, 0
    loop: start=0, step=1, limit=4
    $region2: #{tpu_custom_call.1} parent=1 // loop_pre_header
      _
    $region3: #{tpu_custom_call.1} parent=1 // loop_header
      %s19 = sphi 0, %s23
      %p20 = scmp.ge.s32.totalorder %s19, 4
      %s29 = sphi 0, %s31
      %s32 = sphi 0, %s29
      %s33 = sphi 0, %s32
      %s49 = sphi 0, %s33
      %s53 = sphi 0, %s53
      %s55 = sphi 0, %s53
      %s56 = sphi 0, %s55
      %s70 = sphi 0, %s56
      %s74 = sphi 0, %s74
      %s76 = sphi 0, %s74
      %s77 = sphi 0, %s76
      %s91 = sphi 0, %s77
      %s95 = sphi 0, %s95
      %s97 = sphi 0, %s95
      %s98 = sphi 0, %s97
      %s112 = sphi 0, %s98
      %s116 = sphi 0, %s116
      %s118 = sphi 0, %s116
      %s119 = sphi 0, %s118
      %s133 = sphi 0, %s119
      %s139 = sphi 0, %s141
      %s142 = sphi 0, %s139
      %s143 = sphi 0, %s142
      %s159 = sphi 0, %s143
    $region4: #{tpu_custom_call.1} parent=1 // loop_header_branch
      %22 = sbr.rel (%p20) target = $region8
    $region5: #{tpu_custom_call.1} parent=1 // loop_body
      %s24 = ssub.s32 %s19, 1
      %s25 = ssub.s32 %s19, 2
      %s26 = sadd.s32 %s19, 1
      %s27 = ssub.s32 %s19, %s26
      %p28 = scmp.eq.s32.totalorder %s27, 0
      %s30 = sadd.s32 %s29, 1
      %s31 = scalar_select %p28, %s29, %s30
      %p34 = pneg %p28
      %p35 = scmp.eq.s32.totalorder %s19, 1
      %p36 = por %p34, %p35
      %p37 = scmp.ne.s32.totalorder %s29, %s32
      %p38 = scmp.eq.s32.totalorder %s19, 0
      %p39 = por %p37, %p38
      %p40 = scmp.ne.s32.totalorder %s29, %s32
      %p41 = scmp.eq.s32.totalorder %s24, 1
      %p42 = por %p40, %p41
      %p43 = scmp.ne.s32.totalorder %s32, %s33
      %p44 = scmp.eq.s32.totalorder %s24, 0
      %p45 = por %p43, %p44
      %p46 = scmp.ne.s32.totalorder %s32, %s33
      %p47 = scmp.eq.s32.totalorder %s25, 1
      %p48 = por %p46, %p47
      %p50 = scmp.ne.s32.totalorder %s33, %s49
      %p51 = scmp.eq.s32.totalorder %s25, 0
      %p52 = por %p50, %p51
      %s54 = sadd.s32 %s53, 1
      %p57 = scmp.eq.s32.totalorder %s19, 1
      %p58 = scmp.ne.s32.totalorder %s53, %s55
      %p59 = scmp.eq.s32.totalorder %s19, 0
      %p60 = por %p58, %p59
      %p61 = scmp.ne.s32.totalorder %s53, %s55
      %p62 = scmp.eq.s32.totalorder %s24, 1
      %p63 = por %p61, %p62
      %p64 = scmp.ne.s32.totalorder %s55, %s56
      %p65 = scmp.eq.s32.totalorder %s24, 0
      %p66 = por %p64, %p65
      %p67 = scmp.ne.s32.totalorder %s55, %s56
      %p68 = scmp.eq.s32.totalorder %s25, 1
      %p69 = por %p67, %p68
      %p71 = scmp.ne.s32.totalorder %s56, %s70
      %p72 = scmp.eq.s32.totalorder %s25, 0
      %p73 = por %p71, %p72
      %s75 = sadd.s32 %s74, 1
      %p78 = scmp.eq.s32.totalorder %s19, 1
      %p79 = scmp.ne.s32.totalorder %s74, %s76
      %p80 = scmp.eq.s32.totalorder %s19, 0
      %p81 = por %p79, %p80
      %p82 = scmp.ne.s32.totalorder %s74, %s76
      %p83 = scmp.eq.s32.totalorder %s24, 1
      %p84 = por %p82, %p83
      %p85 = scmp.ne.s32.totalorder %s76, %s77
      %p86 = scmp.eq.s32.totalorder %s24, 0
      %p87 = por %p85, %p86
      %p88 = scmp.ne.s32.totalorder %s76, %s77
      %p89 = scmp.eq.s32.totalorder %s25, 1
      %p90 = por %p88, %p89
      %p92 = scmp.ne.s32.totalorder %s77, %s91
      %p93 = scmp.eq.s32.totalorder %s25, 0
      %p94 = por %p92, %p93
      %s96 = sadd.s32 %s95, 1
      %p99 = scmp.eq.s32.totalorder %s19, 1
      %p100 = scmp.ne.s32.totalorder %s95, %s97
      %p101 = scmp.eq.s32.totalorder %s19, 0
      %p102 = por %p100, %p101
      %p103 = scmp.ne.s32.totalorder %s95, %s97
      %p104 = scmp.eq.s32.totalorder %s24, 1
      %p105 = por %p103, %p104
      %p106 = scmp.ne.s32.totalorder %s97, %s98
      %p107 = scmp.eq.s32.totalorder %s24, 0
      %p108 = por %p106, %p107
      %p109 = scmp.ne.s32.totalorder %s97, %s98
      %p110 = scmp.eq.s32.totalorder %s25, 1
      %p111 = por %p109, %p110
      %p113 = scmp.ne.s32.totalorder %s98, %s112
      %p114 = scmp.eq.s32.totalorder %s25, 0
      %p115 = por %p113, %p114
      %s117 = sadd.s32 %s116, 1
      %p120 = scmp.eq.s32.totalorder %s19, 1
      %p121 = scmp.ne.s32.totalorder %s116, %s118
      %p122 = scmp.eq.s32.totalorder %s19, 0
      %p123 = por %p121, %p122
      %p124 = scmp.ne.s32.totalorder %s116, %s118
      %p125 = scmp.eq.s32.totalorder %s24, 1
      %p126 = por %p124, %p125
      %p127 = scmp.ne.s32.totalorder %s118, %s119
      %p128 = scmp.eq.s32.totalorder %s24, 0
      %p129 = por %p127, %p128
      %p130 = scmp.ne.s32.totalorder %s118, %s119
      %p131 = scmp.eq.s32.totalorder %s25, 1
      %p132 = por %p130, %p131
      %p134 = scmp.ne.s32.totalorder %s119, %s133
      %p135 = scmp.eq.s32.totalorder %s25, 0
      %p136 = por %p134, %p135
      %s137 = ssub.s32 %s19, %s26
      %p138 = scmp.eq.s32.totalorder %s137, 0
      %s140 = sadd.s32 %s139, 1
      %s141 = scalar_select %p138, %s139, %s140
      %p144 = pneg %p138
      %p145 = scmp.eq.s32.totalorder %s19, 1
      %p146 = por %p144, %p145
      %p147 = scmp.ne.s32.totalorder %s139, %s142
      %p148 = scmp.eq.s32.totalorder %s19, 0
      %p149 = por %p147, %p148
      %p150 = scmp.ne.s32.totalorder %s139, %s142
      %p151 = scmp.eq.s32.totalorder %s24, 1
      %p152 = por %p150, %p151
      %p153 = scmp.ne.s32.totalorder %s142, %s143
      %p154 = scmp.eq.s32.totalorder %s24, 0
      %p155 = por %p153, %p154
      %p156 = scmp.ne.s32.totalorder %s142, %s143
      %p157 = scmp.eq.s32.totalorder %s25, 1
      %p158 = por %p156, %p157
      %p160 = scmp.ne.s32.totalorder %s143, %s159
      %p161 = scmp.eq.s32.totalorder %s25, 0
      %p162 = por %p160, %p161
      %p163 = scmp.le.s32.totalorder 1, %s19
      %p164 = scmp.lt.s32.totalorder %s19, 3
      %p165 = pnand %p163, %p164
      %p166 = pneg %p165
      // Predicated region
      $region9: #{tpu_custom_call.1} parent=5 // pred_check
        _
      $region10: #{tpu_custom_call.1} parent=5 // pred_check_branch
        %168 = sbr.rel (%p165) target = $region12
      $region11: #{tpu_custom_call.1} parent=5 // pred_region
        %s169 = ssub.s32 %s19, 1
        // Predicated region
        $region13: #{tpu_custom_call.1} parent=11 // pred_check
          %p170 = pneg %p66
        $region14: #{tpu_custom_call.1} parent=11 // pred_check_branch
          %172 = sbr.rel (%p170) target = $region16
        $region15: #{tpu_custom_call.1} parent=11 // pred_region
          %s174 = ssub.s32 40960, 40960
          %175 = vsyncadd [#allocation6], %s174
          %s176 = sshll.u32 [#allocation5], 4
          %s177 = int_to_ptr.vmem [resolvable:$true] %s176
          %182 = dma.hbm_to_vmem [thread:$0]  %s1, 40960, %s177, [#allocation6], 512, 512, 32
        $region16: #{tpu_custom_call.1} parent=11 // pred_fallthru
          _
        // Predicated region
        $region17: #{tpu_custom_call.1} parent=11 // pred_check
          %p183 = pneg %p87
        $region18: #{tpu_custom_call.1} parent=11 // pred_check_branch
          %185 = sbr.rel (%p183) target = $region20
        $region19: #{tpu_custom_call.1} parent=11 // pred_region
          %s187 = ssub.s32 128, 128
          %188 = vsyncadd [#allocation6], %s187
          %s190 = sshll.u32 [#allocation7], 4
          %s191 = int_to_ptr.vmem [resolvable:$true] %s190
          %193 = dma.hbm_to_vmem [thread:$0]  %s2, 128, %s191, [#allocation6]
        $region20: #{tpu_custom_call.1} parent=11 // pred_fallthru
          _
        // Predicated region
        $region21: #{tpu_custom_call.1} parent=11 // pred_check
          %p194 = pneg %p108
        $region22: #{tpu_custom_call.1} parent=11 // pred_check_branch
          %196 = sbr.rel (%p194) target = $region24
        $region23: #{tpu_custom_call.1} parent=11 // pred_region
          %s198 = ssub.s32 8192, 8192
          %199 = vsyncadd [#allocation9], %s198
          %s200 = sshll.u32 [#allocation8], 4
          %s201 = int_to_ptr.vmem [resolvable:$true] %s200
          %206 = dma.hbm_to_vmem [thread:$0]  %s3, 8192, %s201, [#allocation9], 64, 64, 4
        $region24: #{tpu_custom_call.1} parent=11 // pred_fallthru
          _
        // Predicated region
        $region25: #{tpu_custom_call.1} parent=11 // pred_check
          %p207 = pneg %p129
        $region26: #{tpu_custom_call.1} parent=11 // pred_check_branch
          %209 = sbr.rel (%p207) target = $region28
        $region27: #{tpu_custom_call.1} parent=11 // pred_region
          %s211 = ssub.s32 16, 16
          %212 = vsyncadd [#allocation9], %s211
          %s214 = sshll.u32 [#allocation10], 4
          %s215 = int_to_ptr.vmem [resolvable:$true] %s214
          %217 = dma.hbm_to_vmem [thread:$0]  %s4, 16, %s215, [#allocation9]
        $region28: #{tpu_custom_call.1} parent=11 // pred_fallthru
          _
      $region12: #{tpu_custom_call.1} parent=5 // pred_fallthru
        _
      %p218 = scmp.lt.s32.totalorder %s19, 2
      // Predicated region
      $region29: #{tpu_custom_call.1} parent=5 // pred_check
        %p219 = pneg %p218
      $region30: #{tpu_custom_call.1} parent=5 // pred_check_branch
        %221 = sbr.rel (%p219) target = $region32
      $region31: #{tpu_custom_call.1} parent=5 // pred_region
        // Predicated region
        $region33: #{tpu_custom_call.1} parent=31 // pred_check
          %p222 = pneg %p39
        $region34: #{tpu_custom_call.1} parent=31 // pred_check_branch
          %224 = sbr.rel (%p222) target = $region36
        $region35: #{tpu_custom_call.1} parent=31 // pred_region
          %s225 = sand.u32 %s29, 1
          %s226 = scalar_lea.sflag [#allocation3], %s225
          %s227 = sand.u32 %s29, 1
          %s228 = smul.addr %s227, 320
          %s229 = scalar_lea.vmem [#allocation2], %s228
          %s230 = smul.u32 16, %s19
          %s232 = ssub.s32 5120, 5120
          %233 = vsyncadd %s226, %s232
          %s234 = smul.addr %s230, 5
          %s235 = smul.addr %s234, 64
          %s236 = scalar_lea.hbm %s0, %s235
          %s237 = sshll.u32 %s229, 4
          %s238 = int_to_ptr.vmem [resolvable:$true] %s237
          %243 = dma.hbm_to_vmem [thread:$0]  %s236, 5120, %s238, %s226, 320, 320, 20
        $region36: #{tpu_custom_call.1} parent=31 // pred_fallthru
          _
      $region32: #{tpu_custom_call.1} parent=5 // pred_fallthru
        _
      %p244 = scmp.le.s32.totalorder 1, %s19
      %p245 = scmp.lt.s32.totalorder %s19, 3
      %p246 = pnand %p244, %p245
      %p247 = pneg %p246
      // Predicated region
      $region37: #{tpu_custom_call.1} parent=5 // pred_check
        _
      $region38: #{tpu_custom_call.1} parent=5 // pred_check_branch
        %249 = sbr.rel (%p246) target = $region40
      $region39: #{tpu_custom_call.1} parent=5 // pred_region
        %s250 = ssub.s32 %s19, 1
        %s251 = sand.u32 %s32, 1
        %s252 = scalar_lea.sflag [#allocation3], %s251
        %s253 = sand.u32 %s32, 1
        %s254 = smul.addr %s253, 320
        %s255 = scalar_lea.vmem [#allocation2], %s254
        // Predicated region
        $region41: #{tpu_custom_call.1} parent=39 // pred_check
          %p256 = pneg %p45
        $region42: #{tpu_custom_call.1} parent=39 // pred_check_branch
          %258 = sbr.rel (%p256) target = $region44
        $region43: #{tpu_custom_call.1} parent=39 // pred_region
          %259 = dma.done %s252, 5120
        $region44: #{tpu_custom_call.1} parent=39 // pred_fallthru
          _
        // Predicated region
        $region45: #{tpu_custom_call.1} parent=39 // pred_check
          %p260 = pneg %p66
        $region46: #{tpu_custom_call.1} parent=39 // pred_check_branch
          %262 = sbr.rel (%p260) target = $region48
        $region47: #{tpu_custom_call.1} parent=39 // pred_region
          %263 = dma.done [#allocation6], 40960
        $region48: #{tpu_custom_call.1} parent=39 // pred_fallthru
          _
        // Predicated region
        $region49: #{tpu_custom_call.1} parent=39 // pred_check
          %p264 = pneg %p87
        $region50: #{tpu_custom_call.1} parent=39 // pred_check_branch
          %266 = sbr.rel (%p264) target = $region52
        $region51: #{tpu_custom_call.1} parent=39 // pred_region
          %267 = dma.done [#allocation6], 128
        $region52: #{tpu_custom_call.1} parent=39 // pred_fallthru
          _
        // Predicated region
        $region53: #{tpu_custom_call.1} parent=39 // pred_check
          %p268 = pneg %p108
        $region54: #{tpu_custom_call.1} parent=39 // pred_check_branch
          %270 = sbr.rel (%p268) target = $region56
        $region55: #{tpu_custom_call.1} parent=39 // pred_region
          %271 = dma.done [#allocation9], 8192
        $region56: #{tpu_custom_call.1} parent=39 // pred_fallthru
          _
        // Predicated region
        $region57: #{tpu_custom_call.1} parent=39 // pred_check
          %p272 = pneg %p129
        $region58: #{tpu_custom_call.1} parent=39 // pred_check_branch
          %274 = sbr.rel (%p272) target = $region60
        $region59: #{tpu_custom_call.1} parent=39 // pred_region
          %275 = dma.done [#allocation9], 16
        $region60: #{tpu_custom_call.1} parent=39 // pred_fallthru
          _
        %s276 = sand.u32 %s32, 1
        %s277 = scalar_lea.sflag [#allocation3], %s276
        %s278 = sand.u32 %s32, 1
        %s279 = smul.addr %s278, 320
        %s280 = scalar_lea.vmem [#allocation2], %s279
        %p281 = pneg %p45
        %p282 = pneg %p42
        %p283 = pneg %p66
        %p284 = pneg %p63
        %p285 = pneg %p87
        %p286 = pneg %p84
        %p287 = pneg %p108
        %p288 = pneg %p105
        %p289 = pneg %p129
        %p290 = pneg %p126
        %p291 = pneg %p155
        %p292 = pneg %p152
        %s293 = sand.u32 %s142, 1
        %s294 = scalar_lea.sflag [#allocation4], %s293
        %s295 = sand.u32 %s142, 1
        %s296 = smul.addr %s295, 128
        %s297 = scalar_lea.vmem [#allocation11], %s296
        %s298 = smul.u32 16, %s24
        %s299 = smul.u32 16, %s24
        %v301 = vld [vmem:[%s255] sm:$0xff]
        %v302 = vld [vmem:[%s255 + $0x8] sm:$0xff]
        %v303 = vld [vmem:[%s255 + $0x10] sm:$0xf]
        %v304 = vld [vmem:[%s255 + $0x14] sm:$0xff]
        %v305 = vld [vmem:[%s255 + $0x1c] sm:$0xff]
        %v306 = vld [vmem:[%s255 + $0x24] sm:$0xf]
        %v307 = vld [vmem:[%s255 + $0x28] sm:$0xff]
        %v308 = vld [vmem:[%s255 + $0x30] sm:$0xff]
        %v309 = vld [vmem:[%s255 + $0x38] sm:$0xf]
        %v310 = vld [vmem:[%s255 + $0x3c] sm:$0xff]
        %v311 = vld [vmem:[%s255 + $0x44] sm:$0xff]
        %v312 = vld [vmem:[%s255 + $0x4c] sm:$0xf]
        %v313 = vld [vmem:[%s255 + $0x50] sm:$0xff]
        %v314 = vld [vmem:[%s255 + $0x58] sm:$0xff]
        %v315 = vld [vmem:[%s255 + $0x60] sm:$0xf]
        %v316 = vld [vmem:[%s255 + $0x64] sm:$0xff]
        %v317 = vld [vmem:[%s255 + $0x6c] sm:$0xff]
        %v318 = vld [vmem:[%s255 + $0x74] sm:$0xf]
        %v319 = vld [vmem:[%s255 + $0x78] sm:$0xff]
        %v320 = vld [vmem:[%s255 + $0x80] sm:$0xff]
        %v321 = vld [vmem:[%s255 + $0x88] sm:$0xf]
        %v322 = vld [vmem:[%s255 + $0x8c] sm:$0xff]
        %v323 = vld [vmem:[%s255 + $0x94] sm:$0xff]
        %v324 = vld [vmem:[%s255 + $0x9c] sm:$0xf]
        %v325 = vld [vmem:[%s255 + $0xa0] sm:$0xff]
        %v326 = vld [vmem:[%s255 + $0xa8] sm:$0xff]
        %v327 = vld [vmem:[%s255 + $0xb0] sm:$0xf]
        %v328 = vld [vmem:[%s255 + $0xb4] sm:$0xff]
        %v329 = vld [vmem:[%s255 + $0xbc] sm:$0xff]
        %v330 = vld [vmem:[%s255 + $0xc4] sm:$0xf]
        %v331 = vld [vmem:[%s255 + $0xc8] sm:$0xff]
        %v332 = vld [vmem:[%s255 + $0xd0] sm:$0xff]
        %v333 = vld [vmem:[%s255 + $0xd8] sm:$0xf]
        %v334 = vld [vmem:[%s255 + $0xdc] sm:$0xff]
        %v335 = vld [vmem:[%s255 + $0xe4] sm:$0xff]
        %v336 = vld [vmem:[%s255 + $0xec] sm:$0xf]
        %v337 = vld [vmem:[%s255 + $0xf0] sm:$0xff]
        %v338 = vld [vmem:[%s255 + $0xf8] sm:$0xff]
        %v339 = vld [vmem:[%s255 + $0x100] sm:$0xf]
        %v340 = vld [vmem:[%s255 + $0x104] sm:$0xff]
        %v341 = vld [vmem:[%s255 + $0x10c] sm:$0xff]
        %v342 = vld [vmem:[%s255 + $0x114] sm:$0xf]
        %v343 = vld [vmem:[%s255 + $0x118] sm:$0xff]
        %v344 = vld [vmem:[%s255 + $0x120] sm:$0xff]
        %v345 = vld [vmem:[%s255 + $0x128] sm:$0xf]
        %v346 = vld [vmem:[%s255 + $0x12c] sm:$0xff]
        %v347 = vld [vmem:[%s255 + $0x134] sm:$0xff]
        %v348 = vld [vmem:[%s255 + $0x13c] sm:$0xf]
        %v349 = vld [vmem:[#allocation5] sm:$0xff]
        %v350 = vld [vmem:[#allocation5 + $0x8] sm:$0xff]
        %v351 = vld [vmem:[#allocation5 + $0x10] sm:$0xff]
        %v352 = vld [vmem:[#allocation5 + $0x18] sm:$0xff]
        %v353 = vld [vmem:[#allocation5 + $0x20] sm:$0xff]
        %v354 = vld [vmem:[#allocation5 + $0x28] sm:$0xff]
        %v355 = vld [vmem:[#allocation5 + $0x30] sm:$0xff]
        %v356 = vld [vmem:[#allocation5 + $0x38] sm:$0xff]
        %v357 = vld [vmem:[#allocation5 + $0x40] sm:$0xff]
        %v358 = vld [vmem:[#allocation5 + $0x48] sm:$0xff]
        %v359 = vld [vmem:[#allocation5 + $0x50] sm:$0xff]
        %v360 = vld [vmem:[#allocation5 + $0x58] sm:$0xff]
        %v361 = vld [vmem:[#allocation5 + $0x60] sm:$0xff]
        %v362 = vld [vmem:[#allocation5 + $0x68] sm:$0xff]
        %v363 = vld [vmem:[#allocation5 + $0x70] sm:$0xff]
        %v364 = vld [vmem:[#allocation5 + $0x78] sm:$0xff]
        %v365 = vld [vmem:[#allocation5 + $0x80] sm:$0xff]
        %v366 = vld [vmem:[#allocation5 + $0x88] sm:$0xff]
        %v367 = vld [vmem:[#allocation5 + $0x90] sm:$0xff]
        %v368 = vld [vmem:[#allocation5 + $0x98] sm:$0xff]
        %v369 = vld [vmem:[#allocation5 + $0xa0] sm:$0xff]
        %v370 = vld [vmem:[#allocation5 + $0xa8] sm:$0xff]
        %v371 = vld [vmem:[#allocation5 + $0xb0] sm:$0xff]
        %v372 = vld [vmem:[#allocation5 + $0xb8] sm:$0xff]
        %v373 = vld [vmem:[#allocation5 + $0xc0] sm:$0xff]
        %v374 = vld [vmem:[#allocation5 + $0xc8] sm:$0xff]
        %v375 = vld [vmem:[#allocation5 + $0xd0] sm:$0xff]
        %v376 = vld [vmem:[#allocation5 + $0xd8] sm:$0xff]
        %v377 = vld [vmem:[#allocation5 + $0xe0] sm:$0xff]
        %v378 = vld [vmem:[#allocation5 + $0xe8] sm:$0xff]
        %v379 = vld [vmem:[#allocation5 + $0xf0] sm:$0xff]
        %v380 = vld [vmem:[#allocation5 + $0xf8] sm:$0xff]
        %v381 = vld [vmem:[#allocation5 + $0x100] sm:$0xff]
        %v382 = vld [vmem:[#allocation5 + $0x108] sm:$0xff]
        %v383 = vld [vmem:[#allocation5 + $0x110] sm:$0xff]
        %v384 = vld [vmem:[#allocation5 + $0x118] sm:$0xff]
        %v385 = vld [vmem:[#allocation5 + $0x120] sm:$0xff]
        %v386 = vld [vmem:[#allocation5 + $0x128] sm:$0xff]
        %v387 = vld [vmem:[#allocation5 + $0x130] sm:$0xff]
        %v388 = vld [vmem:[#allocation5 + $0x138] sm:$0xff]
        %v389 = vld [vmem:[#allocation5 + $0x140] sm:$0xff]
        %v390 = vld [vmem:[#allocation5 + $0x148] sm:$0xff]
        %v391 = vld [vmem:[#allocation5 + $0x150] sm:$0xff]
        %v392 = vld [vmem:[#allocation5 + $0x158] sm:$0xff]
        %v393 = vld [vmem:[#allocation5 + $0x160] sm:$0xff]
        %v394 = vld [vmem:[#allocation5 + $0x168] sm:$0xff]
        %v395 = vld [vmem:[#allocation5 + $0x170] sm:$0xff]
        %v396 = vld [vmem:[#allocation5 + $0x178] sm:$0xff]
        %v397 = vld [vmem:[#allocation5 + $0x180] sm:$0xff]
        %v398 = vld [vmem:[#allocation5 + $0x188] sm:$0xff]
        %v399 = vld [vmem:[#allocation5 + $0x190] sm:$0xff]
        %v400 = vld [vmem:[#allocation5 + $0x198] sm:$0xff]
        %v401 = vld [vmem:[#allocation5 + $0x1a0] sm:$0xff]
        %v402 = vld [vmem:[#allocation5 + $0x1a8] sm:$0xff]
        %v403 = vld [vmem:[#allocation5 + $0x1b0] sm:$0xff]
        %v404 = vld [vmem:[#allocation5 + $0x1b8] sm:$0xff]
        %v405 = vld [vmem:[#allocation5 + $0x1c0] sm:$0xff]
        %v406 = vld [vmem:[#allocation5 + $0x1c8] sm:$0xff]
        %v407 = vld [vmem:[#allocation5 + $0x1d0] sm:$0xff]
        %v408 = vld [vmem:[#allocation5 + $0x1d8] sm:$0xff]
        %v409 = vld [vmem:[#allocation5 + $0x1e0] sm:$0xff]
        %v410 = vld [vmem:[#allocation5 + $0x1e8] sm:$0xff]
        %v411 = vld [vmem:[#allocation5 + $0x1f0] sm:$0xff]
        %v412 = vld [vmem:[#allocation5 + $0x1f8] sm:$0xff]
        %v413 = vld [vmem:[#allocation5 + $0x200] sm:$0xff]
        %v414 = vld [vmem:[#allocation5 + $0x208] sm:$0xff]
        %v415 = vld [vmem:[#allocation5 + $0x210] sm:$0xff]
        %v416 = vld [vmem:[#allocation5 + $0x218] sm:$0xff]
        %v417 = vld [vmem:[#allocation5 + $0x220] sm:$0xff]
        %v418 = vld [vmem:[#allocation5 + $0x228] sm:$0xff]
        %v419 = vld [vmem:[#allocation5 + $0x230] sm:$0xff]
        %v420 = vld [vmem:[#allocation5 + $0x238] sm:$0xff]
        %v421 = vld [vmem:[#allocation5 + $0x240] sm:$0xff]
        %v422 = vld [vmem:[#allocation5 + $0x248] sm:$0xff]
        %v423 = vld [vmem:[#allocation5 + $0x250] sm:$0xff]
        %v424 = vld [vmem:[#allocation5 + $0x258] sm:$0xff]
        %v425 = vld [vmem:[#allocation5 + $0x260] sm:$0xff]
        %v426 = vld [vmem:[#allocation5 + $0x268] sm:$0xff]
        %v427 = vld [vmem:[#allocation5 + $0x270] sm:$0xff]
        %v428 = vld [vmem:[#allocation5 + $0x278] sm:$0xff]
        %v429 = vld [vmem:[#allocation5 + $0x280] sm:$0xff]
        %v430 = vld [vmem:[#allocation5 + $0x288] sm:$0xff]
        %v431 = vld [vmem:[#allocation5 + $0x290] sm:$0xff]
        %v432 = vld [vmem:[#allocation5 + $0x298] sm:$0xff]
        %v433 = vld [vmem:[#allocation5 + $0x2a0] sm:$0xff]
        %v434 = vld [vmem:[#allocation5 + $0x2a8] sm:$0xff]
        %v435 = vld [vmem:[#allocation5 + $0x2b0] sm:$0xff]
        %v436 = vld [vmem:[#allocation5 + $0x2b8] sm:$0xff]
        %v437 = vld [vmem:[#allocation5 + $0x2c0] sm:$0xff]
        %v438 = vld [vmem:[#allocation5 + $0x2c8] sm:$0xff]
        %v439 = vld [vmem:[#allocation5 + $0x2d0] sm:$0xff]
        %v440 = vld [vmem:[#allocation5 + $0x2d8] sm:$0xff]
        %v441 = vld [vmem:[#allocation5 + $0x2e0] sm:$0xff]
        %v442 = vld [vmem:[#allocation5 + $0x2e8] sm:$0xff]
        %v443 = vld [vmem:[#allocation5 + $0x2f0] sm:$0xff]
        %v444 = vld [vmem:[#allocation5 + $0x2f8] sm:$0xff]
        %v445 = vld [vmem:[#allocation5 + $0x300] sm:$0xff]
        %v446 = vld [vmem:[#allocation5 + $0x308] sm:$0xff]
        %v447 = vld [vmem:[#allocation5 + $0x310] sm:$0xff]
        %v448 = vld [vmem:[#allocation5 + $0x318] sm:$0xff]
        %v449 = vld [vmem:[#allocation5 + $0x320] sm:$0xff]
        %v450 = vld [vmem:[#allocation5 + $0x328] sm:$0xff]
        %v451 = vld [vmem:[#allocation5 + $0x330] sm:$0xff]
        %v452 = vld [vmem:[#allocation5 + $0x338] sm:$0xff]
        %v453 = vld [vmem:[#allocation5 + $0x340] sm:$0xff]
        %v454 = vld [vmem:[#allocation5 + $0x348] sm:$0xff]
        %v455 = vld [vmem:[#allocation5 + $0x350] sm:$0xff]
        %v456 = vld [vmem:[#allocation5 + $0x358] sm:$0xff]
        %v457 = vld [vmem:[#allocation5 + $0x360] sm:$0xff]
        %v458 = vld [vmem:[#allocation5 + $0x368] sm:$0xff]
        %v459 = vld [vmem:[#allocation5 + $0x370] sm:$0xff]
        %v460 = vld [vmem:[#allocation5 + $0x378] sm:$0xff]
        %v461 = vld [vmem:[#allocation5 + $0x380] sm:$0xff]
        %v462 = vld [vmem:[#allocation5 + $0x388] sm:$0xff]
        %v463 = vld [vmem:[#allocation5 + $0x390] sm:$0xff]
        %v464 = vld [vmem:[#allocation5 + $0x398] sm:$0xff]
        %v465 = vld [vmem:[#allocation5 + $0x3a0] sm:$0xff]
        %v466 = vld [vmem:[#allocation5 + $0x3a8] sm:$0xff]
        %v467 = vld [vmem:[#allocation5 + $0x3b0] sm:$0xff]
        %v468 = vld [vmem:[#allocation5 + $0x3b8] sm:$0xff]
        %v469 = vld [vmem:[#allocation5 + $0x3c0] sm:$0xff]
        %v470 = vld [vmem:[#allocation5 + $0x3c8] sm:$0xff]
        %v471 = vld [vmem:[#allocation5 + $0x3d0] sm:$0xff]
        %v472 = vld [vmem:[#allocation5 + $0x3d8] sm:$0xff]
        %v473 = vld [vmem:[#allocation5 + $0x3e0] sm:$0xff]
        %v474 = vld [vmem:[#allocation5 + $0x3e8] sm:$0xff]
        %v475 = vld [vmem:[#allocation5 + $0x3f0] sm:$0xff]
        %v476 = vld [vmem:[#allocation5 + $0x3f8] sm:$0xff]
        %v477 = vld [vmem:[#allocation5 + $0x400] sm:$0xff]
        %v478 = vld [vmem:[#allocation5 + $0x408] sm:$0xff]
        %v479 = vld [vmem:[#allocation5 + $0x410] sm:$0xff]
        %v480 = vld [vmem:[#allocation5 + $0x418] sm:$0xff]
        %v481 = vld [vmem:[#allocation5 + $0x420] sm:$0xff]
        %v482 = vld [vmem:[#allocation5 + $0x428] sm:$0xff]
        %v483 = vld [vmem:[#allocation5 + $0x430] sm:$0xff]
        %v484 = vld [vmem:[#allocation5 + $0x438] sm:$0xff]
        %v485 = vld [vmem:[#allocation5 + $0x440] sm:$0xff]
        %v486 = vld [vmem:[#allocation5 + $0x448] sm:$0xff]
        %v487 = vld [vmem:[#allocation5 + $0x450] sm:$0xff]
        %v488 = vld [vmem:[#allocation5 + $0x458] sm:$0xff]
        %v489 = vld [vmem:[#allocation5 + $0x460] sm:$0xff]
        %v490 = vld [vmem:[#allocation5 + $0x468] sm:$0xff]
        %v491 = vld [vmem:[#allocation5 + $0x470] sm:$0xff]
        %v492 = vld [vmem:[#allocation5 + $0x478] sm:$0xff]
        %v493 = vld [vmem:[#allocation5 + $0x480] sm:$0xff]
        %v494 = vld [vmem:[#allocation5 + $0x488] sm:$0xff]
        %v495 = vld [vmem:[#allocation5 + $0x490] sm:$0xff]
        %v496 = vld [vmem:[#allocation5 + $0x498] sm:$0xff]
        %v497 = vld [vmem:[#allocation5 + $0x4a0] sm:$0xff]
        %v498 = vld [vmem:[#allocation5 + $0x4a8] sm:$0xff]
        %v499 = vld [vmem:[#allocation5 + $0x4b0] sm:$0xff]
        %v500 = vld [vmem:[#allocation5 + $0x4b8] sm:$0xff]
        %v501 = vld [vmem:[#allocation5 + $0x4c0] sm:$0xff]
        %v502 = vld [vmem:[#allocation5 + $0x4c8] sm:$0xff]
        %v503 = vld [vmem:[#allocation5 + $0x4d0] sm:$0xff]
        %v504 = vld [vmem:[#allocation5 + $0x4d8] sm:$0xff]
        %v505 = vld [vmem:[#allocation5 + $0x4e0] sm:$0xff]
        %v506 = vld [vmem:[#allocation5 + $0x4e8] sm:$0xff]
        %v507 = vld [vmem:[#allocation5 + $0x4f0] sm:$0xff]
        %v508 = vld [vmem:[#allocation5 + $0x4f8] sm:$0xff]
        %v509 = vld [vmem:[#allocation5 + $0x500] sm:$0xff]
        %v510 = vld [vmem:[#allocation5 + $0x508] sm:$0xff]
        %v511 = vld [vmem:[#allocation5 + $0x510] sm:$0xff]
        %v512 = vld [vmem:[#allocation5 + $0x518] sm:$0xff]
        %v513 = vld [vmem:[#allocation5 + $0x520] sm:$0xff]
        %v514 = vld [vmem:[#allocation5 + $0x528] sm:$0xff]
        %v515 = vld [vmem:[#allocation5 + $0x530] sm:$0xff]
        %v516 = vld [vmem:[#allocation5 + $0x538] sm:$0xff]
        %v517 = vld [vmem:[#allocation5 + $0x540] sm:$0xff]
        %v518 = vld [vmem:[#allocation5 + $0x548] sm:$0xff]
        %v519 = vld [vmem:[#allocation5 + $0x550] sm:$0xff]
        %v520 = vld [vmem:[#allocation5 + $0x558] sm:$0xff]
        %v521 = vld [vmem:[#allocation5 + $0x560] sm:$0xff]
        %v522 = vld [vmem:[#allocation5 + $0x568] sm:$0xff]
        %v523 = vld [vmem:[#allocation5 + $0x570] sm:$0xff]
        %v524 = vld [vmem:[#allocation5 + $0x578] sm:$0xff]
        %v525 = vld [vmem:[#allocation5 + $0x580] sm:$0xff]
        %v526 = vld [vmem:[#allocation5 + $0x588] sm:$0xff]
        %v527 = vld [vmem:[#allocation5 + $0x590] sm:$0xff]
        %v528 = vld [vmem:[#allocation5 + $0x598] sm:$0xff]
        %v529 = vld [vmem:[#allocation5 + $0x5a0] sm:$0xff]
        %v530 = vld [vmem:[#allocation5 + $0x5a8] sm:$0xff]
        %v531 = vld [vmem:[#allocation5 + $0x5b0] sm:$0xff]
        %v532 = vld [vmem:[#allocation5 + $0x5b8] sm:$0xff]
        %v533 = vld [vmem:[#allocation5 + $0x5c0] sm:$0xff]
        %v534 = vld [vmem:[#allocation5 + $0x5c8] sm:$0xff]
        %v535 = vld [vmem:[#allocation5 + $0x5d0] sm:$0xff]
        %v536 = vld [vmem:[#allocation5 + $0x5d8] sm:$0xff]
        %v537 = vld [vmem:[#allocation5 + $0x5e0] sm:$0xff]
        %v538 = vld [vmem:[#allocation5 + $0x5e8] sm:$0xff]
        %v539 = vld [vmem:[#allocation5 + $0x5f0] sm:$0xff]
        %v540 = vld [vmem:[#allocation5 + $0x5f8] sm:$0xff]
        %v541 = vld [vmem:[#allocation5 + $0x600] sm:$0xff]
        %v542 = vld [vmem:[#allocation5 + $0x608] sm:$0xff]
        %v543 = vld [vmem:[#allocation5 + $0x610] sm:$0xff]
        %v544 = vld [vmem:[#allocation5 + $0x618] sm:$0xff]
        %v545 = vld [vmem:[#allocation5 + $0x620] sm:$0xff]
        %v546 = vld [vmem:[#allocation5 + $0x628] sm:$0xff]
        %v547 = vld [vmem:[#allocation5 + $0x630] sm:$0xff]
        %v548 = vld [vmem:[#allocation5 + $0x638] sm:$0xff]
        %v549 = vld [vmem:[#allocation5 + $0x640] sm:$0xff]
        %v550 = vld [vmem:[#allocation5 + $0x648] sm:$0xff]
        %v551 = vld [vmem:[#allocation5 + $0x650] sm:$0xff]
        %v552 = vld [vmem:[#allocation5 + $0x658] sm:$0xff]
        %v553 = vld [vmem:[#allocation5 + $0x660] sm:$0xff]
        %v554 = vld [vmem:[#allocation5 + $0x668] sm:$0xff]
        %v555 = vld [vmem:[#allocation5 + $0x670] sm:$0xff]
        %v556 = vld [vmem:[#allocation5 + $0x678] sm:$0xff]
        %v557 = vld [vmem:[#allocation5 + $0x680] sm:$0xff]
        %v558 = vld [vmem:[#allocation5 + $0x688] sm:$0xff]
        %v559 = vld [vmem:[#allocation5 + $0x690] sm:$0xff]
        %v560 = vld [vmem:[#allocation5 + $0x698] sm:$0xff]
        %v561 = vld [vmem:[#allocation5 + $0x6a0] sm:$0xff]
        %v562 = vld [vmem:[#allocation5 + $0x6a8] sm:$0xff]
        %v563 = vld [vmem:[#allocation5 + $0x6b0] sm:$0xff]
        %v564 = vld [vmem:[#allocation5 + $0x6b8] sm:$0xff]
        %v565 = vld [vmem:[#allocation5 + $0x6c0] sm:$0xff]
        %v566 = vld [vmem:[#allocation5 + $0x6c8] sm:$0xff]
        %v567 = vld [vmem:[#allocation5 + $0x6d0] sm:$0xff]
        %v568 = vld [vmem:[#allocation5 + $0x6d8] sm:$0xff]
        %v569 = vld [vmem:[#allocation5 + $0x6e0] sm:$0xff]
        %v570 = vld [vmem:[#allocation5 + $0x6e8] sm:$0xff]
        %v571 = vld [vmem:[#allocation5 + $0x6f0] sm:$0xff]
        %v572 = vld [vmem:[#allocation5 + $0x6f8] sm:$0xff]
        %v573 = vld [vmem:[#allocation5 + $0x700] sm:$0xff]
        %v574 = vld [vmem:[#allocation5 + $0x708] sm:$0xff]
        %v575 = vld [vmem:[#allocation5 + $0x710] sm:$0xff]
        %v576 = vld [vmem:[#allocation5 + $0x718] sm:$0xff]
        %v577 = vld [vmem:[#allocation5 + $0x720] sm:$0xff]
        %v578 = vld [vmem:[#allocation5 + $0x728] sm:$0xff]
        %v579 = vld [vmem:[#allocation5 + $0x730] sm:$0xff]
        %v580 = vld [vmem:[#allocation5 + $0x738] sm:$0xff]
        %v581 = vld [vmem:[#allocation5 + $0x740] sm:$0xff]
        %v582 = vld [vmem:[#allocation5 + $0x748] sm:$0xff]
        %v583 = vld [vmem:[#allocation5 + $0x750] sm:$0xff]
        %v584 = vld [vmem:[#allocation5 + $0x758] sm:$0xff]
        %v585 = vld [vmem:[#allocation5 + $0x760] sm:$0xff]
        %v586 = vld [vmem:[#allocation5 + $0x768] sm:$0xff]
        %v587 = vld [vmem:[#allocation5 + $0x770] sm:$0xff]
        %v588 = vld [vmem:[#allocation5 + $0x778] sm:$0xff]
        %v589 = vld [vmem:[#allocation5 + $0x780] sm:$0xff]
        %v590 = vld [vmem:[#allocation5 + $0x788] sm:$0xff]
        %v591 = vld [vmem:[#allocation5 + $0x790] sm:$0xff]
        %v592 = vld [vmem:[#allocation5 + $0x798] sm:$0xff]
        %v593 = vld [vmem:[#allocation5 + $0x7a0] sm:$0xff]
        %v594 = vld [vmem:[#allocation5 + $0x7a8] sm:$0xff]
        %v595 = vld [vmem:[#allocation5 + $0x7b0] sm:$0xff]
        %v596 = vld [vmem:[#allocation5 + $0x7b8] sm:$0xff]
        %v597 = vld [vmem:[#allocation5 + $0x7c0] sm:$0xff]
        %v598 = vld [vmem:[#allocation5 + $0x7c8] sm:$0xff]
        %v599 = vld [vmem:[#allocation5 + $0x7d0] sm:$0xff]
        %v600 = vld [vmem:[#allocation5 + $0x7d8] sm:$0xff]
        %v601 = vld [vmem:[#allocation5 + $0x7e0] sm:$0xff]
        %v602 = vld [vmem:[#allocation5 + $0x7e8] sm:$0xff]
        %v603 = vld [vmem:[#allocation5 + $0x7f0] sm:$0xff]
        %v604 = vld [vmem:[#allocation5 + $0x7f8] sm:$0xff]
        %v605 = vld [vmem:[#allocation5 + $0x800] sm:$0xff]
        %v606 = vld [vmem:[#allocation5 + $0x808] sm:$0xff]
        %v607 = vld [vmem:[#allocation5 + $0x810] sm:$0xff]
        %v608 = vld [vmem:[#allocation5 + $0x818] sm:$0xff]
        %v609 = vld [vmem:[#allocation5 + $0x820] sm:$0xff]
        %v610 = vld [vmem:[#allocation5 + $0x828] sm:$0xff]
        %v611 = vld [vmem:[#allocation5 + $0x830] sm:$0xff]
        %v612 = vld [vmem:[#allocation5 + $0x838] sm:$0xff]
        %v613 = vld [vmem:[#allocation5 + $0x840] sm:$0xff]
        %v614 = vld [vmem:[#allocation5 + $0x848] sm:$0xff]
        %v615 = vld [vmem:[#allocation5 + $0x850] sm:$0xff]
        %v616 = vld [vmem:[#allocation5 + $0x858] sm:$0xff]
        %v617 = vld [vmem:[#allocation5 + $0x860] sm:$0xff]
        %v618 = vld [vmem:[#allocation5 + $0x868] sm:$0xff]
        %v619 = vld [vmem:[#allocation5 + $0x870] sm:$0xff]
        %v620 = vld [vmem:[#allocation5 + $0x878] sm:$0xff]
        %v621 = vld [vmem:[#allocation5 + $0x880] sm:$0xff]
        %v622 = vld [vmem:[#allocation5 + $0x888] sm:$0xff]
        %v623 = vld [vmem:[#allocation5 + $0x890] sm:$0xff]
        %v624 = vld [vmem:[#allocation5 + $0x898] sm:$0xff]
        %v625 = vld [vmem:[#allocation5 + $0x8a0] sm:$0xff]
        %v626 = vld [vmem:[#allocation5 + $0x8a8] sm:$0xff]
        %v627 = vld [vmem:[#allocation5 + $0x8b0] sm:$0xff]
        %v628 = vld [vmem:[#allocation5 + $0x8b8] sm:$0xff]
        %v629 = vld [vmem:[#allocation5 + $0x8c0] sm:$0xff]
        %v630 = vld [vmem:[#allocation5 + $0x8c8] sm:$0xff]
        %v631 = vld [vmem:[#allocation5 + $0x8d0] sm:$0xff]
        %v632 = vld [vmem:[#allocation5 + $0x8d8] sm:$0xff]
        %v633 = vld [vmem:[#allocation5 + $0x8e0] sm:$0xff]
        %v634 = vld [vmem:[#allocation5 + $0x8e8] sm:$0xff]
        %v635 = vld [vmem:[#allocation5 + $0x8f0] sm:$0xff]
        %v636 = vld [vmem:[#allocation5 + $0x8f8] sm:$0xff]
        %v637 = vld [vmem:[#allocation5 + $0x900] sm:$0xff]
        %v638 = vld [vmem:[#allocation5 + $0x908] sm:$0xff]
        %v639 = vld [vmem:[#allocation5 + $0x910] sm:$0xff]
        %v640 = vld [vmem:[#allocation5 + $0x918] sm:$0xff]
        %v641 = vld [vmem:[#allocation5 + $0x920] sm:$0xff]
        %v642 = vld [vmem:[#allocation5 + $0x928] sm:$0xff]
        %v643 = vld [vmem:[#allocation5 + $0x930] sm:$0xff]
        %v644 = vld [vmem:[#allocation5 + $0x938] sm:$0xff]
        %v645 = vld [vmem:[#allocation5 + $0x940] sm:$0xff]
        %v646 = vld [vmem:[#allocation5 + $0x948] sm:$0xff]
        %v647 = vld [vmem:[#allocation5 + $0x950] sm:$0xff]
        %v648 = vld [vmem:[#allocation5 + $0x958] sm:$0xff]
        %v649 = vld [vmem:[#allocation5 + $0x960] sm:$0xff]
        %v650 = vld [vmem:[#allocation5 + $0x968] sm:$0xff]
        %v651 = vld [vmem:[#allocation5 + $0x970] sm:$0xff]
        %v652 = vld [vmem:[#allocation5 + $0x978] sm:$0xff]
        %v653 = vld [vmem:[#allocation5 + $0x980] sm:$0xff]
        %v654 = vld [vmem:[#allocation5 + $0x988] sm:$0xff]
        %v655 = vld [vmem:[#allocation5 + $0x990] sm:$0xff]
        %v656 = vld [vmem:[#allocation5 + $0x998] sm:$0xff]
        %v657 = vld [vmem:[#allocation5 + $0x9a0] sm:$0xff]
        %v658 = vld [vmem:[#allocation5 + $0x9a8] sm:$0xff]
        %v659 = vld [vmem:[#allocation5 + $0x9b0] sm:$0xff]
        %v660 = vld [vmem:[#allocation5 + $0x9b8] sm:$0xff]
        %v661 = vld [vmem:[#allocation5 + $0x9c0] sm:$0xff]
        %v662 = vld [vmem:[#allocation5 + $0x9c8] sm:$0xff]
        %v663 = vld [vmem:[#allocation5 + $0x9d0] sm:$0xff]
        %v664 = vld [vmem:[#allocation5 + $0x9d8] sm:$0xff]
        %v665 = vld [vmem:[#allocation5 + $0x9e0] sm:$0xff]
        %v666 = vld [vmem:[#allocation5 + $0x9e8] sm:$0xff]
        %v667 = vld [vmem:[#allocation5 + $0x9f0] sm:$0xff]
        %v668 = vld [vmem:[#allocation5 + $0x9f8] sm:$0xff]
        %v669 = vld [vmem:[#allocation7] sm:$0xff]
        %v671 = vlaneseq
        %v672 = vshrl.u32 %v671, 7
        %v673 = vsub.s32 0, %v672
        %v674 = vrot.slane %v669, %v673
        %v675 = vlaneseq
        %v676 = vshrl.u32 %v675, 7
        %v677 = vsub.s32 1, %v676
        %v678 = vrot.slane %v669, %v677
        %v679 = vlaneseq
        %v680 = vshrl.u32 %v679, 7
        %v681 = vsub.s32 2, %v680
        %v682 = vrot.slane %v669, %v681
        %v683 = vlaneseq
        %v684 = vshrl.u32 %v683, 7
        %v685 = vsub.s32 3, %v684
        %v686 = vrot.slane %v669, %v685
        %v687 = vlaneseq
        %v688 = vshrl.u32 %v687, 7
        %v689 = vsub.s32 4, %v688
        %v690 = vrot.slane %v669, %v689
        %v691 = vlaneseq
        %v692 = vshrl.u32 %v691, 7
        %v693 = vsub.s32 5, %v692
        %v694 = vrot.slane %v669, %v693
        %v695 = vlaneseq
        %v696 = vshrl.u32 %v695, 7
        %v697 = vsub.s32 6, %v696
        %v698 = vrot.slane %v669, %v697
        %v699 = vlaneseq
        %v700 = vshrl.u32 %v699, 7
        %v701 = vsub.s32 7, %v700
        %v702 = vrot.slane %v669, %v701
        %v759 = vunpack.c.l.b16 %v301
        %v760 = vunpack.c.h.b16 %v301
        %v761 = vunpack.c.l.b16 %v302
        %v762 = vunpack.c.h.b16 %v302
        %v763 = vunpack.c.l.b16 %v303
        %v764 = vunpack.c.l.b16 %v304
        %v765 = vunpack.c.h.b16 %v304
        %v766 = vunpack.c.l.b16 %v305
        %v767 = vunpack.c.h.b16 %v305
        %v768 = vunpack.c.l.b16 %v306
        %v769 = vunpack.c.l.b16 %v307
        %v770 = vunpack.c.h.b16 %v307
        %v771 = vunpack.c.l.b16 %v308
        %v772 = vunpack.c.h.b16 %v308
        %v773 = vunpack.c.l.b16 %v309
        %v774 = vunpack.c.l.b16 %v310
        %v775 = vunpack.c.h.b16 %v310
        %v776 = vunpack.c.l.b16 %v311
        %v777 = vunpack.c.h.b16 %v311
        %v778 = vunpack.c.l.b16 %v312
        %v779 = vunpack.c.l.b16 %v313
        %v780 = vunpack.c.h.b16 %v313
        %v781 = vunpack.c.l.b16 %v314
        %v782 = vunpack.c.h.b16 %v314
        %v783 = vunpack.c.l.b16 %v315
        %v784 = vunpack.c.l.b16 %v316
        %v785 = vunpack.c.h.b16 %v316
        %v786 = vunpack.c.l.b16 %v317
        %v787 = vunpack.c.h.b16 %v317
        %v788 = vunpack.c.l.b16 %v318
        %v789 = vunpack.c.l.b16 %v319
        %v790 = vunpack.c.h.b16 %v319
        %v791 = vunpack.c.l.b16 %v320
        %v792 = vunpack.c.h.b16 %v320
        %v793 = vunpack.c.l.b16 %v321
        %v794 = vunpack.c.l.b16 %v322
        %v795 = vunpack.c.h.b16 %v322
        %v796 = vunpack.c.l.b16 %v323
        %v797 = vunpack.c.h.b16 %v323
        %v798 = vunpack.c.l.b16 %v324
        %v799 = vunpack.c.l.b16 %v325
        %v800 = vunpack.c.h.b16 %v325
        %v801 = vunpack.c.l.b16 %v326
        %v802 = vunpack.c.h.b16 %v326
        %v803 = vunpack.c.l.b16 %v327
        %v804 = vunpack.c.l.b16 %v328
        %v805 = vunpack.c.h.b16 %v328
        %v806 = vunpack.c.l.b16 %v329
        %v807 = vunpack.c.h.b16 %v329
        %v808 = vunpack.c.l.b16 %v330
        %v809 = vunpack.c.l.b16 %v331
        %v810 = vunpack.c.h.b16 %v331
        %v811 = vunpack.c.l.b16 %v332
        %v812 = vunpack.c.h.b16 %v332
        %v813 = vunpack.c.l.b16 %v333
        %v814 = vunpack.c.l.b16 %v334
        %v815 = vunpack.c.h.b16 %v334
        %v816 = vunpack.c.l.b16 %v335
        %v817 = vunpack.c.h.b16 %v335
        %v818 = vunpack.c.l.b16 %v336
        %v819 = vunpack.c.l.b16 %v337
        %v820 = vunpack.c.h.b16 %v337
        %v821 = vunpack.c.l.b16 %v338
        %v822 = vunpack.c.h.b16 %v338
        %v823 = vunpack.c.l.b16 %v339
        %v824 = vunpack.c.l.b16 %v340
        %v825 = vunpack.c.h.b16 %v340
        %v826 = vunpack.c.l.b16 %v341
        %v827 = vunpack.c.h.b16 %v341
        %v828 = vunpack.c.l.b16 %v342
        %v829 = vunpack.c.l.b16 %v343
        %v830 = vunpack.c.h.b16 %v343
        %v831 = vunpack.c.l.b16 %v344
        %v832 = vunpack.c.h.b16 %v344
        %v833 = vunpack.c.l.b16 %v345
        %v834 = vunpack.c.l.b16 %v346
        %v835 = vunpack.c.h.b16 %v346
        %v836 = vunpack.c.l.b16 %v347
        %v837 = vunpack.c.h.b16 %v347
        %v838 = vunpack.c.l.b16 %v348
        %v839 = vpack.c.b16 %v764, %v759
        %v840 = vpack.c.b16 %v765, %v760
        %v841 = vpack.c.b16 %v766, %v761
        %v842 = vpack.c.b16 %v767, %v762
        %v843 = vpack.c.b16 %v768, %v763
        %v844 = vpack.c.b16 %v774, %v769
        %v845 = vpack.c.b16 %v775, %v770
        %v846 = vpack.c.b16 %v776, %v771
        %v847 = vpack.c.b16 %v777, %v772
        %v848 = vpack.c.b16 %v778, %v773
        %v849 = vpack.c.b16 %v784, %v779
        %v850 = vpack.c.b16 %v785, %v780
        %v851 = vpack.c.b16 %v786, %v781
        %v852 = vpack.c.b16 %v787, %v782
        %v853 = vpack.c.b16 %v788, %v783
        %v854 = vpack.c.b16 %v794, %v789
        %v855 = vpack.c.b16 %v795, %v790
        %v856 = vpack.c.b16 %v796, %v791
        %v857 = vpack.c.b16 %v797, %v792
        %v858 = vpack.c.b16 %v798, %v793
        %v859 = vpack.c.b16 %v804, %v799
        %v860 = vpack.c.b16 %v805, %v800
        %v861 = vpack.c.b16 %v806, %v801
        %v862 = vpack.c.b16 %v807, %v802
        %v863 = vpack.c.b16 %v808, %v803
        %v864 = vpack.c.b16 %v814, %v809
        %v865 = vpack.c.b16 %v815, %v810
        %v866 = vpack.c.b16 %v816, %v811
        %v867 = vpack.c.b16 %v817, %v812
        %v868 = vpack.c.b16 %v818, %v813
        %v869 = vpack.c.b16 %v824, %v819
        %v870 = vpack.c.b16 %v825, %v820
        %v871 = vpack.c.b16 %v826, %v821
        %v872 = vpack.c.b16 %v827, %v822
        %v873 = vpack.c.b16 %v828, %v823
        %v874 = vpack.c.b16 %v834, %v829
        %v875 = vpack.c.b16 %v835, %v830
        %v876 = vpack.c.b16 %v836, %v831
        %v877 = vpack.c.b16 %v837, %v832
        %v878 = vpack.c.b16 %v838, %v833
        %v1239 = vunpack.c.l.b16 %v349
        %v1240 = vunpack.c.h.b16 %v349
        %v1241 = vunpack.c.l.b16 %v350
        %v1242 = vunpack.c.h.b16 %v350
        %v1243 = vunpack.c.l.b16 %v351
        %v1244 = vunpack.c.h.b16 %v351
        %v1245 = vunpack.c.l.b16 %v352
        %v1246 = vunpack.c.h.b16 %v352
        %v1247 = vunpack.c.l.b16 %v353
        %v1248 = vunpack.c.h.b16 %v353
        %v1249 = vunpack.c.l.b16 %v354
        %v1250 = vunpack.c.h.b16 %v354
        %v1251 = vunpack.c.l.b16 %v355
        %v1252 = vunpack.c.h.b16 %v355
        %v1253 = vunpack.c.l.b16 %v356
        %v1254 = vunpack.c.h.b16 %v356
        %v1255 = vunpack.c.l.b16 %v357
        %v1256 = vunpack.c.h.b16 %v357
        %v1257 = vunpack.c.l.b16 %v358
        %v1258 = vunpack.c.h.b16 %v358
        %v1259 = vunpack.c.l.b16 %v359
        %v1260 = vunpack.c.h.b16 %v359
        %v1261 = vunpack.c.l.b16 %v360
        %v1262 = vunpack.c.h.b16 %v360
        %v1263 = vunpack.c.l.b16 %v361
        %v1264 = vunpack.c.h.b16 %v361
        %v1265 = vunpack.c.l.b16 %v362
        %v1266 = vunpack.c.h.b16 %v362
        %v1267 = vunpack.c.l.b16 %v363
        %v1268 = vunpack.c.h.b16 %v363
        %v1269 = vunpack.c.l.b16 %v364
        %v1270 = vunpack.c.h.b16 %v364
        %v1271 = vunpack.c.l.b16 %v365
        %v1272 = vunpack.c.h.b16 %v365
        %v1273 = vunpack.c.l.b16 %v366
        %v1274 = vunpack.c.h.b16 %v366
        %v1275 = vunpack.c.l.b16 %v367
        %v1276 = vunpack.c.h.b16 %v367
        %v1277 = vunpack.c.l.b16 %v368
        %v1278 = vunpack.c.h.b16 %v368
        %v1279 = vunpack.c.l.b16 %v369
        %v1280 = vunpack.c.h.b16 %v369
        %v1281 = vunpack.c.l.b16 %v370
        %v1282 = vunpack.c.h.b16 %v370
        %v1283 = vunpack.c.l.b16 %v371
        %v1284 = vunpack.c.h.b16 %v371
        %v1285 = vunpack.c.l.b16 %v372
        %v1286 = vunpack.c.h.b16 %v372
        %v1287 = vunpack.c.l.b16 %v373
        %v1288 = vunpack.c.h.b16 %v373
        %v1289 = vunpack.c.l.b16 %v374
        %v1290 = vunpack.c.h.b16 %v374
        %v1291 = vunpack.c.l.b16 %v375
        %v1292 = vunpack.c.h.b16 %v375
        %v1293 = vunpack.c.l.b16 %v376
        %v1294 = vunpack.c.h.b16 %v376
        %v1295 = vunpack.c.l.b16 %v377
        %v1296 = vunpack.c.h.b16 %v377
        %v1297 = vunpack.c.l.b16 %v378
        %v1298 = vunpack.c.h.b16 %v378
        %v1299 = vunpack.c.l.b16 %v379
        %v1300 = vunpack.c.h.b16 %v379
        %v1301 = vunpack.c.l.b16 %v380
        %v1302 = vunpack.c.h.b16 %v380
        %v1303 = vunpack.c.l.b16 %v381
        %v1304 = vunpack.c.h.b16 %v381
        %v1305 = vunpack.c.l.b16 %v382
        %v1306 = vunpack.c.h.b16 %v382
        %v1307 = vunpack.c.l.b16 %v383
        %v1308 = vunpack.c.h.b16 %v383
        %v1309 = vunpack.c.l.b16 %v384
        %v1310 = vunpack.c.h.b16 %v384
        %v1311 = vunpack.c.l.b16 %v385
        %v1312 = vunpack.c.h.b16 %v385
        %v1313 = vunpack.c.l.b16 %v386
        %v1314 = vunpack.c.h.b16 %v386
        %v1315 = vunpack.c.l.b16 %v387
        %v1316 = vunpack.c.h.b16 %v387
        %v1317 = vunpack.c.l.b16 %v388
        %v1318 = vunpack.c.h.b16 %v388
        %v1319 = vunpack.c.l.b16 %v389
        %v1320 = vunpack.c.h.b16 %v389
        %v1321 = vunpack.c.l.b16 %v390
        %v1322 = vunpack.c.h.b16 %v390
        %v1323 = vunpack.c.l.b16 %v391
        %v1324 = vunpack.c.h.b16 %v391
        %v1325 = vunpack.c.l.b16 %v392
        %v1326 = vunpack.c.h.b16 %v392
        %v1327 = vunpack.c.l.b16 %v393
        %v1328 = vunpack.c.h.b16 %v393
        %v1329 = vunpack.c.l.b16 %v394
        %v1330 = vunpack.c.h.b16 %v394
        %v1331 = vunpack.c.l.b16 %v395
        %v1332 = vunpack.c.h.b16 %v395
        %v1333 = vunpack.c.l.b16 %v396
        %v1334 = vunpack.c.h.b16 %v396
        %v1335 = vunpack.c.l.b16 %v397
        %v1336 = vunpack.c.h.b16 %v397
        %v1337 = vunpack.c.l.b16 %v398
        %v1338 = vunpack.c.h.b16 %v398
        %v1339 = vunpack.c.l.b16 %v399
        %v1340 = vunpack.c.h.b16 %v399
        %v1341 = vunpack.c.l.b16 %v400
        %v1342 = vunpack.c.h.b16 %v400
        %v1343 = vunpack.c.l.b16 %v401
        %v1344 = vunpack.c.h.b16 %v401
        %v1345 = vunpack.c.l.b16 %v402
        %v1346 = vunpack.c.h.b16 %v402
        %v1347 = vunpack.c.l.b16 %v403
        %v1348 = vunpack.c.h.b16 %v403
        %v1349 = vunpack.c.l.b16 %v404
        %v1350 = vunpack.c.h.b16 %v404
        %v1351 = vunpack.c.l.b16 %v405
        %v1352 = vunpack.c.h.b16 %v405
        %v1353 = vunpack.c.l.b16 %v406
        %v1354 = vunpack.c.h.b16 %v406
        %v1355 = vunpack.c.l.b16 %v407
        %v1356 = vunpack.c.h.b16 %v407
        %v1357 = vunpack.c.l.b16 %v408
        %v1358 = vunpack.c.h.b16 %v408
        %v1359 = vunpack.c.l.b16 %v409
        %v1360 = vunpack.c.h.b16 %v409
        %v1361 = vunpack.c.l.b16 %v410
        %v1362 = vunpack.c.h.b16 %v410
        %v1363 = vunpack.c.l.b16 %v411
        %v1364 = vunpack.c.h.b16 %v411
        %v1365 = vunpack.c.l.b16 %v412
        %v1366 = vunpack.c.h.b16 %v412
        %v1367 = vunpack.c.l.b16 %v413
        %v1368 = vunpack.c.h.b16 %v413
        %v1369 = vunpack.c.l.b16 %v414
        %v1370 = vunpack.c.h.b16 %v414
        %v1371 = vunpack.c.l.b16 %v415
        %v1372 = vunpack.c.h.b16 %v415
        %v1373 = vunpack.c.l.b16 %v416
        %v1374 = vunpack.c.h.b16 %v416
        %v1375 = vunpack.c.l.b16 %v417
        %v1376 = vunpack.c.h.b16 %v417
        %v1377 = vunpack.c.l.b16 %v418
        %v1378 = vunpack.c.h.b16 %v418
        %v1379 = vunpack.c.l.b16 %v419
        %v1380 = vunpack.c.h.b16 %v419
        %v1381 = vunpack.c.l.b16 %v420
        %v1382 = vunpack.c.h.b16 %v420
        %v1383 = vunpack.c.l.b16 %v421
        %v1384 = vunpack.c.h.b16 %v421
        %v1385 = vunpack.c.l.b16 %v422
        %v1386 = vunpack.c.h.b16 %v422
        %v1387 = vunpack.c.l.b16 %v423
        %v1388 = vunpack.c.h.b16 %v423
        %v1389 = vunpack.c.l.b16 %v424
        %v1390 = vunpack.c.h.b16 %v424
        %v1391 = vunpack.c.l.b16 %v425
        %v1392 = vunpack.c.h.b16 %v425
        %v1393 = vunpack.c.l.b16 %v426
        %v1394 = vunpack.c.h.b16 %v426
        %v1395 = vunpack.c.l.b16 %v427
        %v1396 = vunpack.c.h.b16 %v427
        %v1397 = vunpack.c.l.b16 %v428
        %v1398 = vunpack.c.h.b16 %v428
        %v1399 = vunpack.c.l.b16 %v429
        %v1400 = vunpack.c.h.b16 %v429
        %v1401 = vunpack.c.l.b16 %v430
        %v1402 = vunpack.c.h.b16 %v430
        %v1403 = vunpack.c.l.b16 %v431
        %v1404 = vunpack.c.h.b16 %v431
        %v1405 = vunpack.c.l.b16 %v432
        %v1406 = vunpack.c.h.b16 %v432
        %v1407 = vunpack.c.l.b16 %v433
        %v1408 = vunpack.c.h.b16 %v433
        %v1409 = vunpack.c.l.b16 %v434
        %v1410 = vunpack.c.h.b16 %v434
        %v1411 = vunpack.c.l.b16 %v435
        %v1412 = vunpack.c.h.b16 %v435
        %v1413 = vunpack.c.l.b16 %v436
        %v1414 = vunpack.c.h.b16 %v436
        %v1415 = vunpack.c.l.b16 %v437
        %v1416 = vunpack.c.h.b16 %v437
        %v1417 = vunpack.c.l.b16 %v438
        %v1418 = vunpack.c.h.b16 %v438
        %v1419 = vunpack.c.l.b16 %v439
        %v1420 = vunpack.c.h.b16 %v439
        %v1421 = vunpack.c.l.b16 %v440
        %v1422 = vunpack.c.h.b16 %v440
        %v1423 = vunpack.c.l.b16 %v441
        %v1424 = vunpack.c.h.b16 %v441
        %v1425 = vunpack.c.l.b16 %v442
        %v1426 = vunpack.c.h.b16 %v442
        %v1427 = vunpack.c.l.b16 %v443
        %v1428 = vunpack.c.h.b16 %v443
        %v1429 = vunpack.c.l.b16 %v444
        %v1430 = vunpack.c.h.b16 %v444
        %v1431 = vunpack.c.l.b16 %v445
        %v1432 = vunpack.c.h.b16 %v445
        %v1433 = vunpack.c.l.b16 %v446
        %v1434 = vunpack.c.h.b16 %v446
        %v1435 = vunpack.c.l.b16 %v447
        %v1436 = vunpack.c.h.b16 %v447
        %v1437 = vunpack.c.l.b16 %v448
        %v1438 = vunpack.c.h.b16 %v448
        %v1439 = vunpack.c.l.b16 %v449
        %v1440 = vunpack.c.h.b16 %v449
        %v1441 = vunpack.c.l.b16 %v450
        %v1442 = vunpack.c.h.b16 %v450
        %v1443 = vunpack.c.l.b16 %v451
        %v1444 = vunpack.c.h.b16 %v451
        %v1445 = vunpack.c.l.b16 %v452
        %v1446 = vunpack.c.h.b16 %v452
        %v1447 = vunpack.c.l.b16 %v453
        %v1448 = vunpack.c.h.b16 %v453
        %v1449 = vunpack.c.l.b16 %v454
        %v1450 = vunpack.c.h.b16 %v454
        %v1451 = vunpack.c.l.b16 %v455
        %v1452 = vunpack.c.h.b16 %v455
        %v1453 = vunpack.c.l.b16 %v456
        %v1454 = vunpack.c.h.b16 %v456
        %v1455 = vunpack.c.l.b16 %v457
        %v1456 = vunpack.c.h.b16 %v457
        %v1457 = vunpack.c.l.b16 %v458
        %v1458 = vunpack.c.h.b16 %v458
        %v1459 = vunpack.c.l.b16 %v459
        %v1460 = vunpack.c.h.b16 %v459
        %v1461 = vunpack.c.l.b16 %v460
        %v1462 = vunpack.c.h.b16 %v460
        %v1463 = vunpack.c.l.b16 %v461
        %v1464 = vunpack.c.h.b16 %v461
        %v1465 = vunpack.c.l.b16 %v462
        %v1466 = vunpack.c.h.b16 %v462
        %v1467 = vunpack.c.l.b16 %v463
        %v1468 = vunpack.c.h.b16 %v463
        %v1469 = vunpack.c.l.b16 %v464
        %v1470 = vunpack.c.h.b16 %v464
        %v1471 = vunpack.c.l.b16 %v465
        %v1472 = vunpack.c.h.b16 %v465
        %v1473 = vunpack.c.l.b16 %v466
        %v1474 = vunpack.c.h.b16 %v466
        %v1475 = vunpack.c.l.b16 %v467
        %v1476 = vunpack.c.h.b16 %v467
        %v1477 = vunpack.c.l.b16 %v468
        %v1478 = vunpack.c.h.b16 %v468
        %v1479 = vunpack.c.l.b16 %v469
        %v1480 = vunpack.c.h.b16 %v469
        %v1481 = vunpack.c.l.b16 %v470
        %v1482 = vunpack.c.h.b16 %v470
        %v1483 = vunpack.c.l.b16 %v471
        %v1484 = vunpack.c.h.b16 %v471
        %v1485 = vunpack.c.l.b16 %v472
        %v1486 = vunpack.c.h.b16 %v472
        %v1487 = vunpack.c.l.b16 %v473
        %v1488 = vunpack.c.h.b16 %v473
        %v1489 = vunpack.c.l.b16 %v474
        %v1490 = vunpack.c.h.b16 %v474
        %v1491 = vunpack.c.l.b16 %v475
        %v1492 = vunpack.c.h.b16 %v475
        %v1493 = vunpack.c.l.b16 %v476
        %v1494 = vunpack.c.h.b16 %v476
        %v1495 = vunpack.c.l.b16 %v477
        %v1496 = vunpack.c.h.b16 %v477
        %v1497 = vunpack.c.l.b16 %v478
        %v1498 = vunpack.c.h.b16 %v478
        %v1499 = vunpack.c.l.b16 %v479
        %v1500 = vunpack.c.h.b16 %v479
        %v1501 = vunpack.c.l.b16 %v480
        %v1502 = vunpack.c.h.b16 %v480
        %v1503 = vunpack.c.l.b16 %v481
        %v1504 = vunpack.c.h.b16 %v481
        %v1505 = vunpack.c.l.b16 %v482
        %v1506 = vunpack.c.h.b16 %v482
        %v1507 = vunpack.c.l.b16 %v483
        %v1508 = vunpack.c.h.b16 %v483
        %v1509 = vunpack.c.l.b16 %v484
        %v1510 = vunpack.c.h.b16 %v484
        %v1511 = vunpack.c.l.b16 %v485
        %v1512 = vunpack.c.h.b16 %v485
        %v1513 = vunpack.c.l.b16 %v486
        %v1514 = vunpack.c.h.b16 %v486
        %v1515 = vunpack.c.l.b16 %v487
        %v1516 = vunpack.c.h.b16 %v487
        %v1517 = vunpack.c.l.b16 %v488
        %v1518 = vunpack.c.h.b16 %v488
        %v1519 = vunpack.c.l.b16 %v489
        %v1520 = vunpack.c.h.b16 %v489
        %v1521 = vunpack.c.l.b16 %v490
        %v1522 = vunpack.c.h.b16 %v490
        %v1523 = vunpack.c.l.b16 %v491
        %v1524 = vunpack.c.h.b16 %v491
        %v1525 = vunpack.c.l.b16 %v492
        %v1526 = vunpack.c.h.b16 %v492
        %v1527 = vunpack.c.l.b16 %v493
        %v1528 = vunpack.c.h.b16 %v493
        %v1529 = vunpack.c.l.b16 %v494
        %v1530 = vunpack.c.h.b16 %v494
        %v1531 = vunpack.c.l.b16 %v495
        %v1532 = vunpack.c.h.b16 %v495
        %v1533 = vunpack.c.l.b16 %v496
        %v1534 = vunpack.c.h.b16 %v496
        %v1535 = vunpack.c.l.b16 %v497
        %v1536 = vunpack.c.h.b16 %v497
        %v1537 = vunpack.c.l.b16 %v498
        %v1538 = vunpack.c.h.b16 %v498
        %v1539 = vunpack.c.l.b16 %v499
        %v1540 = vunpack.c.h.b16 %v499
        %v1541 = vunpack.c.l.b16 %v500
        %v1542 = vunpack.c.h.b16 %v500
        %v1543 = vunpack.c.l.b16 %v501
        %v1544 = vunpack.c.h.b16 %v501
        %v1545 = vunpack.c.l.b16 %v502
        %v1546 = vunpack.c.h.b16 %v502
        %v1547 = vunpack.c.l.b16 %v503
        %v1548 = vunpack.c.h.b16 %v503
        %v1549 = vunpack.c.l.b16 %v504
        %v1550 = vunpack.c.h.b16 %v504
        %v1551 = vunpack.c.l.b16 %v505
        %v1552 = vunpack.c.h.b16 %v505
        %v1553 = vunpack.c.l.b16 %v506
        %v1554 = vunpack.c.h.b16 %v506
        %v1555 = vunpack.c.l.b16 %v507
        %v1556 = vunpack.c.h.b16 %v507
        %v1557 = vunpack.c.l.b16 %v508
        %v1558 = vunpack.c.h.b16 %v508
        %v1559 = vunpack.c.l.b16 %v509
        %v1560 = vunpack.c.h.b16 %v509
        %v1561 = vunpack.c.l.b16 %v510
        %v1562 = vunpack.c.h.b16 %v510
        %v1563 = vunpack.c.l.b16 %v511
        %v1564 = vunpack.c.h.b16 %v511
        %v1565 = vunpack.c.l.b16 %v512
        %v1566 = vunpack.c.h.b16 %v512
        %v1567 = vunpack.c.l.b16 %v513
        %v1568 = vunpack.c.h.b16 %v513
        %v1569 = vunpack.c.l.b16 %v514
        %v1570 = vunpack.c.h.b16 %v514
        %v1571 = vunpack.c.l.b16 %v515
        %v1572 = vunpack.c.h.b16 %v515
        %v1573 = vunpack.c.l.b16 %v516
        %v1574 = vunpack.c.h.b16 %v516
        %v1575 = vunpack.c.l.b16 %v517
        %v1576 = vunpack.c.h.b16 %v517
        %v1577 = vunpack.c.l.b16 %v518
        %v1578 = vunpack.c.h.b16 %v518
        %v1579 = vunpack.c.l.b16 %v519
        %v1580 = vunpack.c.h.b16 %v519
        %v1581 = vunpack.c.l.b16 %v520
        %v1582 = vunpack.c.h.b16 %v520
        %v1583 = vunpack.c.l.b16 %v521
        %v1584 = vunpack.c.h.b16 %v521
        %v1585 = vunpack.c.l.b16 %v522
        %v1586 = vunpack.c.h.b16 %v522
        %v1587 = vunpack.c.l.b16 %v523
        %v1588 = vunpack.c.h.b16 %v523
        %v1589 = vunpack.c.l.b16 %v524
        %v1590 = vunpack.c.h.b16 %v524
        %v1591 = vunpack.c.l.b16 %v525
        %v1592 = vunpack.c.h.b16 %v525
        %v1593 = vunpack.c.l.b16 %v526
        %v1594 = vunpack.c.h.b16 %v526
        %v1595 = vunpack.c.l.b16 %v527
        %v1596 = vunpack.c.h.b16 %v527
        %v1597 = vunpack.c.l.b16 %v528
        %v1598 = vunpack.c.h.b16 %v528
        %v1599 = vunpack.c.l.b16 %v529
        %v1600 = vunpack.c.h.b16 %v529
        %v1601 = vunpack.c.l.b16 %v530
        %v1602 = vunpack.c.h.b16 %v530
        %v1603 = vunpack.c.l.b16 %v531
        %v1604 = vunpack.c.h.b16 %v531
        %v1605 = vunpack.c.l.b16 %v532
        %v1606 = vunpack.c.h.b16 %v532
        %v1607 = vunpack.c.l.b16 %v533
        %v1608 = vunpack.c.h.b16 %v533
        %v1609 = vunpack.c.l.b16 %v534
        %v1610 = vunpack.c.h.b16 %v534
        %v1611 = vunpack.c.l.b16 %v535
        %v1612 = vunpack.c.h.b16 %v535
        %v1613 = vunpack.c.l.b16 %v536
        %v1614 = vunpack.c.h.b16 %v536
        %v1615 = vunpack.c.l.b16 %v537
        %v1616 = vunpack.c.h.b16 %v537
        %v1617 = vunpack.c.l.b16 %v538
        %v1618 = vunpack.c.h.b16 %v538
        %v1619 = vunpack.c.l.b16 %v539
        %v1620 = vunpack.c.h.b16 %v539
        %v1621 = vunpack.c.l.b16 %v540
        %v1622 = vunpack.c.h.b16 %v540
        %v1623 = vunpack.c.l.b16 %v541
        %v1624 = vunpack.c.h.b16 %v541
        %v1625 = vunpack.c.l.b16 %v542
        %v1626 = vunpack.c.h.b16 %v542
        %v1627 = vunpack.c.l.b16 %v543
        %v1628 = vunpack.c.h.b16 %v543
        %v1629 = vunpack.c.l.b16 %v544
        %v1630 = vunpack.c.h.b16 %v544
        %v1631 = vunpack.c.l.b16 %v545
        %v1632 = vunpack.c.h.b16 %v545
        %v1633 = vunpack.c.l.b16 %v546
        %v1634 = vunpack.c.h.b16 %v546
        %v1635 = vunpack.c.l.b16 %v547
        %v1636 = vunpack.c.h.b16 %v547
        %v1637 = vunpack.c.l.b16 %v548
        %v1638 = vunpack.c.h.b16 %v548
        %v1639 = vunpack.c.l.b16 %v549
        %v1640 = vunpack.c.h.b16 %v549
        %v1641 = vunpack.c.l.b16 %v550
        %v1642 = vunpack.c.h.b16 %v550
        %v1643 = vunpack.c.l.b16 %v551
        %v1644 = vunpack.c.h.b16 %v551
        %v1645 = vunpack.c.l.b16 %v552
        %v1646 = vunpack.c.h.b16 %v552
        %v1647 = vunpack.c.l.b16 %v553
        %v1648 = vunpack.c.h.b16 %v553
        %v1649 = vunpack.c.l.b16 %v554
        %v1650 = vunpack.c.h.b16 %v554
        %v1651 = vunpack.c.l.b16 %v555
        %v1652 = vunpack.c.h.b16 %v555
        %v1653 = vunpack.c.l.b16 %v556
        %v1654 = vunpack.c.h.b16 %v556
        %v1655 = vunpack.c.l.b16 %v557
        %v1656 = vunpack.c.h.b16 %v557
        %v1657 = vunpack.c.l.b16 %v558
        %v1658 = vunpack.c.h.b16 %v558
        %v1659 = vunpack.c.l.b16 %v559
        %v1660 = vunpack.c.h.b16 %v559
        %v1661 = vunpack.c.l.b16 %v560
        %v1662 = vunpack.c.h.b16 %v560
        %v1663 = vunpack.c.l.b16 %v561
        %v1664 = vunpack.c.h.b16 %v561
        %v1665 = vunpack.c.l.b16 %v562
        %v1666 = vunpack.c.h.b16 %v562
        %v1667 = vunpack.c.l.b16 %v563
        %v1668 = vunpack.c.h.b16 %v563
        %v1669 = vunpack.c.l.b16 %v564
        %v1670 = vunpack.c.h.b16 %v564
        %v1671 = vunpack.c.l.b16 %v565
        %v1672 = vunpack.c.h.b16 %v565
        %v1673 = vunpack.c.l.b16 %v566
        %v1674 = vunpack.c.h.b16 %v566
        %v1675 = vunpack.c.l.b16 %v567
        %v1676 = vunpack.c.h.b16 %v567
        %v1677 = vunpack.c.l.b16 %v568
        %v1678 = vunpack.c.h.b16 %v568
        %v1679 = vunpack.c.l.b16 %v569
        %v1680 = vunpack.c.h.b16 %v569
        %v1681 = vunpack.c.l.b16 %v570
        %v1682 = vunpack.c.h.b16 %v570
        %v1683 = vunpack.c.l.b16 %v571
        %v1684 = vunpack.c.h.b16 %v571
        %v1685 = vunpack.c.l.b16 %v572
        %v1686 = vunpack.c.h.b16 %v572
        %v1687 = vunpack.c.l.b16 %v573
        %v1688 = vunpack.c.h.b16 %v573
        %v1689 = vunpack.c.l.b16 %v574
        %v1690 = vunpack.c.h.b16 %v574
        %v1691 = vunpack.c.l.b16 %v575
        %v1692 = vunpack.c.h.b16 %v575
        %v1693 = vunpack.c.l.b16 %v576
        %v1694 = vunpack.c.h.b16 %v576
        %v1695 = vunpack.c.l.b16 %v577
        %v1696 = vunpack.c.h.b16 %v577
        %v1697 = vunpack.c.l.b16 %v578
        %v1698 = vunpack.c.h.b16 %v578
        %v1699 = vunpack.c.l.b16 %v579
        %v1700 = vunpack.c.h.b16 %v579
        %v1701 = vunpack.c.l.b16 %v580
        %v1702 = vunpack.c.h.b16 %v580
        %v1703 = vunpack.c.l.b16 %v581
        %v1704 = vunpack.c.h.b16 %v581
        %v1705 = vunpack.c.l.b16 %v582
        %v1706 = vunpack.c.h.b16 %v582
        %v1707 = vunpack.c.l.b16 %v583
        %v1708 = vunpack.c.h.b16 %v583
        %v1709 = vunpack.c.l.b16 %v584
        %v1710 = vunpack.c.h.b16 %v584
        %v1711 = vunpack.c.l.b16 %v585
        %v1712 = vunpack.c.h.b16 %v585
        %v1713 = vunpack.c.l.b16 %v586
        %v1714 = vunpack.c.h.b16 %v586
        %v1715 = vunpack.c.l.b16 %v587
        %v1716 = vunpack.c.h.b16 %v587
        %v1717 = vunpack.c.l.b16 %v588
        %v1718 = vunpack.c.h.b16 %v588
        %v1719 = vunpack.c.l.b16 %v589
        %v1720 = vunpack.c.h.b16 %v589
        %v1721 = vunpack.c.l.b16 %v590
        %v1722 = vunpack.c.h.b16 %v590
        %v1723 = vunpack.c.l.b16 %v591
        %v1724 = vunpack.c.h.b16 %v591
        %v1725 = vunpack.c.l.b16 %v592
        %v1726 = vunpack.c.h.b16 %v592
        %v1727 = vunpack.c.l.b16 %v593
        %v1728 = vunpack.c.h.b16 %v593
        %v1729 = vunpack.c.l.b16 %v594
        %v1730 = vunpack.c.h.b16 %v594
        %v1731 = vunpack.c.l.b16 %v595
        %v1732 = vunpack.c.h.b16 %v595
        %v1733 = vunpack.c.l.b16 %v596
        %v1734 = vunpack.c.h.b16 %v596
        %v1735 = vunpack.c.l.b16 %v597
        %v1736 = vunpack.c.h.b16 %v597
        %v1737 = vunpack.c.l.b16 %v598
        %v1738 = vunpack.c.h.b16 %v598
        %v1739 = vunpack.c.l.b16 %v599
        %v1740 = vunpack.c.h.b16 %v599
        %v1741 = vunpack.c.l.b16 %v600
        %v1742 = vunpack.c.h.b16 %v600
        %v1743 = vunpack.c.l.b16 %v601
        %v1744 = vunpack.c.h.b16 %v601
        %v1745 = vunpack.c.l.b16 %v602
        %v1746 = vunpack.c.h.b16 %v602
        %v1747 = vunpack.c.l.b16 %v603
        %v1748 = vunpack.c.h.b16 %v603
        %v1749 = vunpack.c.l.b16 %v604
        %v1750 = vunpack.c.h.b16 %v604
        %v1751 = vunpack.c.l.b16 %v605
        %v1752 = vunpack.c.h.b16 %v605
        %v1753 = vunpack.c.l.b16 %v606
        %v1754 = vunpack.c.h.b16 %v606
        %v1755 = vunpack.c.l.b16 %v607
        %v1756 = vunpack.c.h.b16 %v607
        %v1757 = vunpack.c.l.b16 %v608
        %v1758 = vunpack.c.h.b16 %v608
        %v1759 = vunpack.c.l.b16 %v609
        %v1760 = vunpack.c.h.b16 %v609
        %v1761 = vunpack.c.l.b16 %v610
        %v1762 = vunpack.c.h.b16 %v610
        %v1763 = vunpack.c.l.b16 %v611
        %v1764 = vunpack.c.h.b16 %v611
        %v1765 = vunpack.c.l.b16 %v612
        %v1766 = vunpack.c.h.b16 %v612
        %v1767 = vunpack.c.l.b16 %v613
        %v1768 = vunpack.c.h.b16 %v613
        %v1769 = vunpack.c.l.b16 %v614
        %v1770 = vunpack.c.h.b16 %v614
        %v1771 = vunpack.c.l.b16 %v615
        %v1772 = vunpack.c.h.b16 %v615
        %v1773 = vunpack.c.l.b16 %v616
        %v1774 = vunpack.c.h.b16 %v616
        %v1775 = vunpack.c.l.b16 %v617
        %v1776 = vunpack.c.h.b16 %v617
        %v1777 = vunpack.c.l.b16 %v618
        %v1778 = vunpack.c.h.b16 %v618
        %v1779 = vunpack.c.l.b16 %v619
        %v1780 = vunpack.c.h.b16 %v619
        %v1781 = vunpack.c.l.b16 %v620
        %v1782 = vunpack.c.h.b16 %v620
        %v1783 = vunpack.c.l.b16 %v621
        %v1784 = vunpack.c.h.b16 %v621
        %v1785 = vunpack.c.l.b16 %v622
        %v1786 = vunpack.c.h.b16 %v622
        %v1787 = vunpack.c.l.b16 %v623
        %v1788 = vunpack.c.h.b16 %v623
        %v1789 = vunpack.c.l.b16 %v624
        %v1790 = vunpack.c.h.b16 %v624
        %v1791 = vunpack.c.l.b16 %v625
        %v1792 = vunpack.c.h.b16 %v625
        %v1793 = vunpack.c.l.b16 %v626
        %v1794 = vunpack.c.h.b16 %v626
        %v1795 = vunpack.c.l.b16 %v627
        %v1796 = vunpack.c.h.b16 %v627
        %v1797 = vunpack.c.l.b16 %v628
        %v1798 = vunpack.c.h.b16 %v628
        %v1799 = vunpack.c.l.b16 %v629
        %v1800 = vunpack.c.h.b16 %v629
        %v1801 = vunpack.c.l.b16 %v630
        %v1802 = vunpack.c.h.b16 %v630
        %v1803 = vunpack.c.l.b16 %v631
        %v1804 = vunpack.c.h.b16 %v631
        %v1805 = vunpack.c.l.b16 %v632
        %v1806 = vunpack.c.h.b16 %v632
        %v1807 = vunpack.c.l.b16 %v633
        %v1808 = vunpack.c.h.b16 %v633
        %v1809 = vunpack.c.l.b16 %v634
        %v1810 = vunpack.c.h.b16 %v634
        %v1811 = vunpack.c.l.b16 %v635
        %v1812 = vunpack.c.h.b16 %v635
        %v1813 = vunpack.c.l.b16 %v636
        %v1814 = vunpack.c.h.b16 %v636
        %v1815 = vunpack.c.l.b16 %v637
        %v1816 = vunpack.c.h.b16 %v637
        %v1817 = vunpack.c.l.b16 %v638
        %v1818 = vunpack.c.h.b16 %v638
        %v1819 = vunpack.c.l.b16 %v639
        %v1820 = vunpack.c.h.b16 %v639
        %v1821 = vunpack.c.l.b16 %v640
        %v1822 = vunpack.c.h.b16 %v640
        %v1823 = vunpack.c.l.b16 %v641
        %v1824 = vunpack.c.h.b16 %v641
        %v1825 = vunpack.c.l.b16 %v642
        %v1826 = vunpack.c.h.b16 %v642
        %v1827 = vunpack.c.l.b16 %v643
        %v1828 = vunpack.c.h.b16 %v643
        %v1829 = vunpack.c.l.b16 %v644
        %v1830 = vunpack.c.h.b16 %v644
        %v1831 = vunpack.c.l.b16 %v645
        %v1832 = vunpack.c.h.b16 %v645
        %v1833 = vunpack.c.l.b16 %v646
        %v1834 = vunpack.c.h.b16 %v646
        %v1835 = vunpack.c.l.b16 %v647
        %v1836 = vunpack.c.h.b16 %v647
        %v1837 = vunpack.c.l.b16 %v648
        %v1838 = vunpack.c.h.b16 %v648
        %v1839 = vunpack.c.l.b16 %v649
        %v1840 = vunpack.c.h.b16 %v649
        %v1841 = vunpack.c.l.b16 %v650
        %v1842 = vunpack.c.h.b16 %v650
        %v1843 = vunpack.c.l.b16 %v651
        %v1844 = vunpack.c.h.b16 %v651
        %v1845 = vunpack.c.l.b16 %v652
        %v1846 = vunpack.c.h.b16 %v652
        %v1847 = vunpack.c.l.b16 %v653
        %v1848 = vunpack.c.h.b16 %v653
        %v1849 = vunpack.c.l.b16 %v654
        %v1850 = vunpack.c.h.b16 %v654
        %v1851 = vunpack.c.l.b16 %v655
        %v1852 = vunpack.c.h.b16 %v655
        %v1853 = vunpack.c.l.b16 %v656
        %v1854 = vunpack.c.h.b16 %v656
        %v1855 = vunpack.c.l.b16 %v657
        %v1856 = vunpack.c.h.b16 %v657
        %v1857 = vunpack.c.l.b16 %v658
        %v1858 = vunpack.c.h.b16 %v658
        %v1859 = vunpack.c.l.b16 %v659
        %v1860 = vunpack.c.h.b16 %v659
        %v1861 = vunpack.c.l.b16 %v660
        %v1862 = vunpack.c.h.b16 %v660
        %v1863 = vunpack.c.l.b16 %v661
        %v1864 = vunpack.c.h.b16 %v661
        %v1865 = vunpack.c.l.b16 %v662
        %v1866 = vunpack.c.h.b16 %v662
        %v1867 = vunpack.c.l.b16 %v663
        %v1868 = vunpack.c.h.b16 %v663
        %v1869 = vunpack.c.l.b16 %v664
        %v1870 = vunpack.c.h.b16 %v664
        %v1871 = vunpack.c.l.b16 %v665
        %v1872 = vunpack.c.h.b16 %v665
        %v1873 = vunpack.c.l.b16 %v666
        %v1874 = vunpack.c.h.b16 %v666
        %v1875 = vunpack.c.l.b16 %v667
        %v1876 = vunpack.c.h.b16 %v667
        %v1877 = vunpack.c.l.b16 %v668
        %v1878 = vunpack.c.h.b16 %v668
        %v1879 = vpack.c.b16 %v1247, %v1239
        %v1880 = vpack.c.b16 %v1248, %v1240
        %v1881 = vpack.c.b16 %v1249, %v1241
        %v1882 = vpack.c.b16 %v1250, %v1242
        %v1883 = vpack.c.b16 %v1251, %v1243
        %v1884 = vpack.c.b16 %v1252, %v1244
        %v1885 = vpack.c.b16 %v1253, %v1245
        %v1886 = vpack.c.b16 %v1254, %v1246
        %v1887 = vpack.c.b16 %v1263, %v1255
        %v1888 = vpack.c.b16 %v1264, %v1256
        %v1889 = vpack.c.b16 %v1265, %v1257
        %v1890 = vpack.c.b16 %v1266, %v1258
        %v1891 = vpack.c.b16 %v1267, %v1259
        %v1892 = vpack.c.b16 %v1268, %v1260
        %v1893 = vpack.c.b16 %v1269, %v1261
        %v1894 = vpack.c.b16 %v1270, %v1262
        %v1895 = vpack.c.b16 %v1279, %v1271
        %v1896 = vpack.c.b16 %v1280, %v1272
        %v1897 = vpack.c.b16 %v1281, %v1273
        %v1898 = vpack.c.b16 %v1282, %v1274
        %v1899 = vpack.c.b16 %v1283, %v1275
        %v1900 = vpack.c.b16 %v1284, %v1276
        %v1901 = vpack.c.b16 %v1285, %v1277
        %v1902 = vpack.c.b16 %v1286, %v1278
        %v1903 = vpack.c.b16 %v1295, %v1287
        %v1904 = vpack.c.b16 %v1296, %v1288
        %v1905 = vpack.c.b16 %v1297, %v1289
        %v1906 = vpack.c.b16 %v1298, %v1290
        %v1907 = vpack.c.b16 %v1299, %v1291
        %v1908 = vpack.c.b16 %v1300, %v1292
        %v1909 = vpack.c.b16 %v1301, %v1293
        %v1910 = vpack.c.b16 %v1302, %v1294
        %v1911 = vpack.c.b16 %v1311, %v1303
        %v1912 = vpack.c.b16 %v1312, %v1304
        %v1913 = vpack.c.b16 %v1313, %v1305
        %v1914 = vpack.c.b16 %v1314, %v1306
        %v1915 = vpack.c.b16 %v1315, %v1307
        %v1916 = vpack.c.b16 %v1316, %v1308
        %v1917 = vpack.c.b16 %v1317, %v1309
        %v1918 = vpack.c.b16 %v1318, %v1310
        %v1919 = vpack.c.b16 %v1327, %v1319
        %v1920 = vpack.c.b16 %v1328, %v1320
        %v1921 = vpack.c.b16 %v1329, %v1321
        %v1922 = vpack.c.b16 %v1330, %v1322
        %v1923 = vpack.c.b16 %v1331, %v1323
        %v1924 = vpack.c.b16 %v1332, %v1324
        %v1925 = vpack.c.b16 %v1333, %v1325
        %v1926 = vpack.c.b16 %v1334, %v1326
        %v1927 = vpack.c.b16 %v1343, %v1335
        %v1928 = vpack.c.b16 %v1344, %v1336
        %v1929 = vpack.c.b16 %v1345, %v1337
        %v1930 = vpack.c.b16 %v1346, %v1338
        %v1931 = vpack.c.b16 %v1347, %v1339
        %v1932 = vpack.c.b16 %v1348, %v1340
        %v1933 = vpack.c.b16 %v1349, %v1341
        %v1934 = vpack.c.b16 %v1350, %v1342
        %v1935 = vpack.c.b16 %v1359, %v1351
        %v1936 = vpack.c.b16 %v1360, %v1352
        %v1937 = vpack.c.b16 %v1361, %v1353
        %v1938 = vpack.c.b16 %v1362, %v1354
        %v1939 = vpack.c.b16 %v1363, %v1355
        %v1940 = vpack.c.b16 %v1364, %v1356
        %v1941 = vpack.c.b16 %v1365, %v1357
        %v1942 = vpack.c.b16 %v1366, %v1358
        %v1943 = vpack.c.b16 %v1375, %v1367
        %v1944 = vpack.c.b16 %v1376, %v1368
        %v1945 = vpack.c.b16 %v1377, %v1369
        %v1946 = vpack.c.b16 %v1378, %v1370
        %v1947 = vpack.c.b16 %v1379, %v1371
        %v1948 = vpack.c.b16 %v1380, %v1372
        %v1949 = vpack.c.b16 %v1381, %v1373
        %v1950 = vpack.c.b16 %v1382, %v1374
        %v1951 = vpack.c.b16 %v1391, %v1383
        %v1952 = vpack.c.b16 %v1392, %v1384
        %v1953 = vpack.c.b16 %v1393, %v1385
        %v1954 = vpack.c.b16 %v1394, %v1386
        %v1955 = vpack.c.b16 %v1395, %v1387
        %v1956 = vpack.c.b16 %v1396, %v1388
        %v1957 = vpack.c.b16 %v1397, %v1389
        %v1958 = vpack.c.b16 %v1398, %v1390
        %v1959 = vpack.c.b16 %v1407, %v1399
        %v1960 = vpack.c.b16 %v1408, %v1400
        %v1961 = vpack.c.b16 %v1409, %v1401
        %v1962 = vpack.c.b16 %v1410, %v1402
        %v1963 = vpack.c.b16 %v1411, %v1403
        %v1964 = vpack.c.b16 %v1412, %v1404
        %v1965 = vpack.c.b16 %v1413, %v1405
        %v1966 = vpack.c.b16 %v1414, %v1406
        %v1967 = vpack.c.b16 %v1423, %v1415
        %v1968 = vpack.c.b16 %v1424, %v1416
        %v1969 = vpack.c.b16 %v1425, %v1417
        %v1970 = vpack.c.b16 %v1426, %v1418
        %v1971 = vpack.c.b16 %v1427, %v1419
        %v1972 = vpack.c.b16 %v1428, %v1420
        %v1973 = vpack.c.b16 %v1429, %v1421
        %v1974 = vpack.c.b16 %v1430, %v1422
        %v1975 = vpack.c.b16 %v1439, %v1431
        %v1976 = vpack.c.b16 %v1440, %v1432
        %v1977 = vpack.c.b16 %v1441, %v1433
        %v1978 = vpack.c.b16 %v1442, %v1434
        %v1979 = vpack.c.b16 %v1443, %v1435
        %v1980 = vpack.c.b16 %v1444, %v1436
        %v1981 = vpack.c.b16 %v1445, %v1437
        %v1982 = vpack.c.b16 %v1446, %v1438
        %v1983 = vpack.c.b16 %v1455, %v1447
        %v1984 = vpack.c.b16 %v1456, %v1448
        %v1985 = vpack.c.b16 %v1457, %v1449
        %v1986 = vpack.c.b16 %v1458, %v1450
        %v1987 = vpack.c.b16 %v1459, %v1451
        %v1988 = vpack.c.b16 %v1460, %v1452
        %v1989 = vpack.c.b16 %v1461, %v1453
        %v1990 = vpack.c.b16 %v1462, %v1454
        %v1991 = vpack.c.b16 %v1471, %v1463
        %v1992 = vpack.c.b16 %v1472, %v1464
        %v1993 = vpack.c.b16 %v1473, %v1465
        %v1994 = vpack.c.b16 %v1474, %v1466
        %v1995 = vpack.c.b16 %v1475, %v1467
        %v1996 = vpack.c.b16 %v1476, %v1468
        %v1997 = vpack.c.b16 %v1477, %v1469
        %v1998 = vpack.c.b16 %v1478, %v1470
        %v1999 = vpack.c.b16 %v1487, %v1479
        %v2000 = vpack.c.b16 %v1488, %v1480
        %v2001 = vpack.c.b16 %v1489, %v1481
        %v2002 = vpack.c.b16 %v1490, %v1482
        %v2003 = vpack.c.b16 %v1491, %v1483
        %v2004 = vpack.c.b16 %v1492, %v1484
        %v2005 = vpack.c.b16 %v1493, %v1485
        %v2006 = vpack.c.b16 %v1494, %v1486
        %v2007 = vpack.c.b16 %v1503, %v1495
        %v2008 = vpack.c.b16 %v1504, %v1496
        %v2009 = vpack.c.b16 %v1505, %v1497
        %v2010 = vpack.c.b16 %v1506, %v1498
        %v2011 = vpack.c.b16 %v1507, %v1499
        %v2012 = vpack.c.b16 %v1508, %v1500
        %v2013 = vpack.c.b16 %v1509, %v1501
        %v2014 = vpack.c.b16 %v1510, %v1502
        %v2015 = vpack.c.b16 %v1519, %v1511
        %v2016 = vpack.c.b16 %v1520, %v1512
        %v2017 = vpack.c.b16 %v1521, %v1513
        %v2018 = vpack.c.b16 %v1522, %v1514
        %v2019 = vpack.c.b16 %v1523, %v1515
        %v2020 = vpack.c.b16 %v1524, %v1516
        %v2021 = vpack.c.b16 %v1525, %v1517
        %v2022 = vpack.c.b16 %v1526, %v1518
        %v2023 = vpack.c.b16 %v1535, %v1527
        %v2024 = vpack.c.b16 %v1536, %v1528
        %v2025 = vpack.c.b16 %v1537, %v1529
        %v2026 = vpack.c.b16 %v1538, %v1530
        %v2027 = vpack.c.b16 %v1539, %v1531
        %v2028 = vpack.c.b16 %v1540, %v1532
        %v2029 = vpack.c.b16 %v1541, %v1533
        %v2030 = vpack.c.b16 %v1542, %v1534
        %v2031 = vpack.c.b16 %v1551, %v1543
        %v2032 = vpack.c.b16 %v1552, %v1544
        %v2033 = vpack.c.b16 %v1553, %v1545
        %v2034 = vpack.c.b16 %v1554, %v1546
        %v2035 = vpack.c.b16 %v1555, %v1547
        %v2036 = vpack.c.b16 %v1556, %v1548
        %v2037 = vpack.c.b16 %v1557, %v1549
        %v2038 = vpack.c.b16 %v1558, %v1550
        %v2039 = vpack.c.b16 %v1567, %v1559
        %v2040 = vpack.c.b16 %v1568, %v1560
        %v2041 = vpack.c.b16 %v1569, %v1561
        %v2042 = vpack.c.b16 %v1570, %v1562
        %v2043 = vpack.c.b16 %v1571, %v1563
        %v2044 = vpack.c.b16 %v1572, %v1564
        %v2045 = vpack.c.b16 %v1573, %v1565
        %v2046 = vpack.c.b16 %v1574, %v1566
        %v2047 = vpack.c.b16 %v1583, %v1575
        %v2048 = vpack.c.b16 %v1584, %v1576
        %v2049 = vpack.c.b16 %v1585, %v1577
        %v2050 = vpack.c.b16 %v1586, %v1578
        %v2051 = vpack.c.b16 %v1587, %v1579
        %v2052 = vpack.c.b16 %v1588, %v1580
        %v2053 = vpack.c.b16 %v1589, %v1581
        %v2054 = vpack.c.b16 %v1590, %v1582
        %v2055 = vpack.c.b16 %v1599, %v1591
        %v2056 = vpack.c.b16 %v1600, %v1592
        %v2057 = vpack.c.b16 %v1601, %v1593
        %v2058 = vpack.c.b16 %v1602, %v1594
        %v2059 = vpack.c.b16 %v1603, %v1595
        %v2060 = vpack.c.b16 %v1604, %v1596
        %v2061 = vpack.c.b16 %v1605, %v1597
        %v2062 = vpack.c.b16 %v1606, %v1598
        %v2063 = vpack.c.b16 %v1615, %v1607
        %v2064 = vpack.c.b16 %v1616, %v1608
        %v2065 = vpack.c.b16 %v1617, %v1609
        %v2066 = vpack.c.b16 %v1618, %v1610
        %v2067 = vpack.c.b16 %v1619, %v1611
        %v2068 = vpack.c.b16 %v1620, %v1612
        %v2069 = vpack.c.b16 %v1621, %v1613
        %v2070 = vpack.c.b16 %v1622, %v1614
        %v2071 = vpack.c.b16 %v1631, %v1623
        %v2072 = vpack.c.b16 %v1632, %v1624
        %v2073 = vpack.c.b16 %v1633, %v1625
        %v2074 = vpack.c.b16 %v1634, %v1626
        %v2075 = vpack.c.b16 %v1635, %v1627
        %v2076 = vpack.c.b16 %v1636, %v1628
        %v2077 = vpack.c.b16 %v1637, %v1629
        %v2078 = vpack.c.b16 %v1638, %v1630
        %v2079 = vpack.c.b16 %v1647, %v1639
        %v2080 = vpack.c.b16 %v1648, %v1640
        %v2081 = vpack.c.b16 %v1649, %v1641
        %v2082 = vpack.c.b16 %v1650, %v1642
        %v2083 = vpack.c.b16 %v1651, %v1643
        %v2084 = vpack.c.b16 %v1652, %v1644
        %v2085 = vpack.c.b16 %v1653, %v1645
        %v2086 = vpack.c.b16 %v1654, %v1646
        %v2087 = vpack.c.b16 %v1663, %v1655
        %v2088 = vpack.c.b16 %v1664, %v1656
        %v2089 = vpack.c.b16 %v1665, %v1657
        %v2090 = vpack.c.b16 %v1666, %v1658
        %v2091 = vpack.c.b16 %v1667, %v1659
        %v2092 = vpack.c.b16 %v1668, %v1660
        %v2093 = vpack.c.b16 %v1669, %v1661
        %v2094 = vpack.c.b16 %v1670, %v1662
        %v2095 = vpack.c.b16 %v1679, %v1671
        %v2096 = vpack.c.b16 %v1680, %v1672
        %v2097 = vpack.c.b16 %v1681, %v1673
        %v2098 = vpack.c.b16 %v1682, %v1674
        %v2099 = vpack.c.b16 %v1683, %v1675
        %v2100 = vpack.c.b16 %v1684, %v1676
        %v2101 = vpack.c.b16 %v1685, %v1677
        %v2102 = vpack.c.b16 %v1686, %v1678
        %v2103 = vpack.c.b16 %v1695, %v1687
        %v2104 = vpack.c.b16 %v1696, %v1688
        %v2105 = vpack.c.b16 %v1697, %v1689
        %v2106 = vpack.c.b16 %v1698, %v1690
        %v2107 = vpack.c.b16 %v1699, %v1691
        %v2108 = vpack.c.b16 %v1700, %v1692
        %v2109 = vpack.c.b16 %v1701, %v1693
        %v2110 = vpack.c.b16 %v1702, %v1694
        %v2111 = vpack.c.b16 %v1711, %v1703
        %v2112 = vpack.c.b16 %v1712, %v1704
        %v2113 = vpack.c.b16 %v1713, %v1705
        %v2114 = vpack.c.b16 %v1714, %v1706
        %v2115 = vpack.c.b16 %v1715, %v1707
        %v2116 = vpack.c.b16 %v1716, %v1708
        %v2117 = vpack.c.b16 %v1717, %v1709
        %v2118 = vpack.c.b16 %v1718, %v1710
        %v2119 = vpack.c.b16 %v1727, %v1719
        %v2120 = vpack.c.b16 %v1728, %v1720
        %v2121 = vpack.c.b16 %v1729, %v1721
        %v2122 = vpack.c.b16 %v1730, %v1722
        %v2123 = vpack.c.b16 %v1731, %v1723
        %v2124 = vpack.c.b16 %v1732, %v1724
        %v2125 = vpack.c.b16 %v1733, %v1725
        %v2126 = vpack.c.b16 %v1734, %v1726
        %v2127 = vpack.c.b16 %v1743, %v1735
        %v2128 = vpack.c.b16 %v1744, %v1736
        %v2129 = vpack.c.b16 %v1745, %v1737
        %v2130 = vpack.c.b16 %v1746, %v1738
        %v2131 = vpack.c.b16 %v1747, %v1739
        %v2132 = vpack.c.b16 %v1748, %v1740
        %v2133 = vpack.c.b16 %v1749, %v1741
        %v2134 = vpack.c.b16 %v1750, %v1742
        %v2135 = vpack.c.b16 %v1759, %v1751
        %v2136 = vpack.c.b16 %v1760, %v1752
        %v2137 = vpack.c.b16 %v1761, %v1753
        %v2138 = vpack.c.b16 %v1762, %v1754
        %v2139 = vpack.c.b16 %v1763, %v1755
        %v2140 = vpack.c.b16 %v1764, %v1756
        %v2141 = vpack.c.b16 %v1765, %v1757
        %v2142 = vpack.c.b16 %v1766, %v1758
        %v2143 = vpack.c.b16 %v1775, %v1767
        %v2144 = vpack.c.b16 %v1776, %v1768
        %v2145 = vpack.c.b16 %v1777, %v1769
        %v2146 = vpack.c.b16 %v1778, %v1770
        %v2147 = vpack.c.b16 %v1779, %v1771
        %v2148 = vpack.c.b16 %v1780, %v1772
        %v2149 = vpack.c.b16 %v1781, %v1773
        %v2150 = vpack.c.b16 %v1782, %v1774
        %v2151 = vpack.c.b16 %v1791, %v1783
        %v2152 = vpack.c.b16 %v1792, %v1784
        %v2153 = vpack.c.b16 %v1793, %v1785
        %v2154 = vpack.c.b16 %v1794, %v1786
        %v2155 = vpack.c.b16 %v1795, %v1787
        %v2156 = vpack.c.b16 %v1796, %v1788
        %v2157 = vpack.c.b16 %v1797, %v1789
        %v2158 = vpack.c.b16 %v1798, %v1790
        %v2159 = vpack.c.b16 %v1807, %v1799
        %v2160 = vpack.c.b16 %v1808, %v1800
        %v2161 = vpack.c.b16 %v1809, %v1801
        %v2162 = vpack.c.b16 %v1810, %v1802
        %v2163 = vpack.c.b16 %v1811, %v1803
        %v2164 = vpack.c.b16 %v1812, %v1804
        %v2165 = vpack.c.b16 %v1813, %v1805
        %v2166 = vpack.c.b16 %v1814, %v1806
        %v2167 = vpack.c.b16 %v1823, %v1815
        %v2168 = vpack.c.b16 %v1824, %v1816
        %v2169 = vpack.c.b16 %v1825, %v1817
        %v2170 = vpack.c.b16 %v1826, %v1818
        %v2171 = vpack.c.b16 %v1827, %v1819
        %v2172 = vpack.c.b16 %v1828, %v1820
        %v2173 = vpack.c.b16 %v1829, %v1821
        %v2174 = vpack.c.b16 %v1830, %v1822
        %v2175 = vpack.c.b16 %v1839, %v1831
        %v2176 = vpack.c.b16 %v1840, %v1832
        %v2177 = vpack.c.b16 %v1841, %v1833
        %v2178 = vpack.c.b16 %v1842, %v1834
        %v2179 = vpack.c.b16 %v1843, %v1835
        %v2180 = vpack.c.b16 %v1844, %v1836
        %v2181 = vpack.c.b16 %v1845, %v1837
        %v2182 = vpack.c.b16 %v1846, %v1838
        %v2183 = vpack.c.b16 %v1855, %v1847
        %v2184 = vpack.c.b16 %v1856, %v1848
        %v2185 = vpack.c.b16 %v1857, %v1849
        %v2186 = vpack.c.b16 %v1858, %v1850
        %v2187 = vpack.c.b16 %v1859, %v1851
        %v2188 = vpack.c.b16 %v1860, %v1852
        %v2189 = vpack.c.b16 %v1861, %v1853
        %v2190 = vpack.c.b16 %v1862, %v1854
        %v2191 = vpack.c.b16 %v1871, %v1863
        %v2192 = vpack.c.b16 %v1872, %v1864
        %v2193 = vpack.c.b16 %v1873, %v1865
        %v2194 = vpack.c.b16 %v1874, %v1866
        %v2195 = vpack.c.b16 %v1875, %v1867
        %v2196 = vpack.c.b16 %v1876, %v1868
        %v2197 = vpack.c.b16 %v1877, %v1869
        %v2198 = vpack.c.b16 %v1878, %v1870
        %2519 = vmatprep.subr.bf16.mxu0 %v1880
        %2520 = vmatpush1.bf16.msra.mxu0 %v1879
        %2521 = vmatprep.subr.bf16.mxu0 %v1888
        %2522 = vmatpush1.bf16.msra.mxu0 %v1887
        %2523 = vmatprep.subr.bf16.mxu0 %v1896
        %2524 = vmatpush1.bf16.msra.mxu0 %v1895
        %2525 = vmatprep.subr.bf16.mxu0 %v1904
        %2526 = vmatpush1.bf16.msra.mxu0 %v1903
        %2527 = vmatprep.subr.bf16.mxu0 %v1912
        %2528 = vmatpush1.bf16.msra.mxu0 %v1911
        %2529 = vmatprep.subr.bf16.mxu0 %v1920
        %2530 = vmatpush1.bf16.msra.mxu0 %v1919
        %2531 = vmatprep.subr.bf16.mxu0 %v1928
        %2532 = vmatpush1.bf16.msra.mxu0 %v1927
        %2533 = vmatprep.subr.bf16.mxu0 %v1936
        %2534 = vmatpush1.bf16.msra.mxu0 %v1935
        %2535 = vmatprep.subr.bf16.mxu0 %v1944
        %2536 = vmatpush1.bf16.msra.mxu0 %v1943
        %2537 = vmatprep.subr.bf16.mxu0 %v1952
        %2538 = vmatpush1.bf16.msra.mxu0 %v1951
        %2539 = vmatprep.subr.bf16.mxu0 %v1960
        %2540 = vmatpush1.bf16.msra.mxu0 %v1959
        %2541 = vmatprep.subr.bf16.mxu0 %v1968
        %2542 = vmatpush1.bf16.msra.mxu0 %v1967
        %2543 = vmatprep.subr.bf16.mxu0 %v1976
        %2544 = vmatpush1.bf16.msra.mxu0 %v1975
        %2545 = vmatprep.subr.bf16.mxu0 %v1984
        %2546 = vmatpush1.bf16.msra.mxu0 %v1983
        %2547 = vmatprep.subr.bf16.mxu0 %v1992
        %2548 = vmatpush1.bf16.msra.mxu0 %v1991
        %2549 = vmatprep.subr.bf16.mxu0 %v2000
        %2550 = vmatpush1.bf16.msra.mxu0 %v1999
        %2551 = vmatprep.mubr.bf16.mxu0 %v840
        %2552 = vmatmul.mubr.bf16.gmra.mrb[0].mxu0 %v839
        %v2553 = vpop.f32.mrb[0].mxu0
        %v2554 = vadd.f32 %v674, %v2553
        %v2555 = vpop.f32.mrb[0].mxu0
        %v2556 = vadd.f32 %v678, %v2555
        %v2557 = vpop.f32.mrb[0].mxu0
        %v2558 = vadd.f32 %v674, %v2557
        %v2559 = vpop.f32.mrb[0].mxu0
        %v2560 = vadd.f32 %v678, %v2559
        %2561 = vmatprep.mubr.bf16.mxu0 %v845
        %2562 = vmatmul.mubr.bf16.gmra.mrb[0].mxu0 %v844
        %v2563 = vpop.f32.mrb[0].mxu0
        %v2564 = vadd.f32 %v674, %v2563
        %v2565 = vpop.f32.mrb[0].mxu0
        %v2566 = vadd.f32 %v678, %v2565
        %v2567 = vpop.f32.mrb[0].mxu0
        %v2568 = vadd.f32 %v674, %v2567
        %v2569 = vpop.f32.mrb[0].mxu0
        %v2570 = vadd.f32 %v678, %v2569
        %2571 = vmatprep.mubr.bf16.mxu0 %v850
        %2572 = vmatmul.mubr.bf16.gmra.mrb[0].mxu0 %v849
        %v2573 = vpop.f32.mrb[0].mxu0
        %v2574 = vadd.f32 %v674, %v2573
        %v2575 = vpop.f32.mrb[0].mxu0
        %v2576 = vadd.f32 %v678, %v2575
        %v2577 = vpop.f32.mrb[0].mxu0
        %v2578 = vadd.f32 %v674, %v2577
        %v2579 = vpop.f32.mrb[0].mxu0
        %v2580 = vadd.f32 %v678, %v2579
        %2581 = vmatprep.mubr.bf16.mxu0 %v855
        %2582 = vmatmul.mubr.bf16.gmra.mrb[0].mxu0 %v854
        %v2583 = vpop.f32.mrb[0].mxu0
        %v2584 = vadd.f32 %v674, %v2583
        %v2585 = vpop.f32.mrb[0].mxu0
        %v2586 = vadd.f32 %v678, %v2585
        %v2587 = vpop.f32.mrb[0].mxu0
        %v2588 = vadd.f32 %v674, %v2587
        %v2589 = vpop.f32.mrb[0].mxu0
        %v2590 = vadd.f32 %v678, %v2589
        %2591 = vmatprep.mubr.bf16.mxu0 %v860
        %2592 = vmatmul.mubr.bf16.gmra.mrb[0].mxu0 %v859
        %v2593 = vpop.f32.mrb[0].mxu0
        %v2594 = vadd.f32 %v674, %v2593
        %v2595 = vpop.f32.mrb[0].mxu0
        %v2596 = vadd.f32 %v678, %v2595
        %v2597 = vpop.f32.mrb[0].mxu0
        %v2598 = vadd.f32 %v674, %v2597
        %v2599 = vpop.f32.mrb[0].mxu0
        %v2600 = vadd.f32 %v678, %v2599
        %2601 = vmatprep.mubr.bf16.mxu0 %v865
        %2602 = vmatmul.mubr.bf16.gmra.mrb[0].mxu0 %v864
        %v2603 = vpop.f32.mrb[0].mxu0
        %v2604 = vadd.f32 %v674, %v2603
        %v2605 = vpop.f32.mrb[0].mxu0
        %v2606 = vadd.f32 %v678, %v2605
        %v2607 = vpop.f32.mrb[0].mxu0
        %v2608 = vadd.f32 %v674, %v2607
        %v2609 = vpop.f32.mrb[0].mxu0
        %v2610 = vadd.f32 %v678, %v2609
        %2611 = vmatprep.mubr.bf16.mxu0 %v870
        %2612 = vmatmul.mubr.bf16.gmra.mrb[0].mxu0 %v869
        %v2613 = vpop.f32.mrb[0].mxu0
        %v2614 = vadd.f32 %v674, %v2613
        %v2615 = vpop.f32.mrb[0].mxu0
        %v2616 = vadd.f32 %v678, %v2615
        %v2617 = vpop.f32.mrb[0].mxu0
        %v2618 = vadd.f32 %v674, %v2617
        %v2619 = vpop.f32.mrb[0].mxu0
        %v2620 = vadd.f32 %v678, %v2619
        %2621 = vmatprep.mubr.bf16.mxu0 %v875
        %2622 = vmatmul.mubr.bf16.gmra.mrb[0].mxu0 %v874
        %v2623 = vpop.f32.mrb[0].mxu0
        %v2624 = vadd.f32 %v674, %v2623
        %v2625 = vpop.f32.mrb[0].mxu0
        %v2626 = vadd.f32 %v678, %v2625
        %v2627 = vpop.f32.mrb[0].mxu0
        %v2628 = vadd.f32 %v674, %v2627
        %v2629 = vpop.f32.mrb[0].mxu0
        %v2630 = vadd.f32 %v678, %v2629
        %2631 = vdwg.mxu0
        %2632 = vmatprep.subr.bf16.mxu0 %v2008
        %2633 = vmatpush1.bf16.msra.mxu0 %v2007
        %2634 = vmatprep.subr.bf16.mxu0 %v2016
        %2635 = vmatpush1.bf16.msra.mxu0 %v2015
        %2636 = vmatprep.subr.bf16.mxu0 %v2024
        %2637 = vmatpush1.bf16.msra.mxu0 %v2023
        %2638 = vmatprep.subr.bf16.mxu0 %v2032
        %2639 = vmatpush1.bf16.msra.mxu0 %v2031
        %2640 = vmatprep.subr.bf16.mxu0 %v2040
        %2641 = vmatpush1.bf16.msra.mxu0 %v2039
        %2642 = vmatprep.subr.bf16.mxu0 %v2048
        %2643 = vmatpush1.bf16.msra.mxu0 %v2047
        %2644 = vmatprep.subr.bf16.mxu0 %v2056
        %2645 = vmatpush1.bf16.msra.mxu0 %v2055
        %2646 = vmatprep.subr.bf16.mxu0 %v2064
        %2647 = vmatpush1.bf16.msra.mxu0 %v2063
        %2648 = vmatprep.subr.bf16.mxu0 %v2072
        %2649 = vmatpush1.bf16.msra.mxu0 %v2071
        %2650 = vmatprep.subr.bf16.mxu0 %v2080
        %2651 = vmatpush1.bf16.msra.mxu0 %v2079
        %2652 = vmatprep.subr.bf16.mxu0 %v2088
        %2653 = vmatpush1.bf16.msra.mxu0 %v2087
        %2654 = vmatprep.subr.bf16.mxu0 %v2096
        %2655 = vmatpush1.bf16.msra.mxu0 %v2095
        %2656 = vmatprep.subr.bf16.mxu0 %v2104
        %2657 = vmatpush1.bf16.msra.mxu0 %v2103
        %2658 = vmatprep.subr.bf16.mxu0 %v2112
        %2659 = vmatpush1.bf16.msra.mxu0 %v2111
        %2660 = vmatprep.subr.bf16.mxu0 %v2120
        %2661 = vmatpush1.bf16.msra.mxu0 %v2119
        %2662 = vmatprep.subr.bf16.mxu0 %v2128
        %2663 = vmatpush1.bf16.msra.mxu0 %v2127
        %2664 = vmatprep.mubr.bf16.mxu0 %v842
        %2665 = vmatmul.mubr.bf16.gmra.mrb[0].mxu0 %v841
        %v2666 = vpop.f32.mrb[0].mxu0
        %v2667 = vadd.f32 %v2554, %v2666
        %v2668 = vpop.f32.mrb[0].mxu0
        %v2669 = vadd.f32 %v2556, %v2668
        %v2670 = vpop.f32.mrb[0].mxu0
        %v2671 = vadd.f32 %v2558, %v2670
        %v2672 = vpop.f32.mrb[0].mxu0
        %v2673 = vadd.f32 %v2560, %v2672
        %2674 = vmatprep.mubr.bf16.mxu0 %v847
        %2675 = vmatmul.mubr.bf16.gmra.mrb[0].mxu0 %v846
        %v2676 = vpop.f32.mrb[0].mxu0
        %v2677 = vadd.f32 %v2564, %v2676
        %v2678 = vpop.f32.mrb[0].mxu0
        %v2679 = vadd.f32 %v2566, %v2678
        %v2680 = vpop.f32.mrb[0].mxu0
        %v2681 = vadd.f32 %v2568, %v2680
        %v2682 = vpop.f32.mrb[0].mxu0
        %v2683 = vadd.f32 %v2570, %v2682
        %2684 = vmatprep.mubr.bf16.mxu0 %v852
        %2685 = vmatmul.mubr.bf16.gmra.mrb[0].mxu0 %v851
        %v2686 = vpop.f32.mrb[0].mxu0
        %v2687 = vadd.f32 %v2574, %v2686
        %v2688 = vpop.f32.mrb[0].mxu0
        %v2689 = vadd.f32 %v2576, %v2688
        %v2690 = vpop.f32.mrb[0].mxu0
        %v2691 = vadd.f32 %v2578, %v2690
        %v2692 = vpop.f32.mrb[0].mxu0
        %v2693 = vadd.f32 %v2580, %v2692
        %2694 = vmatprep.mubr.bf16.mxu0 %v857
        %2695 = vmatmul.mubr.bf16.gmra.mrb[0].mxu0 %v856
        %v2696 = vpop.f32.mrb[0].mxu0
        %v2697 = vadd.f32 %v2584, %v2696
        %v2698 = vpop.f32.mrb[0].mxu0
        %v2699 = vadd.f32 %v2586, %v2698
        %v2700 = vpop.f32.mrb[0].mxu0
        %v2701 = vadd.f32 %v2588, %v2700
        %v2702 = vpop.f32.mrb[0].mxu0
        %v2703 = vadd.f32 %v2590, %v2702
        %2704 = vmatprep.mubr.bf16.mxu0 %v862
        %2705 = vmatmul.mubr.bf16.gmra.mrb[0].mxu0 %v861
        %v2706 = vpop.f32.mrb[0].mxu0
        %v2707 = vadd.f32 %v2594, %v2706
        %v2708 = vpop.f32.mrb[0].mxu0
        %v2709 = vadd.f32 %v2596, %v2708
        %v2710 = vpop.f32.mrb[0].mxu0
        %v2711 = vadd.f32 %v2598, %v2710
        %v2712 = vpop.f32.mrb[0].mxu0
        %v2713 = vadd.f32 %v2600, %v2712
        %2714 = vmatprep.mubr.bf16.mxu0 %v867
        %2715 = vmatmul.mubr.bf16.gmra.mrb[0].mxu0 %v866
        %v2716 = vpop.f32.mrb[0].mxu0
        %v2717 = vadd.f32 %v2604, %v2716
        %v2718 = vpop.f32.mrb[0].mxu0
        %v2719 = vadd.f32 %v2606, %v2718
        %v2720 = vpop.f32.mrb[0].mxu0
        %v2721 = vadd.f32 %v2608, %v2720
        %v2722 = vpop.f32.mrb[0].mxu0
        %v2723 = vadd.f32 %v2610, %v2722
        %2724 = vmatprep.mubr.bf16.mxu0 %v872
        %2725 = vmatmul.mubr.bf16.gmra.mrb[0].mxu0 %v871
        %v2726 = vpop.f32.mrb[0].mxu0
        %v2727 = vadd.f32 %v2614, %v2726
        %v2728 = vpop.f32.mrb[0].mxu0
        %v2729 = vadd.f32 %v2616, %v2728
        %v2730 = vpop.f32.mrb[0].mxu0
        %v2731 = vadd.f32 %v2618, %v2730
        %v2732 = vpop.f32.mrb[0].mxu0
        %v2733 = vadd.f32 %v2620, %v2732
        %2734 = vmatprep.mubr.bf16.mxu0 %v877
        %2735 = vmatmul.mubr.bf16.gmra.mrb[0].mxu0 %v876
        %v2736 = vpop.f32.mrb[0].mxu0
        %v2737 = vadd.f32 %v2624, %v2736
        %v2738 = vpop.f32.mrb[0].mxu0
        %v2739 = vadd.f32 %v2626, %v2738
        %v2740 = vpop.f32.mrb[0].mxu0
        %v2741 = vadd.f32 %v2628, %v2740
        %v2742 = vpop.f32.mrb[0].mxu0
        %v2743 = vadd.f32 %v2630, %v2742
        %2744 = vdwg.mxu0
        %2745 = vmatprep.subr.bf16.mxu0 %v2136
        %2746 = vmatpush1.bf16.msra.mxu0 %v2135
        %2747 = vmatprep.subr.bf16.mxu0 %v2144
        %2748 = vmatpush1.bf16.msra.mxu0 %v2143
        %2749 = vmatprep.subr.bf16.mxu0 %v2152
        %2750 = vmatpush1.bf16.msra.mxu0 %v2151
        %2751 = vmatprep.subr.bf16.mxu0 %v2160
        %2752 = vmatpush1.bf16.msra.mxu0 %v2159
        %2753 = vmatprep.subr.bf16.mxu0 %v2168
        %2754 = vmatpush1.bf16.msra.mxu0 %v2167
        %2755 = vmatprep.subr.bf16.mxu0 %v2176
        %2756 = vmatpush1.bf16.msra.mxu0 %v2175
        %2757 = vmatprep.subr.bf16.mxu0 %v2184
        %2758 = vmatpush1.bf16.msra.mxu0 %v2183
        %2759 = vmatprep.subr.bf16.mxu0 %v2192
        %2760 = vmatpush1.bf16.msra.mxu0 %v2191
        %2761 = vmatprep.subr.bf16.mxu0 0
        %2762 = vmatpush1.bf16.msra.mxu0 0
        %2763 = vmatprep.subr.bf16.mxu0 0
        %2764 = vmatpush1.bf16.msra.mxu0 0
        %2765 = vmatprep.subr.bf16.mxu0 0
        %2766 = vmatpush1.bf16.msra.mxu0 0
        %2767 = vmatprep.subr.bf16.mxu0 0
        %2768 = vmatpush1.bf16.msra.mxu0 0
        %2769 = vmatprep.subr.bf16.mxu0 0
        %2770 = vmatpush1.bf16.msra.mxu0 0
        %2771 = vmatprep.subr.bf16.mxu0 0
        %2772 = vmatpush1.bf16.msra.mxu0 0
        %2773 = vmatprep.subr.bf16.mxu0 0
        %2774 = vmatpush1.bf16.msra.mxu0 0
        %2775 = vmatprep.subr.bf16.mxu0 0
        %2776 = vmatpush1.bf16.msra.mxu0 0
        %2777 = vmatprep.mubr.bf16.mxu0 0
        %2778 = vmatmul.mubr.bf16.gmra.mrb[0].mxu0 %v843
        %v2779 = vpop.f32.mrb[0].mxu0
        %v2780 = vadd.f32 %v2667, %v2779
        %v2781 = vpop.f32.mrb[0].mxu0
        %v2782 = vadd.f32 %v2669, %v2781
        %v2783 = vpop.f32.mrb[0].mxu0
        %v2784 = vadd.f32 %v2671, %v2783
        %v2785 = vpop.f32.mrb[0].mxu0
        %v2786 = vadd.f32 %v2673, %v2785
        %2787 = vmatprep.mubr.bf16.mxu0 0
        %2788 = vmatmul.mubr.bf16.gmra.mrb[0].mxu0 %v848
        %v2789 = vpop.f32.mrb[0].mxu0
        %v2790 = vadd.f32 %v2677, %v2789
        %v2791 = vpop.f32.mrb[0].mxu0
        %v2792 = vadd.f32 %v2679, %v2791
        %v2793 = vpop.f32.mrb[0].mxu0
        %v2794 = vadd.f32 %v2681, %v2793
        %v2795 = vpop.f32.mrb[0].mxu0
        %v2796 = vadd.f32 %v2683, %v2795
        %2797 = vmatprep.mubr.bf16.mxu0 0
        %2798 = vmatmul.mubr.bf16.gmra.mrb[0].mxu0 %v853
        %v2799 = vpop.f32.mrb[0].mxu0
        %v2800 = vadd.f32 %v2687, %v2799
        %v2801 = vpop.f32.mrb[0].mxu0
        %v2802 = vadd.f32 %v2689, %v2801
        %v2803 = vpop.f32.mrb[0].mxu0
        %v2804 = vadd.f32 %v2691, %v2803
        %v2805 = vpop.f32.mrb[0].mxu0
        %v2806 = vadd.f32 %v2693, %v2805
        %2807 = vmatprep.mubr.bf16.mxu0 0
        %2808 = vmatmul.mubr.bf16.gmra.mrb[0].mxu0 %v858
        %v2809 = vpop.f32.mrb[0].mxu0
        %v2810 = vadd.f32 %v2697, %v2809
        %v2811 = vpop.f32.mrb[0].mxu0
        %v2812 = vadd.f32 %v2699, %v2811
        %v2813 = vpop.f32.mrb[0].mxu0
        %v2814 = vadd.f32 %v2701, %v2813
        %v2815 = vpop.f32.mrb[0].mxu0
        %v2816 = vadd.f32 %v2703, %v2815
        %2817 = vmatprep.mubr.bf16.mxu0 0
        %2818 = vmatmul.mubr.bf16.gmra.mrb[0].mxu0 %v863
        %v2819 = vpop.f32.mrb[0].mxu0
        %v2820 = vadd.f32 %v2707, %v2819
        %v2821 = vpop.f32.mrb[0].mxu0
        %v2822 = vadd.f32 %v2709, %v2821
        %v2823 = vpop.f32.mrb[0].mxu0
        %v2824 = vadd.f32 %v2711, %v2823
        %v2825 = vpop.f32.mrb[0].mxu0
        %v2826 = vadd.f32 %v2713, %v2825
        %2827 = vmatprep.mubr.bf16.mxu0 0
        %2828 = vmatmul.mubr.bf16.gmra.mrb[0].mxu0 %v868
        %v2829 = vpop.f32.mrb[0].mxu0
        %v2830 = vadd.f32 %v2717, %v2829
        %v2831 = vpop.f32.mrb[0].mxu0
        %v2832 = vadd.f32 %v2719, %v2831
        %v2833 = vpop.f32.mrb[0].mxu0
        %v2834 = vadd.f32 %v2721, %v2833
        %v2835 = vpop.f32.mrb[0].mxu0
        %v2836 = vadd.f32 %v2723, %v2835
        %2837 = vmatprep.mubr.bf16.mxu0 0
        %2838 = vmatmul.mubr.bf16.gmra.mrb[0].mxu0 %v873
        %v2839 = vpop.f32.mrb[0].mxu0
        %v2840 = vadd.f32 %v2727, %v2839
        %v2841 = vpop.f32.mrb[0].mxu0
        %v2842 = vadd.f32 %v2729, %v2841
        %v2843 = vpop.f32.mrb[0].mxu0
        %v2844 = vadd.f32 %v2731, %v2843
        %v2845 = vpop.f32.mrb[0].mxu0
        %v2846 = vadd.f32 %v2733, %v2845
        %2847 = vmatprep.mubr.bf16.mxu0 0
        %2848 = vmatmul.mubr.bf16.gmra.mrb[0].mxu0 %v878
        %v2849 = vpop.f32.mrb[0].mxu0
        %v2850 = vadd.f32 %v2737, %v2849
        %v2851 = vpop.f32.mrb[0].mxu0
        %v2852 = vadd.f32 %v2739, %v2851
        %v2853 = vpop.f32.mrb[0].mxu0
        %v2854 = vadd.f32 %v2741, %v2853
        %v2855 = vpop.f32.mrb[0].mxu0
        %v2856 = vadd.f32 %v2743, %v2855
        %2857 = vdwg.mxu0
        %2858 = vmatprep.subr.bf16.mxu0 %v1882
        %2859 = vmatpush1.bf16.msra.mxu0 %v1881
        %2860 = vmatprep.subr.bf16.mxu0 %v1890
        %2861 = vmatpush1.bf16.msra.mxu0 %v1889
        %2862 = vmatprep.subr.bf16.mxu0 %v1898
        %2863 = vmatpush1.bf16.msra.mxu0 %v1897
        %2864 = vmatprep.subr.bf16.mxu0 %v1906
        %2865 = vmatpush1.bf16.msra.mxu0 %v1905
        %2866 = vmatprep.subr.bf16.mxu0 %v1914
        %2867 = vmatpush1.bf16.msra.mxu0 %v1913
        %2868 = vmatprep.subr.bf16.mxu0 %v1922
        %2869 = vmatpush1.bf16.msra.mxu0 %v1921
        %2870 = vmatprep.subr.bf16.mxu0 %v1930
        %2871 = vmatpush1.bf16.msra.mxu0 %v1929
        %2872 = vmatprep.subr.bf16.mxu0 %v1938
        %2873 = vmatpush1.bf16.msra.mxu0 %v1937
        %2874 = vmatprep.subr.bf16.mxu0 %v1946
        %2875 = vmatpush1.bf16.msra.mxu0 %v1945
        %2876 = vmatprep.subr.bf16.mxu0 %v1954
        %2877 = vmatpush1.bf16.msra.mxu0 %v1953
        %2878 = vmatprep.subr.bf16.mxu0 %v1962
        %2879 = vmatpush1.bf16.msra.mxu0 %v1961
        %2880 = vmatprep.subr.bf16.mxu0 %v1970
        %2881 = vmatpush1.bf16.msra.mxu0 %v1969
        %2882 = vmatprep.subr.bf16.mxu0 %v1978
        %2883 = vmatpush1.bf16.msra.mxu0 %v1977
        %2884 = vmatprep.subr.bf16.mxu0 %v1986
        %2885 = vmatpush1.bf16.msra.mxu0 %v1985
        %2886 = vmatprep.subr.bf16.mxu0 %v1994
        %2887 = vmatpush1.bf16.msra.mxu0 %v1993
        %2888 = vmatprep.subr.bf16.mxu0 %v2002
        %2889 = vmatpush1.bf16.msra.mxu0 %v2001
        %2890 = vmatprep.mubr.bf16.mxu0 %v840
        %2891 = vmatmul.mubr.bf16.gmra.mrb[0].mxu0 %v839
        %v2892 = vpop.f32.mrb[0].mxu0
        %v2893 = vadd.f32 %v682, %v2892
        %v2894 = vpop.f32.mrb[0].mxu0
        %v2895 = vadd.f32 %v686, %v2894
        %v2896 = vpop.f32.mrb[0].mxu0
        %v2897 = vadd.f32 %v682, %v2896
        %v2898 = vpop.f32.mrb[0].mxu0
        %v2899 = vadd.f32 %v686, %v2898
        %2900 = vmatprep.mubr.bf16.mxu0 %v845
        %2901 = vmatmul.mubr.bf16.gmra.mrb[0].mxu0 %v844
        %v2902 = vpop.f32.mrb[0].mxu0
        %v2903 = vadd.f32 %v682, %v2902
        %v2904 = vpop.f32.mrb[0].mxu0
        %v2905 = vadd.f32 %v686, %v2904
        %v2906 = vpop.f32.mrb[0].mxu0
        %v2907 = vadd.f32 %v682, %v2906
        %v2908 = vpop.f32.mrb[0].mxu0
        %v2909 = vadd.f32 %v686, %v2908
        %2910 = vmatprep.mubr.bf16.mxu0 %v850
        %2911 = vmatmul.mubr.bf16.gmra.mrb[0].mxu0 %v849
        %v2912 = vpop.f32.mrb[0].mxu0
        %v2913 = vadd.f32 %v682, %v2912
        %v2914 = vpop.f32.mrb[0].mxu0
        %v2915 = vadd.f32 %v686, %v2914
        %v2916 = vpop.f32.mrb[0].mxu0
        %v2917 = vadd.f32 %v682, %v2916
        %v2918 = vpop.f32.mrb[0].mxu0
        %v2919 = vadd.f32 %v686, %v2918
        %2920 = vmatprep.mubr.bf16.mxu0 %v855
        %2921 = vmatmul.mubr.bf16.gmra.mrb[0].mxu0 %v854
        %v2922 = vpop.f32.mrb[0].mxu0
        %v2923 = vadd.f32 %v682, %v2922
        %v2924 = vpop.f32.mrb[0].mxu0
        %v2925 = vadd.f32 %v686, %v2924
        %v2926 = vpop.f32.mrb[0].mxu0
        %v2927 = vadd.f32 %v682, %v2926
        %v2928 = vpop.f32.mrb[0].mxu0
        %v2929 = vadd.f32 %v686, %v2928
        %2930 = vmatprep.mubr.bf16.mxu0 %v860
        %2931 = vmatmul.mubr.bf16.gmra.mrb[0].mxu0 %v859
        %v2932 = vpop.f32.mrb[0].mxu0
        %v2933 = vadd.f32 %v682, %v2932
        %v2934 = vpop.f32.mrb[0].mxu0
        %v2935 = vadd.f32 %v686, %v2934
        %v2936 = vpop.f32.mrb[0].mxu0
        %v2937 = vadd.f32 %v682, %v2936
        %v2938 = vpop.f32.mrb[0].mxu0
        %v2939 = vadd.f32 %v686, %v2938
        %2940 = vmatprep.mubr.bf16.mxu0 %v865
        %2941 = vmatmul.mubr.bf16.gmra.mrb[0].mxu0 %v864
        %v2942 = vpop.f32.mrb[0].mxu0
        %v2943 = vadd.f32 %v682, %v2942
        %v2944 = vpop.f32.mrb[0].mxu0
        %v2945 = vadd.f32 %v686, %v2944
        %v2946 = vpop.f32.mrb[0].mxu0
        %v2947 = vadd.f32 %v682, %v2946
        %v2948 = vpop.f32.mrb[0].mxu0
        %v2949 = vadd.f32 %v686, %v2948
        %2950 = vmatprep.mubr.bf16.mxu0 %v870
        %2951 = vmatmul.mubr.bf16.gmra.mrb[0].mxu0 %v869
        %v2952 = vpop.f32.mrb[0].mxu0
        %v2953 = vadd.f32 %v682, %v2952
        %v2954 = vpop.f32.mrb[0].mxu0
        %v2955 = vadd.f32 %v686, %v2954
        %v2956 = vpop.f32.mrb[0].mxu0
        %v2957 = vadd.f32 %v682, %v2956
        %v2958 = vpop.f32.mrb[0].mxu0
        %v2959 = vadd.f32 %v686, %v2958
        %2960 = vmatprep.mubr.bf16.mxu0 %v875
        %2961 = vmatmul.mubr.bf16.gmra.mrb[0].mxu0 %v874
        %v2962 = vpop.f32.mrb[0].mxu0
        %v2963 = vadd.f32 %v682, %v2962
        %v2964 = vpop.f32.mrb[0].mxu0
        %v2965 = vadd.f32 %v686, %v2964
        %v2966 = vpop.f32.mrb[0].mxu0
        %v2967 = vadd.f32 %v682, %v2966
        %v2968 = vpop.f32.mrb[0].mxu0
        %v2969 = vadd.f32 %v686, %v2968
        %2970 = vdwg.mxu0
        %2971 = vmatprep.subr.bf16.mxu0 %v2010
        %2972 = vmatpush1.bf16.msra.mxu0 %v2009
        %2973 = vmatprep.subr.bf16.mxu0 %v2018
        %2974 = vmatpush1.bf16.msra.mxu0 %v2017
        %2975 = vmatprep.subr.bf16.mxu0 %v2026
        %2976 = vmatpush1.bf16.msra.mxu0 %v2025
        %2977 = vmatprep.subr.bf16.mxu0 %v2034
        %2978 = vmatpush1.bf16.msra.mxu0 %v2033
        %2979 = vmatprep.subr.bf16.mxu0 %v2042
        %2980 = vmatpush1.bf16.msra.mxu0 %v2041
        %2981 = vmatprep.subr.bf16.mxu0 %v2050
        %2982 = vmatpush1.bf16.msra.mxu0 %v2049
        %2983 = vmatprep.subr.bf16.mxu0 %v2058
        %2984 = vmatpush1.bf16.msra.mxu0 %v2057
        %2985 = vmatprep.subr.bf16.mxu0 %v2066
        %2986 = vmatpush1.bf16.msra.mxu0 %v2065
        %2987 = vmatprep.subr.bf16.mxu0 %v2074
        %2988 = vmatpush1.bf16.msra.mxu0 %v2073
        %2989 = vmatprep.subr.bf16.mxu0 %v2082
        %2990 = vmatpush1.bf16.msra.mxu0 %v2081
        %2991 = vmatprep.subr.bf16.mxu0 %v2090
        %2992 = vmatpush1.bf16.msra.mxu0 %v2089
        %2993 = vmatprep.subr.bf16.mxu0 %v2098
        %2994 = vmatpush1.bf16.msra.mxu0 %v2097
        %2995 = vmatprep.subr.bf16.mxu0 %v2106
        %2996 = vmatpush1.bf16.msra.mxu0 %v2105
        %2997 = vmatprep.subr.bf16.mxu0 %v2114
        %2998 = vmatpush1.bf16.msra.mxu0 %v2113
        %2999 = vmatprep.subr.bf16.mxu0 %v2122
        %3000 = vmatpush1.bf16.msra.mxu0 %v2121
        %3001 = vmatprep.subr.bf16.mxu0 %v2130
        %3002 = vmatpush1.bf16.msra.mxu0 %v2129
        %3003 = vmatprep.mubr.bf16.mxu0 %v842
        %3004 = vmatmul.mubr.bf16.gmra.mrb[0].mxu0 %v841
        %v3005 = vpop.f32.mrb[0].mxu0
        %v3006 = vadd.f32 %v2893, %v3005
        %v3007 = vpop.f32.mrb[0].mxu0
        %v3008 = vadd.f32 %v2895, %v3007
        %v3009 = vpop.f32.mrb[0].mxu0
        %v3010 = vadd.f32 %v2897, %v3009
        %v3011 = vpop.f32.mrb[0].mxu0
        %v3012 = vadd.f32 %v2899, %v3011
        %3013 = vmatprep.mubr.bf16.mxu0 %v847
        %3014 = vmatmul.mubr.bf16.gmra.mrb[0].mxu0 %v846
        %v3015 = vpop.f32.mrb[0].mxu0
        %v3016 = vadd.f32 %v2903, %v3015
        %v3017 = vpop.f32.mrb[0].mxu0
        %v3018 = vadd.f32 %v2905, %v3017
        %v3019 = vpop.f32.mrb[0].mxu0
        %v3020 = vadd.f32 %v2907, %v3019
        %v3021 = vpop.f32.mrb[0].mxu0
        %v3022 = vadd.f32 %v2909, %v3021
        %3023 = vmatprep.mubr.bf16.mxu0 %v852
        %3024 = vmatmul.mubr.bf16.gmra.mrb[0].mxu0 %v851
        %v3025 = vpop.f32.mrb[0].mxu0
        %v3026 = vadd.f32 %v2913, %v3025
        %v3027 = vpop.f32.mrb[0].mxu0
        %v3028 = vadd.f32 %v2915, %v3027
        %v3029 = vpop.f32.mrb[0].mxu0
        %v3030 = vadd.f32 %v2917, %v3029
        %v3031 = vpop.f32.mrb[0].mxu0
        %v3032 = vadd.f32 %v2919, %v3031
        %3033 = vmatprep.mubr.bf16.mxu0 %v857
        %3034 = vmatmul.mubr.bf16.gmra.mrb[0].mxu0 %v856
        %v3035 = vpop.f32.mrb[0].mxu0
        %v3036 = vadd.f32 %v2923, %v3035
        %v3037 = vpop.f32.mrb[0].mxu0
        %v3038 = vadd.f32 %v2925, %v3037
        %v3039 = vpop.f32.mrb[0].mxu0
        %v3040 = vadd.f32 %v2927, %v3039
        %v3041 = vpop.f32.mrb[0].mxu0
        %v3042 = vadd.f32 %v2929, %v3041
        %3043 = vmatprep.mubr.bf16.mxu0 %v862
        %3044 = vmatmul.mubr.bf16.gmra.mrb[0].mxu0 %v861
        %v3045 = vpop.f32.mrb[0].mxu0
        %v3046 = vadd.f32 %v2933, %v3045
        %v3047 = vpop.f32.mrb[0].mxu0
        %v3048 = vadd.f32 %v2935, %v3047
        %v3049 = vpop.f32.mrb[0].mxu0
        %v3050 = vadd.f32 %v2937, %v3049
        %v3051 = vpop.f32.mrb[0].mxu0
        %v3052 = vadd.f32 %v2939, %v3051
        %3053 = vmatprep.mubr.bf16.mxu0 %v867
        %3054 = vmatmul.mubr.bf16.gmra.mrb[0].mxu0 %v866
        %v3055 = vpop.f32.mrb[0].mxu0
        %v3056 = vadd.f32 %v2943, %v3055
        %v3057 = vpop.f32.mrb[0].mxu0
        %v3058 = vadd.f32 %v2945, %v3057
        %v3059 = vpop.f32.mrb[0].mxu0
        %v3060 = vadd.f32 %v2947, %v3059
        %v3061 = vpop.f32.mrb[0].mxu0
        %v3062 = vadd.f32 %v2949, %v3061
        %3063 = vmatprep.mubr.bf16.mxu0 %v872
        %3064 = vmatmul.mubr.bf16.gmra.mrb[0].mxu0 %v871
        %v3065 = vpop.f32.mrb[0].mxu0
        %v3066 = vadd.f32 %v2953, %v3065
        %v3067 = vpop.f32.mrb[0].mxu0
        %v3068 = vadd.f32 %v2955, %v3067
        %v3069 = vpop.f32.mrb[0].mxu0
        %v3070 = vadd.f32 %v2957, %v3069
        %v3071 = vpop.f32.mrb[0].mxu0
        %v3072 = vadd.f32 %v2959, %v3071
        %3073 = vmatprep.mubr.bf16.mxu0 %v877
        %3074 = vmatmul.mubr.bf16.gmra.mrb[0].mxu0 %v876
        %v3075 = vpop.f32.mrb[0].mxu0
        %v3076 = vadd.f32 %v2963, %v3075
        %v3077 = vpop.f32.mrb[0].mxu0
        %v3078 = vadd.f32 %v2965, %v3077
        %v3079 = vpop.f32.mrb[0].mxu0
        %v3080 = vadd.f32 %v2967, %v3079
        %v3081 = vpop.f32.mrb[0].mxu0
        %v3082 = vadd.f32 %v2969, %v3081
        %3083 = vdwg.mxu0
        %3084 = vmatprep.subr.bf16.mxu0 %v2138
        %3085 = vmatpush1.bf16.msra.mxu0 %v2137
        %3086 = vmatprep.subr.bf16.mxu0 %v2146
        %3087 = vmatpush1.bf16.msra.mxu0 %v2145
        %3088 = vmatprep.subr.bf16.mxu0 %v2154
        %3089 = vmatpush1.bf16.msra.mxu0 %v2153
        %3090 = vmatprep.subr.bf16.mxu0 %v2162
        %3091 = vmatpush1.bf16.msra.mxu0 %v2161
        %3092 = vmatprep.subr.bf16.mxu0 %v2170
        %3093 = vmatpush1.bf16.msra.mxu0 %v2169
        %3094 = vmatprep.subr.bf16.mxu0 %v2178
        %3095 = vmatpush1.bf16.msra.mxu0 %v2177
        %3096 = vmatprep.subr.bf16.mxu0 %v2186
        %3097 = vmatpush1.bf16.msra.mxu0 %v2185
        %3098 = vmatprep.subr.bf16.mxu0 %v2194
        %3099 = vmatpush1.bf16.msra.mxu0 %v2193
        %3100 = vmatprep.subr.bf16.mxu0 0
        %3101 = vmatpush1.bf16.msra.mxu0 0
        %3102 = vmatprep.subr.bf16.mxu0 0
        %3103 = vmatpush1.bf16.msra.mxu0 0
        %3104 = vmatprep.subr.bf16.mxu0 0
        %3105 = vmatpush1.bf16.msra.mxu0 0
        %3106 = vmatprep.subr.bf16.mxu0 0
        %3107 = vmatpush1.bf16.msra.mxu0 0
        %3108 = vmatprep.subr.bf16.mxu0 0
        %3109 = vmatpush1.bf16.msra.mxu0 0
        %3110 = vmatprep.subr.bf16.mxu0 0
        %3111 = vmatpush1.bf16.msra.mxu0 0
        %3112 = vmatprep.subr.bf16.mxu0 0
        %3113 = vmatpush1.bf16.msra.mxu0 0
        %3114 = vmatprep.subr.bf16.mxu0 0
        %3115 = vmatpush1.bf16.msra.mxu0 0
        %3116 = vmatprep.mubr.bf16.mxu0 0
        %3117 = vmatmul.mubr.bf16.gmra.mrb[0].mxu0 %v843
        %v3118 = vpop.f32.mrb[0].mxu0
        %v3119 = vadd.f32 %v3006, %v3118
        %v3120 = vpop.f32.mrb[0].mxu0
        %v3121 = vadd.f32 %v3008, %v3120
        %v3122 = vpop.f32.mrb[0].mxu0
        %v3123 = vadd.f32 %v3010, %v3122
        %v3124 = vpop.f32.mrb[0].mxu0
        %v3125 = vadd.f32 %v3012, %v3124
        %3126 = vmatprep.mubr.bf16.mxu0 0
        %3127 = vmatmul.mubr.bf16.gmra.mrb[0].mxu0 %v848
        %v3128 = vpop.f32.mrb[0].mxu0
        %v3129 = vadd.f32 %v3016, %v3128
        %v3130 = vpop.f32.mrb[0].mxu0
        %v3131 = vadd.f32 %v3018, %v3130
        %v3132 = vpop.f32.mrb[0].mxu0
        %v3133 = vadd.f32 %v3020, %v3132
        %v3134 = vpop.f32.mrb[0].mxu0
        %v3135 = vadd.f32 %v3022, %v3134
        %3136 = vmatprep.mubr.bf16.mxu0 0
        %3137 = vmatmul.mubr.bf16.gmra.mrb[0].mxu0 %v853
        %v3138 = vpop.f32.mrb[0].mxu0
        %v3139 = vadd.f32 %v3026, %v3138
        %v3140 = vpop.f32.mrb[0].mxu0
        %v3141 = vadd.f32 %v3028, %v3140
        %v3142 = vpop.f32.mrb[0].mxu0
        %v3143 = vadd.f32 %v3030, %v3142
        %v3144 = vpop.f32.mrb[0].mxu0
        %v3145 = vadd.f32 %v3032, %v3144
        %3146 = vmatprep.mubr.bf16.mxu0 0
        %3147 = vmatmul.mubr.bf16.gmra.mrb[0].mxu0 %v858
        %v3148 = vpop.f32.mrb[0].mxu0
        %v3149 = vadd.f32 %v3036, %v3148
        %v3150 = vpop.f32.mrb[0].mxu0
        %v3151 = vadd.f32 %v3038, %v3150
        %v3152 = vpop.f32.mrb[0].mxu0
        %v3153 = vadd.f32 %v3040, %v3152
        %v3154 = vpop.f32.mrb[0].mxu0
        %v3155 = vadd.f32 %v3042, %v3154
        %3156 = vmatprep.mubr.bf16.mxu0 0
        %3157 = vmatmul.mubr.bf16.gmra.mrb[0].mxu0 %v863
        %v3158 = vpop.f32.mrb[0].mxu0
        %v3159 = vadd.f32 %v3046, %v3158
        %v3160 = vpop.f32.mrb[0].mxu0
        %v3161 = vadd.f32 %v3048, %v3160
        %v3162 = vpop.f32.mrb[0].mxu0
        %v3163 = vadd.f32 %v3050, %v3162
        %v3164 = vpop.f32.mrb[0].mxu0
        %v3165 = vadd.f32 %v3052, %v3164
        %3166 = vmatprep.mubr.bf16.mxu0 0
        %3167 = vmatmul.mubr.bf16.gmra.mrb[0].mxu0 %v868
        %v3168 = vpop.f32.mrb[0].mxu0
        %v3169 = vadd.f32 %v3056, %v3168
        %v3170 = vpop.f32.mrb[0].mxu0
        %v3171 = vadd.f32 %v3058, %v3170
        %v3172 = vpop.f32.mrb[0].mxu0
        %v3173 = vadd.f32 %v3060, %v3172
        %v3174 = vpop.f32.mrb[0].mxu0
        %v3175 = vadd.f32 %v3062, %v3174
        %3176 = vmatprep.mubr.bf16.mxu0 0
        %3177 = vmatmul.mubr.bf16.gmra.mrb[0].mxu0 %v873
        %v3178 = vpop.f32.mrb[0].mxu0
        %v3179 = vadd.f32 %v3066, %v3178
        %v3180 = vpop.f32.mrb[0].mxu0
        %v3181 = vadd.f32 %v3068, %v3180
        %v3182 = vpop.f32.mrb[0].mxu0
        %v3183 = vadd.f32 %v3070, %v3182
        %v3184 = vpop.f32.mrb[0].mxu0
        %v3185 = vadd.f32 %v3072, %v3184
        %3186 = vmatprep.mubr.bf16.mxu0 0
        %3187 = vmatmul.mubr.bf16.gmra.mrb[0].mxu0 %v878
        %v3188 = vpop.f32.mrb[0].mxu0
        %v3189 = vadd.f32 %v3076, %v3188
        %v3190 = vpop.f32.mrb[0].mxu0
        %v3191 = vadd.f32 %v3078, %v3190
        %v3192 = vpop.f32.mrb[0].mxu0
        %v3193 = vadd.f32 %v3080, %v3192
        %v3194 = vpop.f32.mrb[0].mxu0
        %v3195 = vadd.f32 %v3082, %v3194
        %3196 = vdwg.mxu0
        %3197 = vmatprep.subr.bf16.mxu0 %v1884
        %3198 = vmatpush1.bf16.msra.mxu0 %v1883
        %3199 = vmatprep.subr.bf16.mxu0 %v1892
        %3200 = vmatpush1.bf16.msra.mxu0 %v1891
        %3201 = vmatprep.subr.bf16.mxu0 %v1900
        %3202 = vmatpush1.bf16.msra.mxu0 %v1899
        %3203 = vmatprep.subr.bf16.mxu0 %v1908
        %3204 = vmatpush1.bf16.msra.mxu0 %v1907
        %3205 = vmatprep.subr.bf16.mxu0 %v1916
        %3206 = vmatpush1.bf16.msra.mxu0 %v1915
        %3207 = vmatprep.subr.bf16.mxu0 %v1924
        %3208 = vmatpush1.bf16.msra.mxu0 %v1923
        %3209 = vmatprep.subr.bf16.mxu0 %v1932
        %3210 = vmatpush1.bf16.msra.mxu0 %v1931
        %3211 = vmatprep.subr.bf16.mxu0 %v1940
        %3212 = vmatpush1.bf16.msra.mxu0 %v1939
        %3213 = vmatprep.subr.bf16.mxu0 %v1948
        %3214 = vmatpush1.bf16.msra.mxu0 %v1947
        %3215 = vmatprep.subr.bf16.mxu0 %v1956
        %3216 = vmatpush1.bf16.msra.mxu0 %v1955
        %3217 = vmatprep.subr.bf16.mxu0 %v1964
        %3218 = vmatpush1.bf16.msra.mxu0 %v1963
        %3219 = vmatprep.subr.bf16.mxu0 %v1972
        %3220 = vmatpush1.bf16.msra.mxu0 %v1971
        %3221 = vmatprep.subr.bf16.mxu0 %v1980
        %3222 = vmatpush1.bf16.msra.mxu0 %v1979
        %3223 = vmatprep.subr.bf16.mxu0 %v1988
        %3224 = vmatpush1.bf16.msra.mxu0 %v1987
        %3225 = vmatprep.subr.bf16.mxu0 %v1996
        %3226 = vmatpush1.bf16.msra.mxu0 %v1995
        %3227 = vmatprep.subr.bf16.mxu0 %v2004
        %3228 = vmatpush1.bf16.msra.mxu0 %v2003
        %3229 = vmatprep.mubr.bf16.mxu0 %v840
        %3230 = vmatmul.mubr.bf16.gmra.mrb[0].mxu0 %v839
        %v3231 = vpop.f32.mrb[0].mxu0
        %v3232 = vadd.f32 %v690, %v3231
        %v3233 = vpop.f32.mrb[0].mxu0
        %v3234 = vadd.f32 %v694, %v3233
        %v3235 = vpop.f32.mrb[0].mxu0
        %v3236 = vadd.f32 %v690, %v3235
        %v3237 = vpop.f32.mrb[0].mxu0
        %v3238 = vadd.f32 %v694, %v3237
        %3239 = vmatprep.mubr.bf16.mxu0 %v845
        %3240 = vmatmul.mubr.bf16.gmra.mrb[0].mxu0 %v844
        %v3241 = vpop.f32.mrb[0].mxu0
        %v3242 = vadd.f32 %v690, %v3241
        %v3243 = vpop.f32.mrb[0].mxu0
        %v3244 = vadd.f32 %v694, %v3243
        %v3245 = vpop.f32.mrb[0].mxu0
        %v3246 = vadd.f32 %v690, %v3245
        %v3247 = vpop.f32.mrb[0].mxu0
        %v3248 = vadd.f32 %v694, %v3247
        %3249 = vmatprep.mubr.bf16.mxu0 %v850
        %3250 = vmatmul.mubr.bf16.gmra.mrb[0].mxu0 %v849
        %v3251 = vpop.f32.mrb[0].mxu0
        %v3252 = vadd.f32 %v690, %v3251
        %v3253 = vpop.f32.mrb[0].mxu0
        %v3254 = vadd.f32 %v694, %v3253
        %v3255 = vpop.f32.mrb[0].mxu0
        %v3256 = vadd.f32 %v690, %v3255
        %v3257 = vpop.f32.mrb[0].mxu0
        %v3258 = vadd.f32 %v694, %v3257
        %3259 = vmatprep.mubr.bf16.mxu0 %v855
        %3260 = vmatmul.mubr.bf16.gmra.mrb[0].mxu0 %v854
        %v3261 = vpop.f32.mrb[0].mxu0
        %v3262 = vadd.f32 %v690, %v3261
        %v3263 = vpop.f32.mrb[0].mxu0
        %v3264 = vadd.f32 %v694, %v3263
        %v3265 = vpop.f32.mrb[0].mxu0
        %v3266 = vadd.f32 %v690, %v3265
        %v3267 = vpop.f32.mrb[0].mxu0
        %v3268 = vadd.f32 %v694, %v3267
        %3269 = vmatprep.mubr.bf16.mxu0 %v860
        %3270 = vmatmul.mubr.bf16.gmra.mrb[0].mxu0 %v859
        %v3271 = vpop.f32.mrb[0].mxu0
        %v3272 = vadd.f32 %v690, %v3271
        %v3273 = vpop.f32.mrb[0].mxu0
        %v3274 = vadd.f32 %v694, %v3273
        %v3275 = vpop.f32.mrb[0].mxu0
        %v3276 = vadd.f32 %v690, %v3275
        %v3277 = vpop.f32.mrb[0].mxu0
        %v3278 = vadd.f32 %v694, %v3277
        %3279 = vmatprep.mubr.bf16.mxu0 %v865
        %3280 = vmatmul.mubr.bf16.gmra.mrb[0].mxu0 %v864
        %v3281 = vpop.f32.mrb[0].mxu0
        %v3282 = vadd.f32 %v690, %v3281
        %v3283 = vpop.f32.mrb[0].mxu0
        %v3284 = vadd.f32 %v694, %v3283
        %v3285 = vpop.f32.mrb[0].mxu0
        %v3286 = vadd.f32 %v690, %v3285
        %v3287 = vpop.f32.mrb[0].mxu0
        %v3288 = vadd.f32 %v694, %v3287
        %3289 = vmatprep.mubr.bf16.mxu0 %v870
        %3290 = vmatmul.mubr.bf16.gmra.mrb[0].mxu0 %v869
        %v3291 = vpop.f32.mrb[0].mxu0
        %v3292 = vadd.f32 %v690, %v3291
        %v3293 = vpop.f32.mrb[0].mxu0
        %v3294 = vadd.f32 %v694, %v3293
        %v3295 = vpop.f32.mrb[0].mxu0
        %v3296 = vadd.f32 %v690, %v3295
        %v3297 = vpop.f32.mrb[0].mxu0
        %v3298 = vadd.f32 %v694, %v3297
        %3299 = vmatprep.mubr.bf16.mxu0 %v875
        %3300 = vmatmul.mubr.bf16.gmra.mrb[0].mxu0 %v874
        %v3301 = vpop.f32.mrb[0].mxu0
        %v3302 = vadd.f32 %v690, %v3301
        %v3303 = vpop.f32.mrb[0].mxu0
        %v3304 = vadd.f32 %v694, %v3303
        %v3305 = vpop.f32.mrb[0].mxu0
        %v3306 = vadd.f32 %v690, %v3305
        %v3307 = vpop.f32.mrb[0].mxu0
        %v3308 = vadd.f32 %v694, %v3307
        %3309 = vdwg.mxu0
        %3310 = vmatprep.subr.bf16.mxu0 %v2012
        %3311 = vmatpush1.bf16.msra.mxu0 %v2011
        %3312 = vmatprep.subr.bf16.mxu0 %v2020
        %3313 = vmatpush1.bf16.msra.mxu0 %v2019
        %3314 = vmatprep.subr.bf16.mxu0 %v2028
        %3315 = vmatpush1.bf16.msra.mxu0 %v2027
        %3316 = vmatprep.subr.bf16.mxu0 %v2036
        %3317 = vmatpush1.bf16.msra.mxu0 %v2035
        %3318 = vmatprep.subr.bf16.mxu0 %v2044
        %3319 = vmatpush1.bf16.msra.mxu0 %v2043
        %3320 = vmatprep.subr.bf16.mxu0 %v2052
        %3321 = vmatpush1.bf16.msra.mxu0 %v2051
        %3322 = vmatprep.subr.bf16.mxu0 %v2060
        %3323 = vmatpush1.bf16.msra.mxu0 %v2059
        %3324 = vmatprep.subr.bf16.mxu0 %v2068
        %3325 = vmatpush1.bf16.msra.mxu0 %v2067
        %3326 = vmatprep.subr.bf16.mxu0 %v2076
        %3327 = vmatpush1.bf16.msra.mxu0 %v2075
        %3328 = vmatprep.subr.bf16.mxu0 %v2084
        %3329 = vmatpush1.bf16.msra.mxu0 %v2083
        %3330 = vmatprep.subr.bf16.mxu0 %v2092
        %3331 = vmatpush1.bf16.msra.mxu0 %v2091
        %3332 = vmatprep.subr.bf16.mxu0 %v2100
        %3333 = vmatpush1.bf16.msra.mxu0 %v2099
        %3334 = vmatprep.subr.bf16.mxu0 %v2108
        %3335 = vmatpush1.bf16.msra.mxu0 %v2107
        %3336 = vmatprep.subr.bf16.mxu0 %v2116
        %3337 = vmatpush1.bf16.msra.mxu0 %v2115
        %3338 = vmatprep.subr.bf16.mxu0 %v2124
        %3339 = vmatpush1.bf16.msra.mxu0 %v2123
        %3340 = vmatprep.subr.bf16.mxu0 %v2132
        %3341 = vmatpush1.bf16.msra.mxu0 %v2131
        %3342 = vmatprep.mubr.bf16.mxu0 %v842
        %3343 = vmatmul.mubr.bf16.gmra.mrb[0].mxu0 %v841
        %v3344 = vpop.f32.mrb[0].mxu0
        %v3345 = vadd.f32 %v3232, %v3344
        %v3346 = vpop.f32.mrb[0].mxu0
        %v3347 = vadd.f32 %v3234, %v3346
        %v3348 = vpop.f32.mrb[0].mxu0
        %v3349 = vadd.f32 %v3236, %v3348
        %v3350 = vpop.f32.mrb[0].mxu0
        %v3351 = vadd.f32 %v3238, %v3350
        %3352 = vmatprep.mubr.bf16.mxu0 %v847
        %3353 = vmatmul.mubr.bf16.gmra.mrb[0].mxu0 %v846
        %v3354 = vpop.f32.mrb[0].mxu0
        %v3355 = vadd.f32 %v3242, %v3354
        %v3356 = vpop.f32.mrb[0].mxu0
        %v3357 = vadd.f32 %v3244, %v3356
        %v3358 = vpop.f32.mrb[0].mxu0
        %v3359 = vadd.f32 %v3246, %v3358
        %v3360 = vpop.f32.mrb[0].mxu0
        %v3361 = vadd.f32 %v3248, %v3360
        %3362 = vmatprep.mubr.bf16.mxu0 %v852
        %3363 = vmatmul.mubr.bf16.gmra.mrb[0].mxu0 %v851
        %v3364 = vpop.f32.mrb[0].mxu0
        %v3365 = vadd.f32 %v3252, %v3364
        %v3366 = vpop.f32.mrb[0].mxu0
        %v3367 = vadd.f32 %v3254, %v3366
        %v3368 = vpop.f32.mrb[0].mxu0
        %v3369 = vadd.f32 %v3256, %v3368
        %v3370 = vpop.f32.mrb[0].mxu0
        %v3371 = vadd.f32 %v3258, %v3370
        %3372 = vmatprep.mubr.bf16.mxu0 %v857
        %3373 = vmatmul.mubr.bf16.gmra.mrb[0].mxu0 %v856
        %v3374 = vpop.f32.mrb[0].mxu0
        %v3375 = vadd.f32 %v3262, %v3374
        %v3376 = vpop.f32.mrb[0].mxu0
        %v3377 = vadd.f32 %v3264, %v3376
        %v3378 = vpop.f32.mrb[0].mxu0
        %v3379 = vadd.f32 %v3266, %v3378
        %v3380 = vpop.f32.mrb[0].mxu0
        %v3381 = vadd.f32 %v3268, %v3380
        %3382 = vmatprep.mubr.bf16.mxu0 %v862
        %3383 = vmatmul.mubr.bf16.gmra.mrb[0].mxu0 %v861
        %v3384 = vpop.f32.mrb[0].mxu0
        %v3385 = vadd.f32 %v3272, %v3384
        %v3386 = vpop.f32.mrb[0].mxu0
        %v3387 = vadd.f32 %v3274, %v3386
        %v3388 = vpop.f32.mrb[0].mxu0
        %v3389 = vadd.f32 %v3276, %v3388
        %v3390 = vpop.f32.mrb[0].mxu0
        %v3391 = vadd.f32 %v3278, %v3390
        %3392 = vmatprep.mubr.bf16.mxu0 %v867
        %3393 = vmatmul.mubr.bf16.gmra.mrb[0].mxu0 %v866
        %v3394 = vpop.f32.mrb[0].mxu0
        %v3395 = vadd.f32 %v3282, %v3394
        %v3396 = vpop.f32.mrb[0].mxu0
        %v3397 = vadd.f32 %v3284, %v3396
        %v3398 = vpop.f32.mrb[0].mxu0
        %v3399 = vadd.f32 %v3286, %v3398
        %v3400 = vpop.f32.mrb[0].mxu0
        %v3401 = vadd.f32 %v3288, %v3400
        %3402 = vmatprep.mubr.bf16.mxu0 %v872
        %3403 = vmatmul.mubr.bf16.gmra.mrb[0].mxu0 %v871
        %v3404 = vpop.f32.mrb[0].mxu0
        %v3405 = vadd.f32 %v3292, %v3404
        %v3406 = vpop.f32.mrb[0].mxu0
        %v3407 = vadd.f32 %v3294, %v3406
        %v3408 = vpop.f32.mrb[0].mxu0
        %v3409 = vadd.f32 %v3296, %v3408
        %v3410 = vpop.f32.mrb[0].mxu0
        %v3411 = vadd.f32 %v3298, %v3410
        %3412 = vmatprep.mubr.bf16.mxu0 %v877
        %3413 = vmatmul.mubr.bf16.gmra.mrb[0].mxu0 %v876
        %v3414 = vpop.f32.mrb[0].mxu0
        %v3415 = vadd.f32 %v3302, %v3414
        %v3416 = vpop.f32.mrb[0].mxu0
        %v3417 = vadd.f32 %v3304, %v3416
        %v3418 = vpop.f32.mrb[0].mxu0
        %v3419 = vadd.f32 %v3306, %v3418
        %v3420 = vpop.f32.mrb[0].mxu0
        %v3421 = vadd.f32 %v3308, %v3420
        %3422 = vdwg.mxu0
        %3423 = vmatprep.subr.bf16.mxu0 %v2140
        %3424 = vmatpush1.bf16.msra.mxu0 %v2139
        %3425 = vmatprep.subr.bf16.mxu0 %v2148
        %3426 = vmatpush1.bf16.msra.mxu0 %v2147
        %3427 = vmatprep.subr.bf16.mxu0 %v2156
        %3428 = vmatpush1.bf16.msra.mxu0 %v2155
        %3429 = vmatprep.subr.bf16.mxu0 %v2164
        %3430 = vmatpush1.bf16.msra.mxu0 %v2163
        %3431 = vmatprep.subr.bf16.mxu0 %v2172
        %3432 = vmatpush1.bf16.msra.mxu0 %v2171
        %3433 = vmatprep.subr.bf16.mxu0 %v2180
        %3434 = vmatpush1.bf16.msra.mxu0 %v2179
        %3435 = vmatprep.subr.bf16.mxu0 %v2188
        %3436 = vmatpush1.bf16.msra.mxu0 %v2187
        %3437 = vmatprep.subr.bf16.mxu0 %v2196
        %3438 = vmatpush1.bf16.msra.mxu0 %v2195
        %3439 = vmatprep.subr.bf16.mxu0 0
        %3440 = vmatpush1.bf16.msra.mxu0 0
        %3441 = vmatprep.subr.bf16.mxu0 0
        %3442 = vmatpush1.bf16.msra.mxu0 0
        %3443 = vmatprep.subr.bf16.mxu0 0
        %3444 = vmatpush1.bf16.msra.mxu0 0
        %3445 = vmatprep.subr.bf16.mxu0 0
        %3446 = vmatpush1.bf16.msra.mxu0 0
        %3447 = vmatprep.subr.bf16.mxu0 0
        %3448 = vmatpush1.bf16.msra.mxu0 0
        %3449 = vmatprep.subr.bf16.mxu0 0
        %3450 = vmatpush1.bf16.msra.mxu0 0
        %3451 = vmatprep.subr.bf16.mxu0 0
        %3452 = vmatpush1.bf16.msra.mxu0 0
        %3453 = vmatprep.subr.bf16.mxu0 0
        %3454 = vmatpush1.bf16.msra.mxu0 0
        %3455 = vmatprep.mubr.bf16.mxu0 0
        %3456 = vmatmul.mubr.bf16.gmra.mrb[0].mxu0 %v843
        %v3457 = vpop.f32.mrb[0].mxu0
        %v3458 = vadd.f32 %v3345, %v3457
        %v3459 = vpop.f32.mrb[0].mxu0
        %v3460 = vadd.f32 %v3347, %v3459
        %v3461 = vpop.f32.mrb[0].mxu0
        %v3462 = vadd.f32 %v3349, %v3461
        %v3463 = vpop.f32.mrb[0].mxu0
        %v3464 = vadd.f32 %v3351, %v3463
        %3465 = vmatprep.mubr.bf16.mxu0 0
        %3466 = vmatmul.mubr.bf16.gmra.mrb[0].mxu0 %v848
        %v3467 = vpop.f32.mrb[0].mxu0
        %v3468 = vadd.f32 %v3355, %v3467
        %v3469 = vpop.f32.mrb[0].mxu0
        %v3470 = vadd.f32 %v3357, %v3469
        %v3471 = vpop.f32.mrb[0].mxu0
        %v3472 = vadd.f32 %v3359, %v3471
        %v3473 = vpop.f32.mrb[0].mxu0
        %v3474 = vadd.f32 %v3361, %v3473
        %3475 = vmatprep.mubr.bf16.mxu0 0
        %3476 = vmatmul.mubr.bf16.gmra.mrb[0].mxu0 %v853
        %v3477 = vpop.f32.mrb[0].mxu0
        %v3478 = vadd.f32 %v3365, %v3477
        %v3479 = vpop.f32.mrb[0].mxu0
        %v3480 = vadd.f32 %v3367, %v3479
        %v3481 = vpop.f32.mrb[0].mxu0
        %v3482 = vadd.f32 %v3369, %v3481
        %v3483 = vpop.f32.mrb[0].mxu0
        %v3484 = vadd.f32 %v3371, %v3483
        %3485 = vmatprep.mubr.bf16.mxu0 0
        %3486 = vmatmul.mubr.bf16.gmra.mrb[0].mxu0 %v858
        %v3487 = vpop.f32.mrb[0].mxu0
        %v3488 = vadd.f32 %v3375, %v3487
        %v3489 = vpop.f32.mrb[0].mxu0
        %v3490 = vadd.f32 %v3377, %v3489
        %v3491 = vpop.f32.mrb[0].mxu0
        %v3492 = vadd.f32 %v3379, %v3491
        %v3493 = vpop.f32.mrb[0].mxu0
        %v3494 = vadd.f32 %v3381, %v3493
        %3495 = vmatprep.mubr.bf16.mxu0 0
        %3496 = vmatmul.mubr.bf16.gmra.mrb[0].mxu0 %v863
        %v3497 = vpop.f32.mrb[0].mxu0
        %v3498 = vadd.f32 %v3385, %v3497
        %v3499 = vpop.f32.mrb[0].mxu0
        %v3500 = vadd.f32 %v3387, %v3499
        %v3501 = vpop.f32.mrb[0].mxu0
        %v3502 = vadd.f32 %v3389, %v3501
        %v3503 = vpop.f32.mrb[0].mxu0
        %v3504 = vadd.f32 %v3391, %v3503
        %3505 = vmatprep.mubr.bf16.mxu0 0
        %3506 = vmatmul.mubr.bf16.gmra.mrb[0].mxu0 %v868
        %v3507 = vpop.f32.mrb[0].mxu0
        %v3508 = vadd.f32 %v3395, %v3507
        %v3509 = vpop.f32.mrb[0].mxu0
        %v3510 = vadd.f32 %v3397, %v3509
        %v3511 = vpop.f32.mrb[0].mxu0
        %v3512 = vadd.f32 %v3399, %v3511
        %v3513 = vpop.f32.mrb[0].mxu0
        %v3514 = vadd.f32 %v3401, %v3513
        %3515 = vmatprep.mubr.bf16.mxu0 0
        %3516 = vmatmul.mubr.bf16.gmra.mrb[0].mxu0 %v873
        %v3517 = vpop.f32.mrb[0].mxu0
        %v3518 = vadd.f32 %v3405, %v3517
        %v3519 = vpop.f32.mrb[0].mxu0
        %v3520 = vadd.f32 %v3407, %v3519
        %v3521 = vpop.f32.mrb[0].mxu0
        %v3522 = vadd.f32 %v3409, %v3521
        %v3523 = vpop.f32.mrb[0].mxu0
        %v3524 = vadd.f32 %v3411, %v3523
        %3525 = vmatprep.mubr.bf16.mxu0 0
        %3526 = vmatmul.mubr.bf16.gmra.mrb[0].mxu0 %v878
        %v3527 = vpop.f32.mrb[0].mxu0
        %v3528 = vadd.f32 %v3415, %v3527
        %v3529 = vpop.f32.mrb[0].mxu0
        %v3530 = vadd.f32 %v3417, %v3529
        %v3531 = vpop.f32.mrb[0].mxu0
        %v3532 = vadd.f32 %v3419, %v3531
        %v3533 = vpop.f32.mrb[0].mxu0
        %v3534 = vadd.f32 %v3421, %v3533
        %3535 = vdwg.mxu0
        %3536 = vmatprep.subr.bf16.mxu0 %v1886
        %3537 = vmatpush1.bf16.msra.mxu0 %v1885
        %3538 = vmatprep.subr.bf16.mxu0 %v1894
        %3539 = vmatpush1.bf16.msra.mxu0 %v1893
        %3540 = vmatprep.subr.bf16.mxu0 %v1902
        %3541 = vmatpush1.bf16.msra.mxu0 %v1901
        %3542 = vmatprep.subr.bf16.mxu0 %v1910
        %3543 = vmatpush1.bf16.msra.mxu0 %v1909
        %3544 = vmatprep.subr.bf16.mxu0 %v1918
        %3545 = vmatpush1.bf16.msra.mxu0 %v1917
        %3546 = vmatprep.subr.bf16.mxu0 %v1926
        %3547 = vmatpush1.bf16.msra.mxu0 %v1925
        %3548 = vmatprep.subr.bf16.mxu0 %v1934
        %3549 = vmatpush1.bf16.msra.mxu0 %v1933
        %3550 = vmatprep.subr.bf16.mxu0 %v1942
        %3551 = vmatpush1.bf16.msra.mxu0 %v1941
        %3552 = vmatprep.subr.bf16.mxu0 %v1950
        %3553 = vmatpush1.bf16.msra.mxu0 %v1949
        %3554 = vmatprep.subr.bf16.mxu0 %v1958
        %3555 = vmatpush1.bf16.msra.mxu0 %v1957
        %3556 = vmatprep.subr.bf16.mxu0 %v1966
        %3557 = vmatpush1.bf16.msra.mxu0 %v1965
        %3558 = vmatprep.subr.bf16.mxu0 %v1974
        %3559 = vmatpush1.bf16.msra.mxu0 %v1973
        %3560 = vmatprep.subr.bf16.mxu0 %v1982
        %3561 = vmatpush1.bf16.msra.mxu0 %v1981
        %3562 = vmatprep.subr.bf16.mxu0 %v1990
        %3563 = vmatpush1.bf16.msra.mxu0 %v1989
        %3564 = vmatprep.subr.bf16.mxu0 %v1998
        %3565 = vmatpush1.bf16.msra.mxu0 %v1997
        %3566 = vmatprep.subr.bf16.mxu0 %v2006
        %3567 = vmatpush1.bf16.msra.mxu0 %v2005
        %3568 = vmatprep.mubr.bf16.mxu0 %v840
        %3569 = vmatmul.mubr.bf16.gmra.mrb[0].mxu0 %v839
        %v3570 = vpop.f32.mrb[0].mxu0
        %v3571 = vadd.f32 %v698, %v3570
        %v3572 = vpop.f32.mrb[0].mxu0
        %v3573 = vadd.f32 %v702, %v3572
        %v3574 = vpop.f32.mrb[0].mxu0
        %v3575 = vadd.f32 %v698, %v3574
        %v3576 = vpop.f32.mrb[0].mxu0
        %v3577 = vadd.f32 %v702, %v3576
        %3578 = vmatprep.mubr.bf16.mxu0 %v845
        %3579 = vmatmul.mubr.bf16.gmra.mrb[0].mxu0 %v844
        %v3580 = vpop.f32.mrb[0].mxu0
        %v3581 = vadd.f32 %v698, %v3580
        %v3582 = vpop.f32.mrb[0].mxu0
        %v3583 = vadd.f32 %v702, %v3582
        %v3584 = vpop.f32.mrb[0].mxu0
        %v3585 = vadd.f32 %v698, %v3584
        %v3586 = vpop.f32.mrb[0].mxu0
        %v3587 = vadd.f32 %v702, %v3586
        %3588 = vmatprep.mubr.bf16.mxu0 %v850
        %3589 = vmatmul.mubr.bf16.gmra.mrb[0].mxu0 %v849
        %v3590 = vpop.f32.mrb[0].mxu0
        %v3591 = vadd.f32 %v698, %v3590
        %v3592 = vpop.f32.mrb[0].mxu0
        %v3593 = vadd.f32 %v702, %v3592
        %v3594 = vpop.f32.mrb[0].mxu0
        %v3595 = vadd.f32 %v698, %v3594
        %v3596 = vpop.f32.mrb[0].mxu0
        %v3597 = vadd.f32 %v702, %v3596
        %3598 = vmatprep.mubr.bf16.mxu0 %v855
        %3599 = vmatmul.mubr.bf16.gmra.mrb[0].mxu0 %v854
        %v3600 = vpop.f32.mrb[0].mxu0
        %v3601 = vadd.f32 %v698, %v3600
        %v3602 = vpop.f32.mrb[0].mxu0
        %v3603 = vadd.f32 %v702, %v3602
        %v3604 = vpop.f32.mrb[0].mxu0
        %v3605 = vadd.f32 %v698, %v3604
        %v3606 = vpop.f32.mrb[0].mxu0
        %v3607 = vadd.f32 %v702, %v3606
        %3608 = vmatprep.mubr.bf16.mxu0 %v860
        %3609 = vmatmul.mubr.bf16.gmra.mrb[0].mxu0 %v859
        %v3610 = vpop.f32.mrb[0].mxu0
        %v3611 = vadd.f32 %v698, %v3610
        %v3612 = vpop.f32.mrb[0].mxu0
        %v3613 = vadd.f32 %v702, %v3612
        %v3614 = vpop.f32.mrb[0].mxu0
        %v3615 = vadd.f32 %v698, %v3614
        %v3616 = vpop.f32.mrb[0].mxu0
        %v3617 = vadd.f32 %v702, %v3616
        %3618 = vmatprep.mubr.bf16.mxu0 %v865
        %3619 = vmatmul.mubr.bf16.gmra.mrb[0].mxu0 %v864
        %v3620 = vpop.f32.mrb[0].mxu0
        %v3621 = vadd.f32 %v698, %v3620
        %v3622 = vpop.f32.mrb[0].mxu0
        %v3623 = vadd.f32 %v702, %v3622
        %v3624 = vpop.f32.mrb[0].mxu0
        %v3625 = vadd.f32 %v698, %v3624
        %v3626 = vpop.f32.mrb[0].mxu0
        %v3627 = vadd.f32 %v702, %v3626
        %3628 = vmatprep.mubr.bf16.mxu0 %v870
        %3629 = vmatmul.mubr.bf16.gmra.mrb[0].mxu0 %v869
        %v3630 = vpop.f32.mrb[0].mxu0
        %v3631 = vadd.f32 %v698, %v3630
        %v3632 = vpop.f32.mrb[0].mxu0
        %v3633 = vadd.f32 %v702, %v3632
        %v3634 = vpop.f32.mrb[0].mxu0
        %v3635 = vadd.f32 %v698, %v3634
        %v3636 = vpop.f32.mrb[0].mxu0
        %v3637 = vadd.f32 %v702, %v3636
        %3638 = vmatprep.mubr.bf16.mxu0 %v875
        %3639 = vmatmul.mubr.bf16.gmra.mrb[0].mxu0 %v874
        %v3640 = vpop.f32.mrb[0].mxu0
        %v3641 = vadd.f32 %v698, %v3640
        %v3642 = vpop.f32.mrb[0].mxu0
        %v3643 = vadd.f32 %v702, %v3642
        %v3644 = vpop.f32.mrb[0].mxu0
        %v3645 = vadd.f32 %v698, %v3644
        %v3646 = vpop.f32.mrb[0].mxu0
        %v3647 = vadd.f32 %v702, %v3646
        %3648 = vdwg.mxu0
        %3649 = vmatprep.subr.bf16.mxu0 %v2014
        %3650 = vmatpush1.bf16.msra.mxu0 %v2013
        %3651 = vmatprep.subr.bf16.mxu0 %v2022
        %3652 = vmatpush1.bf16.msra.mxu0 %v2021
        %3653 = vmatprep.subr.bf16.mxu0 %v2030
        %3654 = vmatpush1.bf16.msra.mxu0 %v2029
        %3655 = vmatprep.subr.bf16.mxu0 %v2038
        %3656 = vmatpush1.bf16.msra.mxu0 %v2037
        %3657 = vmatprep.subr.bf16.mxu0 %v2046
        %3658 = vmatpush1.bf16.msra.mxu0 %v2045
        %3659 = vmatprep.subr.bf16.mxu0 %v2054
        %3660 = vmatpush1.bf16.msra.mxu0 %v2053
        %3661 = vmatprep.subr.bf16.mxu0 %v2062
        %3662 = vmatpush1.bf16.msra.mxu0 %v2061
        %3663 = vmatprep.subr.bf16.mxu0 %v2070
        %3664 = vmatpush1.bf16.msra.mxu0 %v2069
        %3665 = vmatprep.subr.bf16.mxu0 %v2078
        %3666 = vmatpush1.bf16.msra.mxu0 %v2077
        %3667 = vmatprep.subr.bf16.mxu0 %v2086
        %3668 = vmatpush1.bf16.msra.mxu0 %v2085
        %3669 = vmatprep.subr.bf16.mxu0 %v2094
        %3670 = vmatpush1.bf16.msra.mxu0 %v2093
        %3671 = vmatprep.subr.bf16.mxu0 %v2102
        %3672 = vmatpush1.bf16.msra.mxu0 %v2101
        %3673 = vmatprep.subr.bf16.mxu0 %v2110
        %3674 = vmatpush1.bf16.msra.mxu0 %v2109
        %3675 = vmatprep.subr.bf16.mxu0 %v2118
        %3676 = vmatpush1.bf16.msra.mxu0 %v2117
        %3677 = vmatprep.subr.bf16.mxu0 %v2126
        %3678 = vmatpush1.bf16.msra.mxu0 %v2125
        %3679 = vmatprep.subr.bf16.mxu0 %v2134
        %3680 = vmatpush1.bf16.msra.mxu0 %v2133
        %3681 = vmatprep.mubr.bf16.mxu0 %v842
        %3682 = vmatmul.mubr.bf16.gmra.mrb[0].mxu0 %v841
        %v3683 = vpop.f32.mrb[0].mxu0
        %v3684 = vadd.f32 %v3571, %v3683
        %v3685 = vpop.f32.mrb[0].mxu0
        %v3686 = vadd.f32 %v3573, %v3685
        %v3687 = vpop.f32.mrb[0].mxu0
        %v3688 = vadd.f32 %v3575, %v3687
        %v3689 = vpop.f32.mrb[0].mxu0
        %v3690 = vadd.f32 %v3577, %v3689
        %3691 = vmatprep.mubr.bf16.mxu0 %v847
        %3692 = vmatmul.mubr.bf16.gmra.mrb[0].mxu0 %v846
        %v3693 = vpop.f32.mrb[0].mxu0
        %v3694 = vadd.f32 %v3581, %v3693
        %v3695 = vpop.f32.mrb[0].mxu0
        %v3696 = vadd.f32 %v3583, %v3695
        %v3697 = vpop.f32.mrb[0].mxu0
        %v3698 = vadd.f32 %v3585, %v3697
        %v3699 = vpop.f32.mrb[0].mxu0
        %v3700 = vadd.f32 %v3587, %v3699
        %3701 = vmatprep.mubr.bf16.mxu0 %v852
        %3702 = vmatmul.mubr.bf16.gmra.mrb[0].mxu0 %v851
        %v3703 = vpop.f32.mrb[0].mxu0
        %v3704 = vadd.f32 %v3591, %v3703
        %v3705 = vpop.f32.mrb[0].mxu0
        %v3706 = vadd.f32 %v3593, %v3705
        %v3707 = vpop.f32.mrb[0].mxu0
        %v3708 = vadd.f32 %v3595, %v3707
        %v3709 = vpop.f32.mrb[0].mxu0
        %v3710 = vadd.f32 %v3597, %v3709
        %3711 = vmatprep.mubr.bf16.mxu0 %v857
        %3712 = vmatmul.mubr.bf16.gmra.mrb[0].mxu0 %v856
        %v3713 = vpop.f32.mrb[0].mxu0
        %v3714 = vadd.f32 %v3601, %v3713
        %v3715 = vpop.f32.mrb[0].mxu0
        %v3716 = vadd.f32 %v3603, %v3715
        %v3717 = vpop.f32.mrb[0].mxu0
        %v3718 = vadd.f32 %v3605, %v3717
        %v3719 = vpop.f32.mrb[0].mxu0
        %v3720 = vadd.f32 %v3607, %v3719
        %3721 = vmatprep.mubr.bf16.mxu0 %v862
        %3722 = vmatmul.mubr.bf16.gmra.mrb[0].mxu0 %v861
        %v3723 = vpop.f32.mrb[0].mxu0
        %v3724 = vadd.f32 %v3611, %v3723
        %v3725 = vpop.f32.mrb[0].mxu0
        %v3726 = vadd.f32 %v3613, %v3725
        %v3727 = vpop.f32.mrb[0].mxu0
        %v3728 = vadd.f32 %v3615, %v3727
        %v3729 = vpop.f32.mrb[0].mxu0
        %v3730 = vadd.f32 %v3617, %v3729
        %3731 = vmatprep.mubr.bf16.mxu0 %v867
        %3732 = vmatmul.mubr.bf16.gmra.mrb[0].mxu0 %v866
        %v3733 = vpop.f32.mrb[0].mxu0
        %v3734 = vadd.f32 %v3621, %v3733
        %v3735 = vpop.f32.mrb[0].mxu0
        %v3736 = vadd.f32 %v3623, %v3735
        %v3737 = vpop.f32.mrb[0].mxu0
        %v3738 = vadd.f32 %v3625, %v3737
        %v3739 = vpop.f32.mrb[0].mxu0
        %v3740 = vadd.f32 %v3627, %v3739
        %3741 = vmatprep.mubr.bf16.mxu0 %v872
        %3742 = vmatmul.mubr.bf16.gmra.mrb[0].mxu0 %v871
        %v3743 = vpop.f32.mrb[0].mxu0
        %v3744 = vadd.f32 %v3631, %v3743
        %v3745 = vpop.f32.mrb[0].mxu0
        %v3746 = vadd.f32 %v3633, %v3745
        %v3747 = vpop.f32.mrb[0].mxu0
        %v3748 = vadd.f32 %v3635, %v3747
        %v3749 = vpop.f32.mrb[0].mxu0
        %v3750 = vadd.f32 %v3637, %v3749
        %3751 = vmatprep.mubr.bf16.mxu0 %v877
        %3752 = vmatmul.mubr.bf16.gmra.mrb[0].mxu0 %v876
        %v3753 = vpop.f32.mrb[0].mxu0
        %v3754 = vadd.f32 %v3641, %v3753
        %v3755 = vpop.f32.mrb[0].mxu0
        %v3756 = vadd.f32 %v3643, %v3755
        %v3757 = vpop.f32.mrb[0].mxu0
        %v3758 = vadd.f32 %v3645, %v3757
        %v3759 = vpop.f32.mrb[0].mxu0
        %v3760 = vadd.f32 %v3647, %v3759
        %3761 = vdwg.mxu0
        %3762 = vmatprep.subr.bf16.mxu0 %v2142
        %3763 = vmatpush1.bf16.msra.mxu0 %v2141
        %3764 = vmatprep.subr.bf16.mxu0 %v2150
        %3765 = vmatpush1.bf16.msra.mxu0 %v2149
        %3766 = vmatprep.subr.bf16.mxu0 %v2158
        %3767 = vmatpush1.bf16.msra.mxu0 %v2157
        %3768 = vmatprep.subr.bf16.mxu0 %v2166
        %3769 = vmatpush1.bf16.msra.mxu0 %v2165
        %3770 = vmatprep.subr.bf16.mxu0 %v2174
        %3771 = vmatpush1.bf16.msra.mxu0 %v2173
        %3772 = vmatprep.subr.bf16.mxu0 %v2182
        %3773 = vmatpush1.bf16.msra.mxu0 %v2181
        %3774 = vmatprep.subr.bf16.mxu0 %v2190
        %3775 = vmatpush1.bf16.msra.mxu0 %v2189
        %3776 = vmatprep.subr.bf16.mxu0 %v2198
        %3777 = vmatpush1.bf16.msra.mxu0 %v2197
        %3778 = vmatprep.subr.bf16.mxu0 0
        %3779 = vmatpush1.bf16.msra.mxu0 0
        %3780 = vmatprep.subr.bf16.mxu0 0
        %3781 = vmatpush1.bf16.msra.mxu0 0
        %3782 = vmatprep.subr.bf16.mxu0 0
        %3783 = vmatpush1.bf16.msra.mxu0 0
        %3784 = vmatprep.subr.bf16.mxu0 0
        %3785 = vmatpush1.bf16.msra.mxu0 0
        %3786 = vmatprep.subr.bf16.mxu0 0
        %3787 = vmatpush1.bf16.msra.mxu0 0
        %3788 = vmatprep.subr.bf16.mxu0 0
        %3789 = vmatpush1.bf16.msra.mxu0 0
        %3790 = vmatprep.subr.bf16.mxu0 0
        %3791 = vmatpush1.bf16.msra.mxu0 0
        %3792 = vmatprep.subr.bf16.mxu0 0
        %3793 = vmatpush1.bf16.msra.mxu0 0
        %3794 = vmatprep.mubr.bf16.mxu0 0
        %3795 = vmatmul.mubr.bf16.gmra.mrb[0].mxu0 %v843
        %v3796 = vpop.f32.mrb[0].mxu0
        %v3797 = vadd.f32 %v3684, %v3796
        %v3798 = vpop.f32.mrb[0].mxu0
        %v3799 = vadd.f32 %v3686, %v3798
        %v3800 = vpop.f32.mrb[0].mxu0
        %v3801 = vadd.f32 %v3688, %v3800
        %v3802 = vpop.f32.mrb[0].mxu0
        %v3803 = vadd.f32 %v3690, %v3802
        %3804 = vmatprep.mubr.bf16.mxu0 0
        %3805 = vmatmul.mubr.bf16.gmra.mrb[0].mxu0 %v848
        %v3806 = vpop.f32.mrb[0].mxu0
        %v3807 = vadd.f32 %v3694, %v3806
        %v3808 = vpop.f32.mrb[0].mxu0
        %v3809 = vadd.f32 %v3696, %v3808
        %v3810 = vpop.f32.mrb[0].mxu0
        %v3811 = vadd.f32 %v3698, %v3810
        %v3812 = vpop.f32.mrb[0].mxu0
        %v3813 = vadd.f32 %v3700, %v3812
        %3814 = vmatprep.mubr.bf16.mxu0 0
        %3815 = vmatmul.mubr.bf16.gmra.mrb[0].mxu0 %v853
        %v3816 = vpop.f32.mrb[0].mxu0
        %v3817 = vadd.f32 %v3704, %v3816
        %v3818 = vpop.f32.mrb[0].mxu0
        %v3819 = vadd.f32 %v3706, %v3818
        %v3820 = vpop.f32.mrb[0].mxu0
        %v3821 = vadd.f32 %v3708, %v3820
        %v3822 = vpop.f32.mrb[0].mxu0
        %v3823 = vadd.f32 %v3710, %v3822
        %3824 = vmatprep.mubr.bf16.mxu0 0
        %3825 = vmatmul.mubr.bf16.gmra.mrb[0].mxu0 %v858
        %v3826 = vpop.f32.mrb[0].mxu0
        %v3827 = vadd.f32 %v3714, %v3826
        %v3828 = vpop.f32.mrb[0].mxu0
        %v3829 = vadd.f32 %v3716, %v3828
        %v3830 = vpop.f32.mrb[0].mxu0
        %v3831 = vadd.f32 %v3718, %v3830
        %v3832 = vpop.f32.mrb[0].mxu0
        %v3833 = vadd.f32 %v3720, %v3832
        %3834 = vmatprep.mubr.bf16.mxu0 0
        %3835 = vmatmul.mubr.bf16.gmra.mrb[0].mxu0 %v863
        %v3836 = vpop.f32.mrb[0].mxu0
        %v3837 = vadd.f32 %v3724, %v3836
        %v3838 = vpop.f32.mrb[0].mxu0
        %v3839 = vadd.f32 %v3726, %v3838
        %v3840 = vpop.f32.mrb[0].mxu0
        %v3841 = vadd.f32 %v3728, %v3840
        %v3842 = vpop.f32.mrb[0].mxu0
        %v3843 = vadd.f32 %v3730, %v3842
        %3844 = vmatprep.mubr.bf16.mxu0 0
        %3845 = vmatmul.mubr.bf16.gmra.mrb[0].mxu0 %v868
        %v3846 = vpop.f32.mrb[0].mxu0
        %v3847 = vadd.f32 %v3734, %v3846
        %v3848 = vpop.f32.mrb[0].mxu0
        %v3849 = vadd.f32 %v3736, %v3848
        %v3850 = vpop.f32.mrb[0].mxu0
        %v3851 = vadd.f32 %v3738, %v3850
        %v3852 = vpop.f32.mrb[0].mxu0
        %v3853 = vadd.f32 %v3740, %v3852
        %3854 = vmatprep.mubr.bf16.mxu0 0
        %3855 = vmatmul.mubr.bf16.gmra.mrb[0].mxu0 %v873
        %v3856 = vpop.f32.mrb[0].mxu0
        %v3857 = vadd.f32 %v3744, %v3856
        %v3858 = vpop.f32.mrb[0].mxu0
        %v3859 = vadd.f32 %v3746, %v3858
        %v3860 = vpop.f32.mrb[0].mxu0
        %v3861 = vadd.f32 %v3748, %v3860
        %v3862 = vpop.f32.mrb[0].mxu0
        %v3863 = vadd.f32 %v3750, %v3862
        %3864 = vmatprep.mubr.bf16.mxu0 0
        %3865 = vmatmul.mubr.bf16.gmra.mrb[0].mxu0 %v878
        %v3866 = vpop.f32.mrb[0].mxu0
        %v3867 = vadd.f32 %v3754, %v3866
        %v3868 = vpop.f32.mrb[0].mxu0
        %v3869 = vadd.f32 %v3756, %v3868
        %v3870 = vpop.f32.mrb[0].mxu0
        %v3871 = vadd.f32 %v3758, %v3870
        %v3872 = vpop.f32.mrb[0].mxu0
        %v3873 = vadd.f32 %v3760, %v3872
        %3874 = vdwg.mxu0
        %v3875 = vtanh.pop %v2780
        %v3876 = vtanh.pop %v2782
        %v3877 = vtanh.pop %v3119
        %v3878 = vtanh.pop %v3121
        %v3879 = vtanh.pop %v3458
        %v3880 = vtanh.pop %v3460
        %v3881 = vtanh.pop %v3797
        %v3882 = vtanh.pop %v3799
        %v3883 = vtanh.pop %v2784
        %v3884 = vtanh.pop %v2786
        %v3885 = vtanh.pop %v3123
        %v3886 = vtanh.pop %v3125
        %v3887 = vtanh.pop %v3462
        %v3888 = vtanh.pop %v3464
        %v3889 = vtanh.pop %v3801
        %v3890 = vtanh.pop %v3803
        %v3891 = vtanh.pop %v2790
        %v3892 = vtanh.pop %v2792
        %v3893 = vtanh.pop %v3129
        %v3894 = vtanh.pop %v3131
        %v3895 = vtanh.pop %v3468
        %v3896 = vtanh.pop %v3470
        %v3897 = vtanh.pop %v3807
        %v3898 = vtanh.pop %v3809
        %v3899 = vtanh.pop %v2794
        %v3900 = vtanh.pop %v2796
        %v3901 = vtanh.pop %v3133
        %v3902 = vtanh.pop %v3135
        %v3903 = vtanh.pop %v3472
        %v3904 = vtanh.pop %v3474
        %v3905 = vtanh.pop %v3811
        %v3906 = vtanh.pop %v3813
        %v3907 = vtanh.pop %v2800
        %v3908 = vtanh.pop %v2802
        %v3909 = vtanh.pop %v3139
        %v3910 = vtanh.pop %v3141
        %v3911 = vtanh.pop %v3478
        %v3912 = vtanh.pop %v3480
        %v3913 = vtanh.pop %v3817
        %v3914 = vtanh.pop %v3819
        %v3915 = vtanh.pop %v2804
        %v3916 = vtanh.pop %v2806
        %v3917 = vtanh.pop %v3143
        %v3918 = vtanh.pop %v3145
        %v3919 = vtanh.pop %v3482
        %v3920 = vtanh.pop %v3484
        %v3921 = vtanh.pop %v3821
        %v3922 = vtanh.pop %v3823
        %v3923 = vtanh.pop %v2810
        %v3924 = vtanh.pop %v2812
        %v3925 = vtanh.pop %v3149
        %v3926 = vtanh.pop %v3151
        %v3927 = vtanh.pop %v3488
        %v3928 = vtanh.pop %v3490
        %v3929 = vtanh.pop %v3827
        %v3930 = vtanh.pop %v3829
        %v3931 = vtanh.pop %v2814
        %v3932 = vtanh.pop %v2816
        %v3933 = vtanh.pop %v3153
        %v3934 = vtanh.pop %v3155
        %v3935 = vtanh.pop %v3492
        %v3936 = vtanh.pop %v3494
        %v3937 = vtanh.pop %v3831
        %v3938 = vtanh.pop %v3833
        %v3939 = vtanh.pop %v2820
        %v3940 = vtanh.pop %v2822
        %v3941 = vtanh.pop %v3159
        %v3942 = vtanh.pop %v3161
        %v3943 = vtanh.pop %v3498
        %v3944 = vtanh.pop %v3500
        %v3945 = vtanh.pop %v3837
        %v3946 = vtanh.pop %v3839
        %v3947 = vtanh.pop %v2824
        %v3948 = vtanh.pop %v2826
        %v3949 = vtanh.pop %v3163
        %v3950 = vtanh.pop %v3165
        %v3951 = vtanh.pop %v3502
        %v3952 = vtanh.pop %v3504
        %v3953 = vtanh.pop %v3841
        %v3954 = vtanh.pop %v3843
        %v3955 = vtanh.pop %v2830
        %v3956 = vtanh.pop %v2832
        %v3957 = vtanh.pop %v3169
        %v3958 = vtanh.pop %v3171
        %v3959 = vtanh.pop %v3508
        %v3960 = vtanh.pop %v3510
        %v3961 = vtanh.pop %v3847
        %v3962 = vtanh.pop %v3849
        %v3963 = vtanh.pop %v2834
        %v3964 = vtanh.pop %v2836
        %v3965 = vtanh.pop %v3173
        %v3966 = vtanh.pop %v3175
        %v3967 = vtanh.pop %v3512
        %v3968 = vtanh.pop %v3514
        %v3969 = vtanh.pop %v3851
        %v3970 = vtanh.pop %v3853
        %v3971 = vtanh.pop %v2840
        %v3972 = vtanh.pop %v2842
        %v3973 = vtanh.pop %v3179
        %v3974 = vtanh.pop %v3181
        %v3975 = vtanh.pop %v3518
        %v3976 = vtanh.pop %v3520
        %v3977 = vtanh.pop %v3857
        %v3978 = vtanh.pop %v3859
        %v3979 = vtanh.pop %v2844
        %v3980 = vtanh.pop %v2846
        %v3981 = vtanh.pop %v3183
        %v3982 = vtanh.pop %v3185
        %v3983 = vtanh.pop %v3522
        %v3984 = vtanh.pop %v3524
        %v3985 = vtanh.pop %v3861
        %v3986 = vtanh.pop %v3863
        %v3987 = vtanh.pop %v2850
        %v3988 = vtanh.pop %v2852
        %v3989 = vtanh.pop %v3189
        %v3990 = vtanh.pop %v3191
        %v3991 = vtanh.pop %v3528
        %v3992 = vtanh.pop %v3530
        %v3993 = vtanh.pop %v3867
        %v3994 = vtanh.pop %v3869
        %v3995 = vtanh.pop %v2854
        %v3996 = vtanh.pop %v2856
        %v3997 = vtanh.pop %v3193
        %v3998 = vtanh.pop %v3195
        %v3999 = vtanh.pop %v3532
        %v4000 = vtanh.pop %v3534
        %v4001 = vtanh.pop %v3871
        %v4002 = vtanh.pop %v3873
        %v4003 = vpack.c.bf16 %v3883, %v3875
        %v4004 = vpack.c.bf16 %v3884, %v3876
        %v4005 = vpack.c.bf16 %v3885, %v3877
        %v4006 = vpack.c.bf16 %v3886, %v3878
        %v4007 = vpack.c.bf16 %v3887, %v3879
        %v4008 = vpack.c.bf16 %v3888, %v3880
        %v4009 = vpack.c.bf16 %v3889, %v3881
        %v4010 = vpack.c.bf16 %v3890, %v3882
        %v4011 = vpack.c.bf16 %v3899, %v3891
        %v4012 = vpack.c.bf16 %v3900, %v3892
        %v4013 = vpack.c.bf16 %v3901, %v3893
        %v4014 = vpack.c.bf16 %v3902, %v3894
        %v4015 = vpack.c.bf16 %v3903, %v3895
        %v4016 = vpack.c.bf16 %v3904, %v3896
        %v4017 = vpack.c.bf16 %v3905, %v3897
        %v4018 = vpack.c.bf16 %v3906, %v3898
        %v4019 = vpack.c.bf16 %v3915, %v3907
        %v4020 = vpack.c.bf16 %v3916, %v3908
        %v4021 = vpack.c.bf16 %v3917, %v3909
        %v4022 = vpack.c.bf16 %v3918, %v3910
        %v4023 = vpack.c.bf16 %v3919, %v3911
        %v4024 = vpack.c.bf16 %v3920, %v3912
        %v4025 = vpack.c.bf16 %v3921, %v3913
        %v4026 = vpack.c.bf16 %v3922, %v3914
        %v4027 = vpack.c.bf16 %v3931, %v3923
        %v4028 = vpack.c.bf16 %v3932, %v3924
        %v4029 = vpack.c.bf16 %v3933, %v3925
        %v4030 = vpack.c.bf16 %v3934, %v3926
        %v4031 = vpack.c.bf16 %v3935, %v3927
        %v4032 = vpack.c.bf16 %v3936, %v3928
        %v4033 = vpack.c.bf16 %v3937, %v3929
        %v4034 = vpack.c.bf16 %v3938, %v3930
        %v4035 = vpack.c.bf16 %v3947, %v3939
        %v4036 = vpack.c.bf16 %v3948, %v3940
        %v4037 = vpack.c.bf16 %v3949, %v3941
        %v4038 = vpack.c.bf16 %v3950, %v3942
        %v4039 = vpack.c.bf16 %v3951, %v3943
        %v4040 = vpack.c.bf16 %v3952, %v3944
        %v4041 = vpack.c.bf16 %v3953, %v3945
        %v4042 = vpack.c.bf16 %v3954, %v3946
        %v4043 = vpack.c.bf16 %v3963, %v3955
        %v4044 = vpack.c.bf16 %v3964, %v3956
        %v4045 = vpack.c.bf16 %v3965, %v3957
        %v4046 = vpack.c.bf16 %v3966, %v3958
        %v4047 = vpack.c.bf16 %v3967, %v3959
        %v4048 = vpack.c.bf16 %v3968, %v3960
        %v4049 = vpack.c.bf16 %v3969, %v3961
        %v4050 = vpack.c.bf16 %v3970, %v3962
        %v4051 = vpack.c.bf16 %v3979, %v3971
        %v4052 = vpack.c.bf16 %v3980, %v3972
        %v4053 = vpack.c.bf16 %v3981, %v3973
        %v4054 = vpack.c.bf16 %v3982, %v3974
        %v4055 = vpack.c.bf16 %v3983, %v3975
        %v4056 = vpack.c.bf16 %v3984, %v3976
        %v4057 = vpack.c.bf16 %v3985, %v3977
        %v4058 = vpack.c.bf16 %v3986, %v3978
        %v4059 = vpack.c.bf16 %v3995, %v3987
        %v4060 = vpack.c.bf16 %v3996, %v3988
        %v4061 = vpack.c.bf16 %v3997, %v3989
        %v4062 = vpack.c.bf16 %v3998, %v3990
        %v4063 = vpack.c.bf16 %v3999, %v3991
        %v4064 = vpack.c.bf16 %v4000, %v3992
        %v4065 = vpack.c.bf16 %v4001, %v3993
        %v4066 = vpack.c.bf16 %v4002, %v3994
        %v4067 = vld [vmem:[#allocation8] sm:$0xf]
        %v4068 = vld [vmem:[#allocation8 + $0x4] sm:$0xf]
        %v4069 = vld [vmem:[#allocation8 + $0x8] sm:$0xf]
        %v4070 = vld [vmem:[#allocation8 + $0xc] sm:$0xf]
        %v4071 = vld [vmem:[#allocation8 + $0x10] sm:$0xf]
        %v4072 = vld [vmem:[#allocation8 + $0x14] sm:$0xf]
        %v4073 = vld [vmem:[#allocation8 + $0x18] sm:$0xf]
        %v4074 = vld [vmem:[#allocation8 + $0x1c] sm:$0xf]
        %v4075 = vld [vmem:[#allocation8 + $0x20] sm:$0xf]
        %v4076 = vld [vmem:[#allocation8 + $0x24] sm:$0xf]
        %v4077 = vld [vmem:[#allocation8 + $0x28] sm:$0xf]
        %v4078 = vld [vmem:[#allocation8 + $0x2c] sm:$0xf]
        %v4079 = vld [vmem:[#allocation8 + $0x30] sm:$0xf]
        %v4080 = vld [vmem:[#allocation8 + $0x34] sm:$0xf]
        %v4081 = vld [vmem:[#allocation8 + $0x38] sm:$0xf]
        %v4082 = vld [vmem:[#allocation8 + $0x3c] sm:$0xf]
        %v4083 = vld [vmem:[#allocation8 + $0x40] sm:$0xf]
        %v4084 = vld [vmem:[#allocation8 + $0x44] sm:$0xf]
        %v4085 = vld [vmem:[#allocation8 + $0x48] sm:$0xf]
        %v4086 = vld [vmem:[#allocation8 + $0x4c] sm:$0xf]
        %v4087 = vld [vmem:[#allocation8 + $0x50] sm:$0xf]
        %v4088 = vld [vmem:[#allocation8 + $0x54] sm:$0xf]
        %v4089 = vld [vmem:[#allocation8 + $0x58] sm:$0xf]
        %v4090 = vld [vmem:[#allocation8 + $0x5c] sm:$0xf]
        %v4091 = vld [vmem:[#allocation8 + $0x60] sm:$0xf]
        %v4092 = vld [vmem:[#allocation8 + $0x64] sm:$0xf]
        %v4093 = vld [vmem:[#allocation8 + $0x68] sm:$0xf]
        %v4094 = vld [vmem:[#allocation8 + $0x6c] sm:$0xf]
        %v4095 = vld [vmem:[#allocation8 + $0x70] sm:$0xf]
        %v4096 = vld [vmem:[#allocation8 + $0x74] sm:$0xf]
        %v4097 = vld [vmem:[#allocation8 + $0x78] sm:$0xf]
        %v4098 = vld [vmem:[#allocation8 + $0x7c] sm:$0xf]
        %v4099 = vld [vmem:[#allocation8 + $0x80] sm:$0xf]
        %v4100 = vld [vmem:[#allocation8 + $0x84] sm:$0xf]
        %v4101 = vld [vmem:[#allocation8 + $0x88] sm:$0xf]
        %v4102 = vld [vmem:[#allocation8 + $0x8c] sm:$0xf]
        %v4103 = vld [vmem:[#allocation8 + $0x90] sm:$0xf]
        %v4104 = vld [vmem:[#allocation8 + $0x94] sm:$0xf]
        %v4105 = vld [vmem:[#allocation8 + $0x98] sm:$0xf]
        %v4106 = vld [vmem:[#allocation8 + $0x9c] sm:$0xf]
        %v4107 = vld [vmem:[#allocation8 + $0xa0] sm:$0xf]
        %v4108 = vld [vmem:[#allocation8 + $0xa4] sm:$0xf]
        %v4109 = vld [vmem:[#allocation8 + $0xa8] sm:$0xf]
        %v4110 = vld [vmem:[#allocation8 + $0xac] sm:$0xf]
        %v4111 = vld [vmem:[#allocation8 + $0xb0] sm:$0xf]
        %v4112 = vld [vmem:[#allocation8 + $0xb4] sm:$0xf]
        %v4113 = vld [vmem:[#allocation8 + $0xb8] sm:$0xf]
        %v4114 = vld [vmem:[#allocation8 + $0xbc] sm:$0xf]
        %v4115 = vld [vmem:[#allocation8 + $0xc0] sm:$0xf]
        %v4116 = vld [vmem:[#allocation8 + $0xc4] sm:$0xf]
        %v4117 = vld [vmem:[#allocation8 + $0xc8] sm:$0xf]
        %v4118 = vld [vmem:[#allocation8 + $0xcc] sm:$0xf]
        %v4119 = vld [vmem:[#allocation8 + $0xd0] sm:$0xf]
        %v4120 = vld [vmem:[#allocation8 + $0xd4] sm:$0xf]
        %v4121 = vld [vmem:[#allocation8 + $0xd8] sm:$0xf]
        %v4122 = vld [vmem:[#allocation8 + $0xdc] sm:$0xf]
        %v4123 = vld [vmem:[#allocation8 + $0xe0] sm:$0xf]
        %v4124 = vld [vmem:[#allocation8 + $0xe4] sm:$0xf]
        %v4125 = vld [vmem:[#allocation8 + $0xe8] sm:$0xf]
        %v4126 = vld [vmem:[#allocation8 + $0xec] sm:$0xf]
        %v4127 = vld [vmem:[#allocation8 + $0xf0] sm:$0xf]
        %v4128 = vld [vmem:[#allocation8 + $0xf4] sm:$0xf]
        %v4129 = vld [vmem:[#allocation8 + $0xf8] sm:$0xf]
        %v4130 = vld [vmem:[#allocation8 + $0xfc] sm:$0xf]
        %v4131 = vld [vmem:[#allocation8 + $0x100] sm:$0xf]
        %v4132 = vld [vmem:[#allocation8 + $0x104] sm:$0xf]
        %v4133 = vld [vmem:[#allocation8 + $0x108] sm:$0xf]
        %v4134 = vld [vmem:[#allocation8 + $0x10c] sm:$0xf]
        %v4135 = vld [vmem:[#allocation8 + $0x110] sm:$0xf]
        %v4136 = vld [vmem:[#allocation8 + $0x114] sm:$0xf]
        %v4137 = vld [vmem:[#allocation8 + $0x118] sm:$0xf]
        %v4138 = vld [vmem:[#allocation8 + $0x11c] sm:$0xf]
        %v4139 = vld [vmem:[#allocation8 + $0x120] sm:$0xf]
        %v4140 = vld [vmem:[#allocation8 + $0x124] sm:$0xf]
        %v4141 = vld [vmem:[#allocation8 + $0x128] sm:$0xf]
        %v4142 = vld [vmem:[#allocation8 + $0x12c] sm:$0xf]
        %v4143 = vld [vmem:[#allocation8 + $0x130] sm:$0xf]
        %v4144 = vld [vmem:[#allocation8 + $0x134] sm:$0xf]
        %v4145 = vld [vmem:[#allocation8 + $0x138] sm:$0xf]
        %v4146 = vld [vmem:[#allocation8 + $0x13c] sm:$0xf]
        %v4147 = vld [vmem:[#allocation8 + $0x140] sm:$0xf]
        %v4148 = vld [vmem:[#allocation8 + $0x144] sm:$0xf]
        %v4149 = vld [vmem:[#allocation8 + $0x148] sm:$0xf]
        %v4150 = vld [vmem:[#allocation8 + $0x14c] sm:$0xf]
        %v4151 = vld [vmem:[#allocation8 + $0x150] sm:$0xf]
        %v4152 = vld [vmem:[#allocation8 + $0x154] sm:$0xf]
        %v4153 = vld [vmem:[#allocation8 + $0x158] sm:$0xf]
        %v4154 = vld [vmem:[#allocation8 + $0x15c] sm:$0xf]
        %v4155 = vld [vmem:[#allocation8 + $0x160] sm:$0xf]
        %v4156 = vld [vmem:[#allocation8 + $0x164] sm:$0xf]
        %v4157 = vld [vmem:[#allocation8 + $0x168] sm:$0xf]
        %v4158 = vld [vmem:[#allocation8 + $0x16c] sm:$0xf]
        %v4159 = vld [vmem:[#allocation8 + $0x170] sm:$0xf]
        %v4160 = vld [vmem:[#allocation8 + $0x174] sm:$0xf]
        %v4161 = vld [vmem:[#allocation8 + $0x178] sm:$0xf]
        %v4162 = vld [vmem:[#allocation8 + $0x17c] sm:$0xf]
        %v4163 = vld [vmem:[#allocation8 + $0x180] sm:$0xf]
        %v4164 = vld [vmem:[#allocation8 + $0x184] sm:$0xf]
        %v4165 = vld [vmem:[#allocation8 + $0x188] sm:$0xf]
        %v4166 = vld [vmem:[#allocation8 + $0x18c] sm:$0xf]
        %v4167 = vld [vmem:[#allocation8 + $0x190] sm:$0xf]
        %v4168 = vld [vmem:[#allocation8 + $0x194] sm:$0xf]
        %v4169 = vld [vmem:[#allocation8 + $0x198] sm:$0xf]
        %v4170 = vld [vmem:[#allocation8 + $0x19c] sm:$0xf]
        %v4171 = vld [vmem:[#allocation8 + $0x1a0] sm:$0xf]
        %v4172 = vld [vmem:[#allocation8 + $0x1a4] sm:$0xf]
        %v4173 = vld [vmem:[#allocation8 + $0x1a8] sm:$0xf]
        %v4174 = vld [vmem:[#allocation8 + $0x1ac] sm:$0xf]
        %v4175 = vld [vmem:[#allocation8 + $0x1b0] sm:$0xf]
        %v4176 = vld [vmem:[#allocation8 + $0x1b4] sm:$0xf]
        %v4177 = vld [vmem:[#allocation8 + $0x1b8] sm:$0xf]
        %v4178 = vld [vmem:[#allocation8 + $0x1bc] sm:$0xf]
        %v4179 = vld [vmem:[#allocation8 + $0x1c0] sm:$0xf]
        %v4180 = vld [vmem:[#allocation8 + $0x1c4] sm:$0xf]
        %v4181 = vld [vmem:[#allocation8 + $0x1c8] sm:$0xf]
        %v4182 = vld [vmem:[#allocation8 + $0x1cc] sm:$0xf]
        %v4183 = vld [vmem:[#allocation8 + $0x1d0] sm:$0xf]
        %v4184 = vld [vmem:[#allocation8 + $0x1d4] sm:$0xf]
        %v4185 = vld [vmem:[#allocation8 + $0x1d8] sm:$0xf]
        %v4186 = vld [vmem:[#allocation8 + $0x1dc] sm:$0xf]
        %v4187 = vld [vmem:[#allocation8 + $0x1e0] sm:$0xf]
        %v4188 = vld [vmem:[#allocation8 + $0x1e4] sm:$0xf]
        %v4189 = vld [vmem:[#allocation8 + $0x1e8] sm:$0xf]
        %v4190 = vld [vmem:[#allocation8 + $0x1ec] sm:$0xf]
        %v4191 = vld [vmem:[#allocation8 + $0x1f0] sm:$0xf]
        %v4192 = vld [vmem:[#allocation8 + $0x1f4] sm:$0xf]
        %v4193 = vld [vmem:[#allocation8 + $0x1f8] sm:$0xf]
        %v4194 = vld [vmem:[#allocation8 + $0x1fc] sm:$0xf]
        %v4195 = vld [vmem:[#allocation10] sm:$0x1]
        %v4197 = vlaneseq
        %v4198 = vshrl.u32 %v4197, 7
        %v4199 = vsub.s32 0, %v4198
        %v4200 = vrot.slane %v4195, %v4199
        %v4330 = vunpack.c.l.b16 %v4067
        %v4331 = vunpack.c.l.b16 %v4068
        %v4332 = vunpack.c.l.b16 %v4069
        %v4333 = vunpack.c.l.b16 %v4070
        %v4334 = vunpack.c.l.b16 %v4071
        %v4335 = vunpack.c.l.b16 %v4072
        %v4336 = vunpack.c.l.b16 %v4073
        %v4337 = vunpack.c.l.b16 %v4074
        %v4338 = vunpack.c.l.b16 %v4075
        %v4339 = vunpack.c.l.b16 %v4076
        %v4340 = vunpack.c.l.b16 %v4077
        %v4341 = vunpack.c.l.b16 %v4078
        %v4342 = vunpack.c.l.b16 %v4079
        %v4343 = vunpack.c.l.b16 %v4080
        %v4344 = vunpack.c.l.b16 %v4081
        %v4345 = vunpack.c.l.b16 %v4082
        %v4346 = vunpack.c.l.b16 %v4083
        %v4347 = vunpack.c.l.b16 %v4084
        %v4348 = vunpack.c.l.b16 %v4085
        %v4349 = vunpack.c.l.b16 %v4086
        %v4350 = vunpack.c.l.b16 %v4087
        %v4351 = vunpack.c.l.b16 %v4088
        %v4352 = vunpack.c.l.b16 %v4089
        %v4353 = vunpack.c.l.b16 %v4090
        %v4354 = vunpack.c.l.b16 %v4091
        %v4355 = vunpack.c.l.b16 %v4092
        %v4356 = vunpack.c.l.b16 %v4093
        %v4357 = vunpack.c.l.b16 %v4094
        %v4358 = vunpack.c.l.b16 %v4095
        %v4359 = vunpack.c.l.b16 %v4096
        %v4360 = vunpack.c.l.b16 %v4097
        %v4361 = vunpack.c.l.b16 %v4098
        %v4362 = vunpack.c.l.b16 %v4099
        %v4363 = vunpack.c.l.b16 %v4100
        %v4364 = vunpack.c.l.b16 %v4101
        %v4365 = vunpack.c.l.b16 %v4102
        %v4366 = vunpack.c.l.b16 %v4103
        %v4367 = vunpack.c.l.b16 %v4104
        %v4368 = vunpack.c.l.b16 %v4105
        %v4369 = vunpack.c.l.b16 %v4106
        %v4370 = vunpack.c.l.b16 %v4107
        %v4371 = vunpack.c.l.b16 %v4108
        %v4372 = vunpack.c.l.b16 %v4109
        %v4373 = vunpack.c.l.b16 %v4110
        %v4374 = vunpack.c.l.b16 %v4111
        %v4375 = vunpack.c.l.b16 %v4112
        %v4376 = vunpack.c.l.b16 %v4113
        %v4377 = vunpack.c.l.b16 %v4114
        %v4378 = vunpack.c.l.b16 %v4115
        %v4379 = vunpack.c.l.b16 %v4116
        %v4380 = vunpack.c.l.b16 %v4117
        %v4381 = vunpack.c.l.b16 %v4118
        %v4382 = vunpack.c.l.b16 %v4119
        %v4383 = vunpack.c.l.b16 %v4120
        %v4384 = vunpack.c.l.b16 %v4121
        %v4385 = vunpack.c.l.b16 %v4122
        %v4386 = vunpack.c.l.b16 %v4123
        %v4387 = vunpack.c.l.b16 %v4124
        %v4388 = vunpack.c.l.b16 %v4125
        %v4389 = vunpack.c.l.b16 %v4126
        %v4390 = vunpack.c.l.b16 %v4127
        %v4391 = vunpack.c.l.b16 %v4128
        %v4392 = vunpack.c.l.b16 %v4129
        %v4393 = vunpack.c.l.b16 %v4130
        %v4394 = vunpack.c.l.b16 %v4131
        %v4395 = vunpack.c.l.b16 %v4132
        %v4396 = vunpack.c.l.b16 %v4133
        %v4397 = vunpack.c.l.b16 %v4134
        %v4398 = vunpack.c.l.b16 %v4135
        %v4399 = vunpack.c.l.b16 %v4136
        %v4400 = vunpack.c.l.b16 %v4137
        %v4401 = vunpack.c.l.b16 %v4138
        %v4402 = vunpack.c.l.b16 %v4139
        %v4403 = vunpack.c.l.b16 %v4140
        %v4404 = vunpack.c.l.b16 %v4141
        %v4405 = vunpack.c.l.b16 %v4142
        %v4406 = vunpack.c.l.b16 %v4143
        %v4407 = vunpack.c.l.b16 %v4144
        %v4408 = vunpack.c.l.b16 %v4145
        %v4409 = vunpack.c.l.b16 %v4146
        %v4410 = vunpack.c.l.b16 %v4147
        %v4411 = vunpack.c.l.b16 %v4148
        %v4412 = vunpack.c.l.b16 %v4149
        %v4413 = vunpack.c.l.b16 %v4150
        %v4414 = vunpack.c.l.b16 %v4151
        %v4415 = vunpack.c.l.b16 %v4152
        %v4416 = vunpack.c.l.b16 %v4153
        %v4417 = vunpack.c.l.b16 %v4154
        %v4418 = vunpack.c.l.b16 %v4155
        %v4419 = vunpack.c.l.b16 %v4156
        %v4420 = vunpack.c.l.b16 %v4157
        %v4421 = vunpack.c.l.b16 %v4158
        %v4422 = vunpack.c.l.b16 %v4159
        %v4423 = vunpack.c.l.b16 %v4160
        %v4424 = vunpack.c.l.b16 %v4161
        %v4425 = vunpack.c.l.b16 %v4162
        %v4426 = vunpack.c.l.b16 %v4163
        %v4427 = vunpack.c.l.b16 %v4164
        %v4428 = vunpack.c.l.b16 %v4165
        %v4429 = vunpack.c.l.b16 %v4166
        %v4430 = vunpack.c.l.b16 %v4167
        %v4431 = vunpack.c.l.b16 %v4168
        %v4432 = vunpack.c.l.b16 %v4169
        %v4433 = vunpack.c.l.b16 %v4170
        %v4434 = vunpack.c.l.b16 %v4171
        %v4435 = vunpack.c.l.b16 %v4172
        %v4436 = vunpack.c.l.b16 %v4173
        %v4437 = vunpack.c.l.b16 %v4174
        %v4438 = vunpack.c.l.b16 %v4175
        %v4439 = vunpack.c.l.b16 %v4176
        %v4440 = vunpack.c.l.b16 %v4177
        %v4441 = vunpack.c.l.b16 %v4178
        %v4442 = vunpack.c.l.b16 %v4179
        %v4443 = vunpack.c.l.b16 %v4180
        %v4444 = vunpack.c.l.b16 %v4181
        %v4445 = vunpack.c.l.b16 %v4182
        %v4446 = vunpack.c.l.b16 %v4183
        %v4447 = vunpack.c.l.b16 %v4184
        %v4448 = vunpack.c.l.b16 %v4185
        %v4449 = vunpack.c.l.b16 %v4186
        %v4450 = vunpack.c.l.b16 %v4187
        %v4451 = vunpack.c.l.b16 %v4188
        %v4452 = vunpack.c.l.b16 %v4189
        %v4453 = vunpack.c.l.b16 %v4190
        %v4454 = vunpack.c.l.b16 %v4191
        %v4455 = vunpack.c.l.b16 %v4192
        %v4456 = vunpack.c.l.b16 %v4193
        %v4457 = vunpack.c.l.b16 %v4194
        %v4458 = vpack.c.b16 %v4331, %v4330
        %v4459 = vpack.c.b16 %v4333, %v4332
        %v4460 = vpack.c.b16 %v4335, %v4334
        %v4461 = vpack.c.b16 %v4337, %v4336
        %v4462 = vpack.c.b16 %v4339, %v4338
        %v4463 = vpack.c.b16 %v4341, %v4340
        %v4464 = vpack.c.b16 %v4343, %v4342
        %v4465 = vpack.c.b16 %v4345, %v4344
        %v4466 = vpack.c.b16 %v4347, %v4346
        %v4467 = vpack.c.b16 %v4349, %v4348
        %v4468 = vpack.c.b16 %v4351, %v4350
        %v4469 = vpack.c.b16 %v4353, %v4352
        %v4470 = vpack.c.b16 %v4355, %v4354
        %v4471 = vpack.c.b16 %v4357, %v4356
        %v4472 = vpack.c.b16 %v4359, %v4358
        %v4473 = vpack.c.b16 %v4361, %v4360
        %v4474 = vpack.c.b16 %v4363, %v4362
        %v4475 = vpack.c.b16 %v4365, %v4364
        %v4476 = vpack.c.b16 %v4367, %v4366
        %v4477 = vpack.c.b16 %v4369, %v4368
        %v4478 = vpack.c.b16 %v4371, %v4370
        %v4479 = vpack.c.b16 %v4373, %v4372
        %v4480 = vpack.c.b16 %v4375, %v4374
        %v4481 = vpack.c.b16 %v4377, %v4376
        %v4482 = vpack.c.b16 %v4379, %v4378
        %v4483 = vpack.c.b16 %v4381, %v4380
        %v4484 = vpack.c.b16 %v4383, %v4382
        %v4485 = vpack.c.b16 %v4385, %v4384
        %v4486 = vpack.c.b16 %v4387, %v4386
        %v4487 = vpack.c.b16 %v4389, %v4388
        %v4488 = vpack.c.b16 %v4391, %v4390
        %v4489 = vpack.c.b16 %v4393, %v4392
        %v4490 = vpack.c.b16 %v4395, %v4394
        %v4491 = vpack.c.b16 %v4397, %v4396
        %v4492 = vpack.c.b16 %v4399, %v4398
        %v4493 = vpack.c.b16 %v4401, %v4400
        %v4494 = vpack.c.b16 %v4403, %v4402
        %v4495 = vpack.c.b16 %v4405, %v4404
        %v4496 = vpack.c.b16 %v4407, %v4406
        %v4497 = vpack.c.b16 %v4409, %v4408
        %v4498 = vpack.c.b16 %v4411, %v4410
        %v4499 = vpack.c.b16 %v4413, %v4412
        %v4500 = vpack.c.b16 %v4415, %v4414
        %v4501 = vpack.c.b16 %v4417, %v4416
        %v4502 = vpack.c.b16 %v4419, %v4418
        %v4503 = vpack.c.b16 %v4421, %v4420
        %v4504 = vpack.c.b16 %v4423, %v4422
        %v4505 = vpack.c.b16 %v4425, %v4424
        %v4506 = vpack.c.b16 %v4427, %v4426
        %v4507 = vpack.c.b16 %v4429, %v4428
        %v4508 = vpack.c.b16 %v4431, %v4430
        %v4509 = vpack.c.b16 %v4433, %v4432
        %v4510 = vpack.c.b16 %v4435, %v4434
        %v4511 = vpack.c.b16 %v4437, %v4436
        %v4512 = vpack.c.b16 %v4439, %v4438
        %v4513 = vpack.c.b16 %v4441, %v4440
        %v4514 = vpack.c.b16 %v4443, %v4442
        %v4515 = vpack.c.b16 %v4445, %v4444
        %v4516 = vpack.c.b16 %v4447, %v4446
        %v4517 = vpack.c.b16 %v4449, %v4448
        %v4518 = vpack.c.b16 %v4451, %v4450
        %v4519 = vpack.c.b16 %v4453, %v4452
        %v4520 = vpack.c.b16 %v4455, %v4454
        %v4521 = vpack.c.b16 %v4457, %v4456
        %4586 = vmatprep.subr.bf16.mxu0 0
        %4587 = vmatpush1.bf16.msra.mxu0 %v4458
        %4588 = vmatprep.subr.bf16.mxu0 0
        %4589 = vmatpush1.bf16.msra.mxu0 %v4459
        %4590 = vmatprep.subr.bf16.mxu0 0
        %4591 = vmatpush1.bf16.msra.mxu0 %v4460
        %4592 = vmatprep.subr.bf16.mxu0 0
        %4593 = vmatpush1.bf16.msra.mxu0 %v4461
        %4594 = vmatprep.subr.bf16.mxu0 0
        %4595 = vmatpush1.bf16.msra.mxu0 %v4462
        %4596 = vmatprep.subr.bf16.mxu0 0
        %4597 = vmatpush1.bf16.msra.mxu0 %v4463
        %4598 = vmatprep.subr.bf16.mxu0 0
        %4599 = vmatpush1.bf16.msra.mxu0 %v4464
        %4600 = vmatprep.subr.bf16.mxu0 0
        %4601 = vmatpush1.bf16.msra.mxu0 %v4465
        %4602 = vmatprep.subr.bf16.mxu0 0
        %4603 = vmatpush1.bf16.msra.mxu0 %v4466
        %4604 = vmatprep.subr.bf16.mxu0 0
        %4605 = vmatpush1.bf16.msra.mxu0 %v4467
        %4606 = vmatprep.subr.bf16.mxu0 0
        %4607 = vmatpush1.bf16.msra.mxu0 %v4468
        %4608 = vmatprep.subr.bf16.mxu0 0
        %4609 = vmatpush1.bf16.msra.mxu0 %v4469
        %4610 = vmatprep.subr.bf16.mxu0 0
        %4611 = vmatpush1.bf16.msra.mxu0 %v4470
        %4612 = vmatprep.subr.bf16.mxu0 0
        %4613 = vmatpush1.bf16.msra.mxu0 %v4471
        %4614 = vmatprep.subr.bf16.mxu0 0
        %4615 = vmatpush1.bf16.msra.mxu0 %v4472
        %4616 = vmatprep.subr.bf16.mxu0 0
        %4617 = vmatpush1.bf16.msra.mxu0 %v4473
        %4618 = vmatprep.mubr.bf16.mxu0 %v4004
        %4619 = vmatmul.mubr.bf16.gmra.mrb[0].mxu0 %v4003
        %v4620 = vpop.f32.mrb[0].mxu0
        %v4621 = vadd.f32 %v4200, %v4620
        %v4622 = vpop.f32.mrb[0].mxu0
        %v4623 = vpop.f32.mrb[0].mxu0
        %v4624 = vadd.f32 %v4200, %v4623
        %v4625 = vpop.f32.mrb[0].mxu0
        %4626 = vmatprep.mubr.bf16.mxu0 %v4012
        %4627 = vmatmul.mubr.bf16.gmra.mrb[0].mxu0 %v4011
        %v4628 = vpop.f32.mrb[0].mxu0
        %v4629 = vadd.f32 %v4200, %v4628
        %v4630 = vpop.f32.mrb[0].mxu0
        %v4631 = vpop.f32.mrb[0].mxu0
        %v4632 = vadd.f32 %v4200, %v4631
        %v4633 = vpop.f32.mrb[0].mxu0
        %4634 = vmatprep.mubr.bf16.mxu0 %v4020
        %4635 = vmatmul.mubr.bf16.gmra.mrb[0].mxu0 %v4019
        %v4636 = vpop.f32.mrb[0].mxu0
        %v4637 = vadd.f32 %v4200, %v4636
        %v4638 = vpop.f32.mrb[0].mxu0
        %v4639 = vpop.f32.mrb[0].mxu0
        %v4640 = vadd.f32 %v4200, %v4639
        %v4641 = vpop.f32.mrb[0].mxu0
        %4642 = vmatprep.mubr.bf16.mxu0 %v4028
        %4643 = vmatmul.mubr.bf16.gmra.mrb[0].mxu0 %v4027
        %v4644 = vpop.f32.mrb[0].mxu0
        %v4645 = vadd.f32 %v4200, %v4644
        %v4646 = vpop.f32.mrb[0].mxu0
        %v4647 = vpop.f32.mrb[0].mxu0
        %v4648 = vadd.f32 %v4200, %v4647
        %v4649 = vpop.f32.mrb[0].mxu0
        %4650 = vmatprep.mubr.bf16.mxu0 %v4036
        %4651 = vmatmul.mubr.bf16.gmra.mrb[0].mxu0 %v4035
        %v4652 = vpop.f32.mrb[0].mxu0
        %v4653 = vadd.f32 %v4200, %v4652
        %v4654 = vpop.f32.mrb[0].mxu0
        %v4655 = vpop.f32.mrb[0].mxu0
        %v4656 = vadd.f32 %v4200, %v4655
        %v4657 = vpop.f32.mrb[0].mxu0
        %4658 = vmatprep.mubr.bf16.mxu0 %v4044
        %4659 = vmatmul.mubr.bf16.gmra.mrb[0].mxu0 %v4043
        %v4660 = vpop.f32.mrb[0].mxu0
        %v4661 = vadd.f32 %v4200, %v4660
        %v4662 = vpop.f32.mrb[0].mxu0
        %v4663 = vpop.f32.mrb[0].mxu0
        %v4664 = vadd.f32 %v4200, %v4663
        %v4665 = vpop.f32.mrb[0].mxu0
        %4666 = vmatprep.mubr.bf16.mxu0 %v4052
        %4667 = vmatmul.mubr.bf16.gmra.mrb[0].mxu0 %v4051
        %v4668 = vpop.f32.mrb[0].mxu0
        %v4669 = vadd.f32 %v4200, %v4668
        %v4670 = vpop.f32.mrb[0].mxu0
        %v4671 = vpop.f32.mrb[0].mxu0
        %v4672 = vadd.f32 %v4200, %v4671
        %v4673 = vpop.f32.mrb[0].mxu0
        %4674 = vmatprep.mubr.bf16.mxu0 %v4060
        %4675 = vmatmul.mubr.bf16.gmra.mrb[0].mxu0 %v4059
        %v4676 = vpop.f32.mrb[0].mxu0
        %v4677 = vadd.f32 %v4200, %v4676
        %v4678 = vpop.f32.mrb[0].mxu0
        %v4679 = vpop.f32.mrb[0].mxu0
        %v4680 = vadd.f32 %v4200, %v4679
        %v4681 = vpop.f32.mrb[0].mxu0
        %4682 = vdwg.mxu0
        %4683 = vmatprep.subr.bf16.mxu0 0
        %4684 = vmatpush1.bf16.msra.mxu0 %v4474
        %4685 = vmatprep.subr.bf16.mxu0 0
        %4686 = vmatpush1.bf16.msra.mxu0 %v4475
        %4687 = vmatprep.subr.bf16.mxu0 0
        %4688 = vmatpush1.bf16.msra.mxu0 %v4476
        %4689 = vmatprep.subr.bf16.mxu0 0
        %4690 = vmatpush1.bf16.msra.mxu0 %v4477
        %4691 = vmatprep.subr.bf16.mxu0 0
        %4692 = vmatpush1.bf16.msra.mxu0 %v4478
        %4693 = vmatprep.subr.bf16.mxu0 0
        %4694 = vmatpush1.bf16.msra.mxu0 %v4479
        %4695 = vmatprep.subr.bf16.mxu0 0
        %4696 = vmatpush1.bf16.msra.mxu0 %v4480
        %4697 = vmatprep.subr.bf16.mxu0 0
        %4698 = vmatpush1.bf16.msra.mxu0 %v4481
        %4699 = vmatprep.subr.bf16.mxu0 0
        %4700 = vmatpush1.bf16.msra.mxu0 %v4482
        %4701 = vmatprep.subr.bf16.mxu0 0
        %4702 = vmatpush1.bf16.msra.mxu0 %v4483
        %4703 = vmatprep.subr.bf16.mxu0 0
        %4704 = vmatpush1.bf16.msra.mxu0 %v4484
        %4705 = vmatprep.subr.bf16.mxu0 0
        %4706 = vmatpush1.bf16.msra.mxu0 %v4485
        %4707 = vmatprep.subr.bf16.mxu0 0
        %4708 = vmatpush1.bf16.msra.mxu0 %v4486
        %4709 = vmatprep.subr.bf16.mxu0 0
        %4710 = vmatpush1.bf16.msra.mxu0 %v4487
        %4711 = vmatprep.subr.bf16.mxu0 0
        %4712 = vmatpush1.bf16.msra.mxu0 %v4488
        %4713 = vmatprep.subr.bf16.mxu0 0
        %4714 = vmatpush1.bf16.msra.mxu0 %v4489
        %4715 = vmatprep.mubr.bf16.mxu0 %v4006
        %4716 = vmatmul.mubr.bf16.gmra.mrb[0].mxu0 %v4005
        %v4717 = vpop.f32.mrb[0].mxu0
        %v4718 = vadd.f32 %v4621, %v4717
        %v4719 = vpop.f32.mrb[0].mxu0
        %v4720 = vpop.f32.mrb[0].mxu0
        %v4721 = vadd.f32 %v4624, %v4720
        %v4722 = vpop.f32.mrb[0].mxu0
        %4723 = vmatprep.mubr.bf16.mxu0 %v4014
        %4724 = vmatmul.mubr.bf16.gmra.mrb[0].mxu0 %v4013
        %v4725 = vpop.f32.mrb[0].mxu0
        %v4726 = vadd.f32 %v4629, %v4725
        %v4727 = vpop.f32.mrb[0].mxu0
        %v4728 = vpop.f32.mrb[0].mxu0
        %v4729 = vadd.f32 %v4632, %v4728
        %v4730 = vpop.f32.mrb[0].mxu0
        %4731 = vmatprep.mubr.bf16.mxu0 %v4022
        %4732 = vmatmul.mubr.bf16.gmra.mrb[0].mxu0 %v4021
        %v4733 = vpop.f32.mrb[0].mxu0
        %v4734 = vadd.f32 %v4637, %v4733
        %v4735 = vpop.f32.mrb[0].mxu0
        %v4736 = vpop.f32.mrb[0].mxu0
        %v4737 = vadd.f32 %v4640, %v4736
        %v4738 = vpop.f32.mrb[0].mxu0
        %4739 = vmatprep.mubr.bf16.mxu0 %v4030
        %4740 = vmatmul.mubr.bf16.gmra.mrb[0].mxu0 %v4029
        %v4741 = vpop.f32.mrb[0].mxu0
        %v4742 = vadd.f32 %v4645, %v4741
        %v4743 = vpop.f32.mrb[0].mxu0
        %v4744 = vpop.f32.mrb[0].mxu0
        %v4745 = vadd.f32 %v4648, %v4744
        %v4746 = vpop.f32.mrb[0].mxu0
        %4747 = vmatprep.mubr.bf16.mxu0 %v4038
        %4748 = vmatmul.mubr.bf16.gmra.mrb[0].mxu0 %v4037
        %v4749 = vpop.f32.mrb[0].mxu0
        %v4750 = vadd.f32 %v4653, %v4749
        %v4751 = vpop.f32.mrb[0].mxu0
        %v4752 = vpop.f32.mrb[0].mxu0
        %v4753 = vadd.f32 %v4656, %v4752
        %v4754 = vpop.f32.mrb[0].mxu0
        %4755 = vmatprep.mubr.bf16.mxu0 %v4046
        %4756 = vmatmul.mubr.bf16.gmra.mrb[0].mxu0 %v4045
        %v4757 = vpop.f32.mrb[0].mxu0
        %v4758 = vadd.f32 %v4661, %v4757
        %v4759 = vpop.f32.mrb[0].mxu0
        %v4760 = vpop.f32.mrb[0].mxu0
        %v4761 = vadd.f32 %v4664, %v4760
        %v4762 = vpop.f32.mrb[0].mxu0
        %4763 = vmatprep.mubr.bf16.mxu0 %v4054
        %4764 = vmatmul.mubr.bf16.gmra.mrb[0].mxu0 %v4053
        %v4765 = vpop.f32.mrb[0].mxu0
        %v4766 = vadd.f32 %v4669, %v4765
        %v4767 = vpop.f32.mrb[0].mxu0
        %v4768 = vpop.f32.mrb[0].mxu0
        %v4769 = vadd.f32 %v4672, %v4768
        %v4770 = vpop.f32.mrb[0].mxu0
        %4771 = vmatprep.mubr.bf16.mxu0 %v4062
        %4772 = vmatmul.mubr.bf16.gmra.mrb[0].mxu0 %v4061
        %v4773 = vpop.f32.mrb[0].mxu0
        %v4774 = vadd.f32 %v4677, %v4773
        %v4775 = vpop.f32.mrb[0].mxu0
        %v4776 = vpop.f32.mrb[0].mxu0
        %v4777 = vadd.f32 %v4680, %v4776
        %v4778 = vpop.f32.mrb[0].mxu0
        %4779 = vdwg.mxu0
        %4780 = vmatprep.subr.bf16.mxu0 0
        %4781 = vmatpush1.bf16.msra.mxu0 %v4490
        %4782 = vmatprep.subr.bf16.mxu0 0
        %4783 = vmatpush1.bf16.msra.mxu0 %v4491
        %4784 = vmatprep.subr.bf16.mxu0 0
        %4785 = vmatpush1.bf16.msra.mxu0 %v4492
        %4786 = vmatprep.subr.bf16.mxu0 0
        %4787 = vmatpush1.bf16.msra.mxu0 %v4493
        %4788 = vmatprep.subr.bf16.mxu0 0
        %4789 = vmatpush1.bf16.msra.mxu0 %v4494
        %4790 = vmatprep.subr.bf16.mxu0 0
        %4791 = vmatpush1.bf16.msra.mxu0 %v4495
        %4792 = vmatprep.subr.bf16.mxu0 0
        %4793 = vmatpush1.bf16.msra.mxu0 %v4496
        %4794 = vmatprep.subr.bf16.mxu0 0
        %4795 = vmatpush1.bf16.msra.mxu0 %v4497
        %4796 = vmatprep.subr.bf16.mxu0 0
        %4797 = vmatpush1.bf16.msra.mxu0 %v4498
        %4798 = vmatprep.subr.bf16.mxu0 0
        %4799 = vmatpush1.bf16.msra.mxu0 %v4499
        %4800 = vmatprep.subr.bf16.mxu0 0
        %4801 = vmatpush1.bf16.msra.mxu0 %v4500
        %4802 = vmatprep.subr.bf16.mxu0 0
        %4803 = vmatpush1.bf16.msra.mxu0 %v4501
        %4804 = vmatprep.subr.bf16.mxu0 0
        %4805 = vmatpush1.bf16.msra.mxu0 %v4502
        %4806 = vmatprep.subr.bf16.mxu0 0
        %4807 = vmatpush1.bf16.msra.mxu0 %v4503
        %4808 = vmatprep.subr.bf16.mxu0 0
        %4809 = vmatpush1.bf16.msra.mxu0 %v4504
        %4810 = vmatprep.subr.bf16.mxu0 0
        %4811 = vmatpush1.bf16.msra.mxu0 %v4505
        %4812 = vmatprep.mubr.bf16.mxu0 %v4008
        %4813 = vmatmul.mubr.bf16.gmra.mrb[0].mxu0 %v4007
        %v4814 = vpop.f32.mrb[0].mxu0
        %v4815 = vadd.f32 %v4718, %v4814
        %v4816 = vpop.f32.mrb[0].mxu0
        %v4817 = vpop.f32.mrb[0].mxu0
        %v4818 = vadd.f32 %v4721, %v4817
        %v4819 = vpop.f32.mrb[0].mxu0
        %4820 = vmatprep.mubr.bf16.mxu0 %v4016
        %4821 = vmatmul.mubr.bf16.gmra.mrb[0].mxu0 %v4015
        %v4822 = vpop.f32.mrb[0].mxu0
        %v4823 = vadd.f32 %v4726, %v4822
        %v4824 = vpop.f32.mrb[0].mxu0
        %v4825 = vpop.f32.mrb[0].mxu0
        %v4826 = vadd.f32 %v4729, %v4825
        %v4827 = vpop.f32.mrb[0].mxu0
        %4828 = vmatprep.mubr.bf16.mxu0 %v4024
        %4829 = vmatmul.mubr.bf16.gmra.mrb[0].mxu0 %v4023
        %v4830 = vpop.f32.mrb[0].mxu0
        %v4831 = vadd.f32 %v4734, %v4830
        %v4832 = vpop.f32.mrb[0].mxu0
        %v4833 = vpop.f32.mrb[0].mxu0
        %v4834 = vadd.f32 %v4737, %v4833
        %v4835 = vpop.f32.mrb[0].mxu0
        %4836 = vmatprep.mubr.bf16.mxu0 %v4032
        %4837 = vmatmul.mubr.bf16.gmra.mrb[0].mxu0 %v4031
        %v4838 = vpop.f32.mrb[0].mxu0
        %v4839 = vadd.f32 %v4742, %v4838
        %v4840 = vpop.f32.mrb[0].mxu0
        %v4841 = vpop.f32.mrb[0].mxu0
        %v4842 = vadd.f32 %v4745, %v4841
        %v4843 = vpop.f32.mrb[0].mxu0
        %4844 = vmatprep.mubr.bf16.mxu0 %v4040
        %4845 = vmatmul.mubr.bf16.gmra.mrb[0].mxu0 %v4039
        %v4846 = vpop.f32.mrb[0].mxu0
        %v4847 = vadd.f32 %v4750, %v4846
        %v4848 = vpop.f32.mrb[0].mxu0
        %v4849 = vpop.f32.mrb[0].mxu0
        %v4850 = vadd.f32 %v4753, %v4849
        %v4851 = vpop.f32.mrb[0].mxu0
        %4852 = vmatprep.mubr.bf16.mxu0 %v4048
        %4853 = vmatmul.mubr.bf16.gmra.mrb[0].mxu0 %v4047
        %v4854 = vpop.f32.mrb[0].mxu0
        %v4855 = vadd.f32 %v4758, %v4854
        %v4856 = vpop.f32.mrb[0].mxu0
        %v4857 = vpop.f32.mrb[0].mxu0
        %v4858 = vadd.f32 %v4761, %v4857
        %v4859 = vpop.f32.mrb[0].mxu0
        %4860 = vmatprep.mubr.bf16.mxu0 %v4056
        %4861 = vmatmul.mubr.bf16.gmra.mrb[0].mxu0 %v4055
        %v4862 = vpop.f32.mrb[0].mxu0
        %v4863 = vadd.f32 %v4766, %v4862
        %v4864 = vpop.f32.mrb[0].mxu0
        %v4865 = vpop.f32.mrb[0].mxu0
        %v4866 = vadd.f32 %v4769, %v4865
        %v4867 = vpop.f32.mrb[0].mxu0
        %4868 = vmatprep.mubr.bf16.mxu0 %v4064
        %4869 = vmatmul.mubr.bf16.gmra.mrb[0].mxu0 %v4063
        %v4870 = vpop.f32.mrb[0].mxu0
        %v4871 = vadd.f32 %v4774, %v4870
        %v4872 = vpop.f32.mrb[0].mxu0
        %v4873 = vpop.f32.mrb[0].mxu0
        %v4874 = vadd.f32 %v4777, %v4873
        %v4875 = vpop.f32.mrb[0].mxu0
        %4876 = vdwg.mxu0
        %4877 = vmatprep.subr.bf16.mxu0 0
        %4878 = vmatpush1.bf16.msra.mxu0 %v4506
        %4879 = vmatprep.subr.bf16.mxu0 0
        %4880 = vmatpush1.bf16.msra.mxu0 %v4507
        %4881 = vmatprep.subr.bf16.mxu0 0
        %4882 = vmatpush1.bf16.msra.mxu0 %v4508
        %4883 = vmatprep.subr.bf16.mxu0 0
        %4884 = vmatpush1.bf16.msra.mxu0 %v4509
        %4885 = vmatprep.subr.bf16.mxu0 0
        %4886 = vmatpush1.bf16.msra.mxu0 %v4510
        %4887 = vmatprep.subr.bf16.mxu0 0
        %4888 = vmatpush1.bf16.msra.mxu0 %v4511
        %4889 = vmatprep.subr.bf16.mxu0 0
        %4890 = vmatpush1.bf16.msra.mxu0 %v4512
        %4891 = vmatprep.subr.bf16.mxu0 0
        %4892 = vmatpush1.bf16.msra.mxu0 %v4513
        %4893 = vmatprep.subr.bf16.mxu0 0
        %4894 = vmatpush1.bf16.msra.mxu0 %v4514
        %4895 = vmatprep.subr.bf16.mxu0 0
        %4896 = vmatpush1.bf16.msra.mxu0 %v4515
        %4897 = vmatprep.subr.bf16.mxu0 0
        %4898 = vmatpush1.bf16.msra.mxu0 %v4516
        %4899 = vmatprep.subr.bf16.mxu0 0
        %4900 = vmatpush1.bf16.msra.mxu0 %v4517
        %4901 = vmatprep.subr.bf16.mxu0 0
        %4902 = vmatpush1.bf16.msra.mxu0 %v4518
        %4903 = vmatprep.subr.bf16.mxu0 0
        %4904 = vmatpush1.bf16.msra.mxu0 %v4519
        %4905 = vmatprep.subr.bf16.mxu0 0
        %4906 = vmatpush1.bf16.msra.mxu0 %v4520
        %4907 = vmatprep.subr.bf16.mxu0 0
        %4908 = vmatpush1.bf16.msra.mxu0 %v4521
        %4909 = vmatprep.mubr.bf16.mxu0 %v4010
        %4910 = vmatmul.mubr.bf16.gmra.mrb[0].mxu0 %v4009
        %v4911 = vpop.f32.mrb[0].mxu0
        %v4912 = vadd.f32 %v4815, %v4911
        %v4913 = vpop.f32.mrb[0].mxu0
        %v4914 = vpop.f32.mrb[0].mxu0
        %v4915 = vadd.f32 %v4818, %v4914
        %v4916 = vpop.f32.mrb[0].mxu0
        %4917 = vmatprep.mubr.bf16.mxu0 %v4018
        %4918 = vmatmul.mubr.bf16.gmra.mrb[0].mxu0 %v4017
        %v4919 = vpop.f32.mrb[0].mxu0
        %v4920 = vadd.f32 %v4823, %v4919
        %v4921 = vpop.f32.mrb[0].mxu0
        %v4922 = vpop.f32.mrb[0].mxu0
        %v4923 = vadd.f32 %v4826, %v4922
        %v4924 = vpop.f32.mrb[0].mxu0
        %4925 = vmatprep.mubr.bf16.mxu0 %v4026
        %4926 = vmatmul.mubr.bf16.gmra.mrb[0].mxu0 %v4025
        %v4927 = vpop.f32.mrb[0].mxu0
        %v4928 = vadd.f32 %v4831, %v4927
        %v4929 = vpop.f32.mrb[0].mxu0
        %v4930 = vpop.f32.mrb[0].mxu0
        %v4931 = vadd.f32 %v4834, %v4930
        %v4932 = vpop.f32.mrb[0].mxu0
        %4933 = vmatprep.mubr.bf16.mxu0 %v4034
        %4934 = vmatmul.mubr.bf16.gmra.mrb[0].mxu0 %v4033
        %v4935 = vpop.f32.mrb[0].mxu0
        %v4936 = vadd.f32 %v4839, %v4935
        %v4937 = vpop.f32.mrb[0].mxu0
        %v4938 = vpop.f32.mrb[0].mxu0
        %v4939 = vadd.f32 %v4842, %v4938
        %v4940 = vpop.f32.mrb[0].mxu0
        %4941 = vmatprep.mubr.bf16.mxu0 %v4042
        %4942 = vmatmul.mubr.bf16.gmra.mrb[0].mxu0 %v4041
        %v4943 = vpop.f32.mrb[0].mxu0
        %v4944 = vadd.f32 %v4847, %v4943
        %v4945 = vpop.f32.mrb[0].mxu0
        %v4946 = vpop.f32.mrb[0].mxu0
        %v4947 = vadd.f32 %v4850, %v4946
        %v4948 = vpop.f32.mrb[0].mxu0
        %4949 = vmatprep.mubr.bf16.mxu0 %v4050
        %4950 = vmatmul.mubr.bf16.gmra.mrb[0].mxu0 %v4049
        %v4951 = vpop.f32.mrb[0].mxu0
        %v4952 = vadd.f32 %v4855, %v4951
        %v4953 = vpop.f32.mrb[0].mxu0
        %v4954 = vpop.f32.mrb[0].mxu0
        %v4955 = vadd.f32 %v4858, %v4954
        %v4956 = vpop.f32.mrb[0].mxu0
        %4957 = vmatprep.mubr.bf16.mxu0 %v4058
        %4958 = vmatmul.mubr.bf16.gmra.mrb[0].mxu0 %v4057
        %v4959 = vpop.f32.mrb[0].mxu0
        %v4960 = vadd.f32 %v4863, %v4959
        %v4961 = vpop.f32.mrb[0].mxu0
        %v4962 = vpop.f32.mrb[0].mxu0
        %v4963 = vadd.f32 %v4866, %v4962
        %v4964 = vpop.f32.mrb[0].mxu0
        %4965 = vmatprep.mubr.bf16.mxu0 %v4066
        %4966 = vmatmul.mubr.bf16.gmra.mrb[0].mxu0 %v4065
        %v4967 = vpop.f32.mrb[0].mxu0
        %v4968 = vadd.f32 %v4871, %v4967
        %v4969 = vpop.f32.mrb[0].mxu0
        %v4970 = vpop.f32.mrb[0].mxu0
        %v4971 = vadd.f32 %v4874, %v4970
        %v4972 = vpop.f32.mrb[0].mxu0
        %4973 = vdwg.mxu0
        %v4974 = vtanh.pop %v4912
        %v4975 = vtanh.pop %v4915
        %v4976 = vtanh.pop %v4920
        %v4977 = vtanh.pop %v4923
        %v4978 = vtanh.pop %v4928
        %v4979 = vtanh.pop %v4931
        %v4980 = vtanh.pop %v4936
        %v4981 = vtanh.pop %v4939
        %v4982 = vtanh.pop %v4944
        %v4983 = vtanh.pop %v4947
        %v4984 = vtanh.pop %v4952
        %v4985 = vtanh.pop %v4955
        %v4986 = vtanh.pop %v4960
        %v4987 = vtanh.pop %v4963
        %v4988 = vtanh.pop %v4968
        %v4989 = vtanh.pop %v4971
        %4990 = vst [vmem:[%s297] sm:$0xff] %v4974
        %4991 = vst [vmem:[%s297 + $0x8] sm:$0xff] %v4975
        %4992 = vst [vmem:[%s297 + $0x10] sm:$0xff] %v4976
        %4993 = vst [vmem:[%s297 + $0x18] sm:$0xff] %v4977
        %4994 = vst [vmem:[%s297 + $0x20] sm:$0xff] %v4978
        %4995 = vst [vmem:[%s297 + $0x28] sm:$0xff] %v4979
        %4996 = vst [vmem:[%s297 + $0x30] sm:$0xff] %v4980
        %4997 = vst [vmem:[%s297 + $0x38] sm:$0xff] %v4981
        %4998 = vst [vmem:[%s297 + $0x40] sm:$0xff] %v4982
        %4999 = vst [vmem:[%s297 + $0x48] sm:$0xff] %v4983
        %5000 = vst [vmem:[%s297 + $0x50] sm:$0xff] %v4984
        %5001 = vst [vmem:[%s297 + $0x58] sm:$0xff] %v4985
        %5002 = vst [vmem:[%s297 + $0x60] sm:$0xff] %v4986
        %5003 = vst [vmem:[%s297 + $0x68] sm:$0xff] %v4987
        %5004 = vst [vmem:[%s297 + $0x70] sm:$0xff] %v4988
        %5005 = vst [vmem:[%s297 + $0x78] sm:$0xff] %v4989
        %s5006 = sand.u32 %s142, 1
        %s5007 = scalar_lea.sflag [#allocation4], %s5006
        %s5008 = sand.u32 %s142, 1
        %s5009 = smul.addr %s5008, 128
        %s5010 = scalar_lea.vmem [#allocation11], %s5009
        // Predicated region
        $region61: #{tpu_custom_call.1} parent=39 // pred_check
          %p5011 = pneg %p152
        $region62: #{tpu_custom_call.1} parent=39 // pred_check_branch
          %5013 = sbr.rel (%p5011) target = $region64
        $region63: #{tpu_custom_call.1} parent=39 // pred_region
          %s5014 = smul.u32 16, %s24
          %s5016 = ssub.s32 2048, 2048
          %5017 = vsyncadd %s5007, %s5016
          %s5018 = smul.addr %s5014, 128
          %s5019 = scalar_lea.hbm %s5, %s5018
          %s5020 = sshll.u32 %s5010, 4
          %s5021 = int_to_ptr.vmem [resolvable:$true] %s5020
          %5026 = dma.vmem_to_hbm [thread:$0]  %s5021, 2048, %s5019, %s5007, 128, 128, 8
        $region64: #{tpu_custom_call.1} parent=39 // pred_fallthru
          _
      $region40: #{tpu_custom_call.1} parent=5 // pred_fallthru
        _
      %p5027 = scmp.le.s32.totalorder 2, %s19
      // Predicated region
      $region65: #{tpu_custom_call.1} parent=5 // pred_check
        %p5028 = pneg %p5027
      $region66: #{tpu_custom_call.1} parent=5 // pred_check_branch
        %5030 = sbr.rel (%p5028) target = $region68
      $region67: #{tpu_custom_call.1} parent=5 // pred_region
        %s5031 = ssub.s32 %s19, 2
        // Predicated region
        $region69: #{tpu_custom_call.1} parent=67 // pred_check
          %p5032 = pneg %p158
        $region70: #{tpu_custom_call.1} parent=67 // pred_check_branch
          %5034 = sbr.rel (%p5032) target = $region72
        $region71: #{tpu_custom_call.1} parent=67 // pred_region
          %s5035 = sand.u32 %s143, 1
          %s5036 = scalar_lea.sflag [#allocation4], %s5035
          %s5037 = sand.u32 %s143, 1
          %s5038 = smul.addr %s5037, 128
          %s5039 = scalar_lea.vmem [#allocation11], %s5038
          %5040 = dma.done %s5036, 2048
        $region72: #{tpu_custom_call.1} parent=67 // pred_fallthru
          _
      $region68: #{tpu_custom_call.1} parent=5 // pred_fallthru
        _
    $region6: #{tpu_custom_call.1} parent=1 // loop_footer
      %s23 = sadd.s32 1, %s19
    $region7: #{tpu_custom_call.1} parent=1 // loop_footer_branch
      %18 = sbr.rel target = $region3
    $region8: #{tpu_custom_call.1} parent=1 // loop_exit
      _
    %5041 = vsyncpa [#allocation3], 1
    %s5042 = scalar_lea.sflag [#allocation3], 1
    %5043 = vsyncpa %s5042, 1
    %5044 = vsyncpa [#allocation6], 1
    %5045 = vsyncpa [#allocation9], 1
    %5046 = vsyncpa [#allocation4], 1
    %s5047 = scalar_lea.sflag [#allocation4], 1
    %5048 = vsyncpa %s5047, 1

</llo_original>
